<compile_context>
chip_gen: v5e
topology: v5e:2x2
jax: 0.10.0
libtpu: 0.0.40
codegen_flags: <defaults>
</compile_context>

<pallas_src>
import functools

import jax
import jax.numpy as jnp
from jax import lax
from jax.experimental import pallas as pl
from jax.experimental.pallas import tpu as pltpu

# ---------------- problem sizes (small, consistent with the module) ----------------
BATCH = 2
SEQ = 8
HIDDEN = 768          # fixed by nn.Linear(768, 768) in the module
NUM_LABELS = 2        # RTE is a 2-way task
LABELS_PAD = 128      # classifier lane-padded width (lane-dense logits / weight)
VOCAB = 100


def _round_up(x, m):
    return (x + m - 1) // m * m


# ---------------- Pallas kernel: pooler stand-in + head + per-example CE NLL ----------------
def cross_encoder_kernel(emb_ref, mask_ref, label_ref,
                         wp_ref, bp_ref, w1_ref, b1_ref, wc_ref, bc_ref,
                         context_ref, logits_ref, nll_ref, *, num_labels):
    emb = emb_ref[...].astype(jnp.float32)                       # (TB, S, H)
    mask = mask_ref[...]                                         # (TB, S) f32

    # --- backbone stand-in: masked mean pool over sequence + dense + tanh ("pooler output") ---
    m3 = mask[:, :, None]                                        # (TB, S, 1)
    denom = jnp.maximum(jnp.sum(mask, axis=1, keepdims=True), 1.0)   # (TB, 1)
    inv_denom = pl.reciprocal(denom, approx=True)                # EUP, frees VALU slots
    pooled_raw = jnp.sum(emb * m3, axis=1) * inv_denom           # (TB, H) f32
    pooled = jnp.tanh(
        jnp.dot(pooled_raw.astype(jnp.bfloat16), wp_ref[...],
                preferred_element_type=jnp.float32) + bp_ref[...]
    )                                                            # (TB, H) f32

    # --- head: self.linear -> dropout(eval: identity) -> self.classifier (lane-padded N) ---
    context = jnp.dot(pooled.astype(jnp.bfloat16), w1_ref[...],
                      preferred_element_type=jnp.float32) + b1_ref[...]      # (TB, H)
    logits = jnp.dot(context.astype(jnp.bfloat16), wc_ref[...],
                     preferred_element_type=jnp.float32) + bc_ref[...]       # (TB, LP)

    context_ref[...] = context.astype(context_ref.dtype)         # (TB, H) bf16
    logits_ref[...] = logits.astype(logits_ref.dtype)            # (TB, LP) f32 lane-dense

    # --- CrossEntropyLoss: per-example NLL (mean reduction done in the wrapper) ---
    lbl = label_ref[...]                                         # (TB, 1) int32
    tb, lp = logits.shape
    cls_ids = lax.broadcasted_iota(jnp.int32, (tb, lp), 1)       # (TB, LP)
    valid = cls_ids < num_labels
    ml = jnp.where(valid, logits, jnp.float32(-1e30))            # mask padded classes
    mx = jnp.max(ml, axis=1, keepdims=True)                      # (TB, 1)
    lse = mx + jnp.log(jnp.sum(jnp.exp(ml - mx), axis=1, keepdims=True))     # (TB, 1)
    picked = jnp.sum(jnp.where(cls_ids == lbl, logits, 0.0), axis=1, keepdims=True)
    nll_ref[...] = (lse - picked).astype(nll_ref.dtype)          # (TB, 1)


def cross_encoder_forward(emb, mask, label, params, num_labels=NUM_LABELS):
    """emb: (B,S,H) bf16, mask: (B,S) f32, label: (B,) int32 -> (context, logits, loss)."""
    B, S, H = emb.shape
    LP = params["wc_p"].shape[1]

    # Batch tile: 128 rows fills an MXU pass when the batch is large; pad small batches to 8.
    TB = 128 if B >= 128 else 8
    B_pad = _round_up(B, TB)
    if B_pad != B:
        pad = B_pad - B
        emb = jnp.pad(emb, ((0, pad), (0, 0), (0, 0)))
        mask = jnp.pad(mask, ((0, pad), (0, 0)))
        label = jnp.pad(label, ((0, pad),))
    label2d = label.reshape(B_pad, 1).astype(jnp.int32)

    grid = (B_pad // TB,)
    kernel = functools.partial(cross_encoder_kernel, num_labels=num_labels)

    context_p, logits_p, nll_p = pl.pallas_call(
        kernel,
        out_shape=(
            jax.ShapeDtypeStruct((B_pad, H), jnp.bfloat16),      # context (bf16 writeback)
            jax.ShapeDtypeStruct((B_pad, LP), jnp.float32),      # lane-padded logits
            jax.ShapeDtypeStruct((B_pad, 1), jnp.float32),       # per-example NLL
        ),
        grid=grid,
        in_specs=[
            pl.BlockSpec((TB, S, H), lambda i: (i, 0, 0)),       # emb (bf16)
            pl.BlockSpec((TB, S), lambda i: (i, 0)),             # attention_mask
            pl.BlockSpec((TB, 1), lambda i: (i, 0)),             # label
            pl.BlockSpec((H, H), lambda i: (0, 0)),              # pooler W  (in,out) bf16, resident
            pl.BlockSpec((1, H), lambda i: (0, 0)),              # pooler b
            pl.BlockSpec((H, H), lambda i: (0, 0)),              # linear W  (in,out) bf16, resident
            pl.BlockSpec((1, H), lambda i: (0, 0)),              # linear b
            pl.BlockSpec((H, LP), lambda i: (0, 0)),             # classifier W lane-padded bf16
            pl.BlockSpec((1, LP), lambda i: (0, 0)),             # classifier b lane-padded
        ],
        out_specs=(
            pl.BlockSpec((TB, H), lambda i: (i, 0)),
            pl.BlockSpec((TB, LP), lambda i: (i, 0)),
            pl.BlockSpec((TB, 1), lambda i: (i, 0)),
        ),
        compiler_params=pltpu.CompilerParams(
            dimension_semantics=("parallel",),                   # batch blocks are independent
            vmem_limit_bytes=32 * 1024 * 1024,                   # budget against v7x's 64 MiB
        ),
    )(emb, mask, label2d,
      params["wp"], params["bp"], params["w1"], params["b1"],
      params["wc_p"], params["bc_p"])

    context = context_p[:B]
    logits = logits_p[:B, :num_labels]
    loss = jnp.sum(nll_p[:B, 0]) / B                             # CrossEntropyLoss mean reduction
    return context, logits, loss


def init_params(key):
    ks = jax.random.split(key, 5)
    scale = 0.02
    wc = scale * jax.random.normal(ks[3], (HIDDEN, NUM_LABELS), jnp.float32)
    wc_p = jnp.zeros((HIDDEN, LABELS_PAD), jnp.bfloat16).at[:, :NUM_LABELS].set(
        wc.astype(jnp.bfloat16))
    bc_p = jnp.zeros((1, LABELS_PAD), jnp.float32)
    return {
        "emb_table": (scale * jax.random.normal(ks[0], (VOCAB, HIDDEN), jnp.float32)
                      ).astype(jnp.bfloat16),
        "wp": (scale * jax.random.normal(ks[1], (HIDDEN, HIDDEN), jnp.float32)
               ).astype(jnp.bfloat16),
        "bp": jnp.zeros((1, HIDDEN), jnp.float32),
        "w1": (scale * jax.random.normal(ks[2], (HIDDEN, HIDDEN), jnp.float32)
               ).astype(jnp.bfloat16),
        "b1": 0.01 * jnp.ones((1, HIDDEN), jnp.float32),
        "wc_p": wc_p,
        "bc_p": bc_p,
    }


if __name__ == "__main__":
    key = jax.random.PRNGKey(0)
    pk, ik, mk, lk = jax.random.split(key, 4)

    params = init_params(pk)

    input_ids = jax.random.randint(ik, (BATCH, SEQ), 0, VOCAB, dtype=jnp.int32)
    # attention mask: first row fully attended, second row has 2 padded positions
    attention_mask = jnp.array(
        [[1] * SEQ, [1] * (SEQ - 2) + [0] * 2], dtype=jnp.float32
    )
    label = jax.random.randint(lk, (BATCH,), 0, NUM_LABELS, dtype=jnp.int32)

    # glue: embedding lookup stays in plain JAX
    emb = jnp.take(params["emb_table"], input_ids, axis=0)       # (B, S, H) bf16

    context, logits, loss = cross_encoder_forward(emb, attention_mask, label, params)
    jax.block_until_ready((context, logits, loss))

    assert context.shape == (BATCH, HIDDEN)
    assert logits.shape == (BATCH, NUM_LABELS)
    assert loss.shape == ()
    assert bool(jnp.isfinite(loss))
    print("KERNEL_OK")
</pallas_src>

<mosaic_0001>
module attributes {stable_mosaic.version = 11 : i64} {
  func.func @cross_encoder_kernel(%arg0: i32, %arg1: memref<8x8x768xbf16, #tpu.memory_space<vmem>>, %arg2: memref<8x8xf32, #tpu.memory_space<vmem>>, %arg3: memref<8x1xi32, #tpu.memory_space<vmem>>, %arg4: memref<768x768xbf16, #tpu.memory_space<vmem>>, %arg5: memref<1x768xf32, #tpu.memory_space<vmem>>, %arg6: memref<768x768xbf16, #tpu.memory_space<vmem>>, %arg7: memref<1x768xf32, #tpu.memory_space<vmem>>, %arg8: memref<768x128xbf16, #tpu.memory_space<vmem>>, %arg9: memref<1x128xf32, #tpu.memory_space<vmem>>, %arg10: memref<8x768xbf16, #tpu.memory_space<vmem>>, %arg11: memref<8x128xf32, #tpu.memory_space<vmem>>, %arg12: memref<8x1xf32, #tpu.memory_space<vmem>>) attributes {dimension_semantics = [#tpu.dimension_semantics<parallel>], iteration_bounds = array<i64: 1>, scalar_prefetch = 0 : i64, scratch_operands = 0 : i64, tpu.core_type = #tpu.core_type<tc>, window_params = [{transform_indices = @transform_0, window_bounds = array<i64: 8, 8, 768>}, {transform_indices = @transform_1, window_bounds = array<i64: 8, 8>}, {transform_indices = @transform_2, window_bounds = array<i64: 8, 1>}, {pipeline_mode = #tpu.pipeline_mode<synchronous>, transform_indices = @transform_3, window_bounds = array<i64: 768, 768>}, {pipeline_mode = #tpu.pipeline_mode<synchronous>, transform_indices = @transform_4, window_bounds = array<i64: 1, 768>}, {pipeline_mode = #tpu.pipeline_mode<synchronous>, transform_indices = @transform_5, window_bounds = array<i64: 768, 768>}, {pipeline_mode = #tpu.pipeline_mode<synchronous>, transform_indices = @transform_6, window_bounds = array<i64: 1, 768>}, {pipeline_mode = #tpu.pipeline_mode<synchronous>, transform_indices = @transform_7, window_bounds = array<i64: 768, 128>}, {pipeline_mode = #tpu.pipeline_mode<synchronous>, transform_indices = @transform_8, window_bounds = array<i64: 1, 128>}, {transform_indices = @transform_9, window_bounds = array<i64: 8, 768>}, {transform_indices = @transform_10, window_bounds = array<i64: 8, 128>}, {transform_indices = @transform_11, window_bounds = array<i64: 8, 1>}]} {
    %c0 = arith.constant 0 : index
    %c0_0 = arith.constant 0 : index
    %c0_1 = arith.constant 0 : index
    %0 = vector.load %arg1[%c0, %c0_0, %c0_1] : memref<8x8x768xbf16, #tpu.memory_space<vmem>>, vector<8x8x768xbf16>
    %1 = arith.extf %0 : vector<8x8x768xbf16> to vector<8x8x768xf32>
    %c0_2 = arith.constant 0 : index
    %c0_3 = arith.constant 0 : index
    %2 = vector.load %arg2[%c0_2, %c0_3] : memref<8x8xf32, #tpu.memory_space<vmem>>, vector<8x8xf32>
    %3 = vector.shape_cast %2 : vector<8x8xf32> to vector<8x8x1xf32>
    %cst = arith.constant dense<0.000000e+00> : vector<8xf32>
    %4 = vector.multi_reduction <add>, %2, %cst [1] : vector<8x8xf32> to vector<8xf32>
    %5 = vector.shape_cast %4 : vector<8xf32> to vector<8x1xf32>
    %cst_4 = arith.constant 1.000000e+00 : f32
    %6 = vector.broadcast %cst_4 : f32 to vector<8x1xf32>
    %7 = arith.maximumf %5, %6 : vector<8x1xf32>
    %8 = tpu.reciprocal %7 {approx = true} : vector<8x1xf32> -> vector<8x1xf32>
    %9 = vector.broadcast %3 : vector<8x8x1xf32> to vector<8x8x768xf32>
    %10 = arith.mulf %1, %9 : vector<8x8x768xf32>
    %cst_5 = arith.constant dense<0.000000e+00> : vector<8x768xf32>
    %11 = vector.multi_reduction <add>, %10, %cst_5 [1] : vector<8x8x768xf32> to vector<8x768xf32>
    %12 = vector.broadcast %8 : vector<8x1xf32> to vector<8x768xf32>
    %13 = arith.mulf %11, %12 : vector<8x768xf32>
    %14 = arith.truncf %13 : vector<8x768xf32> to vector<8x768xbf16>
    %c0_6 = arith.constant 0 : index
    %c0_7 = arith.constant 0 : index
    %15 = vector.load %arg4[%c0_6, %c0_7] : memref<768x768xbf16, #tpu.memory_space<vmem>>, vector<768x768xbf16>
    %cst_8 = arith.constant dense<0.000000e+00> : vector<8x768xf32>
    %16 = tpu.matmul %14, %15, %cst_8 {dimension_numbers = #tpu.dot_dimension_numbers<[1], [0], [0], [1], [0, 0, 1, 1], [], []>} : vector<8x768xbf16>, vector<768x768xbf16>, vector<8x768xf32> -> vector<8x768xf32>
    %c0_9 = arith.constant 0 : index
    %c0_10 = arith.constant 0 : index
    %17 = vector.load %arg5[%c0_9, %c0_10] : memref<1x768xf32, #tpu.memory_space<vmem>>, vector<1x768xf32>
    %18 = vector.broadcast %17 : vector<1x768xf32> to vector<8x768xf32>
    %19 = arith.addf %16, %18 : vector<8x768xf32>
    %20 = math.tanh %19 : vector<8x768xf32>
    %21 = arith.truncf %20 : vector<8x768xf32> to vector<8x768xbf16>
    %c0_11 = arith.constant 0 : index
    %c0_12 = arith.constant 0 : index
    %22 = vector.load %arg6[%c0_11, %c0_12] : memref<768x768xbf16, #tpu.memory_space<vmem>>, vector<768x768xbf16>
    %cst_13 = arith.constant dense<0.000000e+00> : vector<8x768xf32>
    %23 = tpu.matmul %21, %22, %cst_13 {dimension_numbers = #tpu.dot_dimension_numbers<[1], [0], [0], [1], [0, 0, 1, 1], [], []>} : vector<8x768xbf16>, vector<768x768xbf16>, vector<8x768xf32> -> vector<8x768xf32>
    %c0_14 = arith.constant 0 : index
    %c0_15 = arith.constant 0 : index
    %24 = vector.load %arg7[%c0_14, %c0_15] : memref<1x768xf32, #tpu.memory_space<vmem>>, vector<1x768xf32>
    %25 = vector.broadcast %24 : vector<1x768xf32> to vector<8x768xf32>
    %26 = arith.addf %23, %25 : vector<8x768xf32>
    %27 = arith.truncf %26 : vector<8x768xf32> to vector<8x768xbf16>
    %c0_16 = arith.constant 0 : index
    %c0_17 = arith.constant 0 : index
    %28 = vector.load %arg8[%c0_16, %c0_17] : memref<768x128xbf16, #tpu.memory_space<vmem>>, vector<768x128xbf16>
    %cst_18 = arith.constant dense<0.000000e+00> : vector<8x128xf32>
    %29 = tpu.matmul %27, %28, %cst_18 {dimension_numbers = #tpu.dot_dimension_numbers<[1], [0], [0], [1], [0, 0, 1, 1], [], []>} : vector<8x768xbf16>, vector<768x128xbf16>, vector<8x128xf32> -> vector<8x128xf32>
    %c0_19 = arith.constant 0 : index
    %c0_20 = arith.constant 0 : index
    %30 = vector.load %arg9[%c0_19, %c0_20] : memref<1x128xf32, #tpu.memory_space<vmem>>, vector<1x128xf32>
    %31 = vector.broadcast %30 : vector<1x128xf32> to vector<8x128xf32>
    %32 = arith.addf %29, %31 : vector<8x128xf32>
    %33 = arith.truncf %26 : vector<8x768xf32> to vector<8x768xbf16>
    %c0_21 = arith.constant 0 : index
    %c0_22 = arith.constant 0 : index
    %34 = vector.load %arg10[%c0_21, %c0_22] : memref<8x768xbf16, #tpu.memory_space<vmem>>, vector<8x768xbf16>
    tpu.vector_store %arg10[%c0_21, %c0_22], %33 {strides = array<i32>} : memref<8x768xbf16, #tpu.memory_space<vmem>>, vector<8x768xbf16>,
    %c0_23 = arith.constant 0 : index
    %c0_24 = arith.constant 0 : index
    %35 = vector.load %arg11[%c0_23, %c0_24] : memref<8x128xf32, #tpu.memory_space<vmem>>, vector<8x128xf32>
    tpu.vector_store %arg11[%c0_23, %c0_24], %32 {strides = array<i32>} : memref<8x128xf32, #tpu.memory_space<vmem>>, vector<8x128xf32>,
    %c0_25 = arith.constant 0 : index
    %c0_26 = arith.constant 0 : index
    %36 = vector.load %arg3[%c0_25, %c0_26] : memref<8x1xi32, #tpu.memory_space<vmem>>, vector<8x1xi32>
    %37 = tpu.iota {dimensions = array<i32: 1>} : vector<8x128xi32>
    %c2_i32 = arith.constant 2 : i32
    %38 = vector.broadcast %c2_i32 : i32 to vector<8x128xi32>
    %39 = arith.cmpi slt, %37, %38 : vector<8x128xi32>
    %cst_27 = arith.constant -1.000000e+30 : f32
    %40 = vector.broadcast %cst_27 : f32 to vector<8x128xf32>
    %41 = arith.select %39, %32, %40 : vector<8x128xi1>, vector<8x128xf32>
    %cst_28 = arith.constant dense<0xFF800000> : vector<8xf32>
    %42 = vector.multi_reduction <maximumf>, %41, %cst_28 [1] : vector<8x128xf32> to vector<8xf32>
    %43 = vector.shape_cast %42 : vector<8xf32> to vector<8x1xf32>
    %44 = vector.broadcast %43 : vector<8x1xf32> to vector<8x128xf32>
    %45 = arith.subf %41, %44 : vector<8x128xf32>
    %46 = math.exp %45 : vector<8x128xf32>
    %cst_29 = arith.constant dense<0.000000e+00> : vector<8xf32>
    %47 = vector.multi_reduction <add>, %46, %cst_29 [1] : vector<8x128xf32> to vector<8xf32>
    %48 = vector.shape_cast %47 : vector<8xf32> to vector<8x1xf32>
    %49 = math.log %48 : vector<8x1xf32>
    %50 = arith.addf %43, %49 : vector<8x1xf32>
    %51 = vector.broadcast %36 : vector<8x1xi32> to vector<8x128xi32>
    %52 = arith.cmpi eq, %37, %51 : vector<8x128xi32>
    %cst_30 = arith.constant 0.000000e+00 : f32
    %53 = vector.broadcast %cst_30 : f32 to vector<8x128xf32>
    %54 = arith.select %52, %32, %53 : vector<8x128xi1>, vector<8x128xf32>
    %cst_31 = arith.constant dense<0.000000e+00> : vector<8xf32>
    %55 = vector.multi_reduction <add>, %54, %cst_31 [1] : vector<8x128xf32> to vector<8xf32>
    %56 = vector.shape_cast %55 : vector<8xf32> to vector<8x1xf32>
    %57 = arith.subf %50, %56 : vector<8x1xf32>
    %c0_32 = arith.constant 0 : index
    %c0_33 = arith.constant 0 : index
    %58 = vector.load %arg12[%c0_32, %c0_33] : memref<8x1xf32, #tpu.memory_space<vmem>>, vector<8x1xf32>
    tpu.vector_store %arg12[%c0_32, %c0_33], %57 {strides = array<i32>} : memref<8x1xf32, #tpu.memory_space<vmem>>, vector<8x1xf32>,
    return
  }
  func.func @transform_0(%arg0: i32) -> (i32, i32, i32) {
    %c0_i32 = arith.constant 0 : i32
    %c0_i32_0 = arith.constant 0 : i32
    %c0_i32_1 = arith.constant 0 : i32
    return %arg0, %c0_i32, %c0_i32_0 : i32, i32, i32
  }
  func.func @transform_1(%arg0: i32) -> (i32, i32) {
    %c0_i32 = arith.constant 0 : i32
    %c0_i32_0 = arith.constant 0 : i32
    return %arg0, %c0_i32 : i32, i32
  }
  func.func @transform_2(%arg0: i32) -> (i32, i32) {
    %c0_i32 = arith.constant 0 : i32
    %c0_i32_0 = arith.constant 0 : i32
    return %arg0, %c0_i32 : i32, i32
  }
  func.func @transform_3(%arg0: i32) -> (i32, i32) {
    %c0_i32 = arith.constant 0 : i32
    %c0_i32_0 = arith.constant 0 : i32
    %c0_i32_1 = arith.constant 0 : i32
    return %c0_i32, %c0_i32_0 : i32, i32
  }
  func.func @transform_4(%arg0: i32) -> (i32, i32) {
    %c0_i32 = arith.constant 0 : i32
    %c0_i32_0 = arith.constant 0 : i32
    %c0_i32_1 = arith.constant 0 : i32
    return %c0_i32, %c0_i32_0 : i32, i32
  }
  func.func @transform_5(%arg0: i32) -> (i32, i32) {
    %c0_i32 = arith.constant 0 : i32
    %c0_i32_0 = arith.constant 0 : i32
    %c0_i32_1 = arith.constant 0 : i32
    return %c0_i32, %c0_i32_0 : i32, i32
  }
  func.func @transform_6(%arg0: i32) -> (i32, i32) {
    %c0_i32 = arith.constant 0 : i32
    %c0_i32_0 = arith.constant 0 : i32
    %c0_i32_1 = arith.constant 0 : i32
    return %c0_i32, %c0_i32_0 : i32, i32
  }
  func.func @transform_7(%arg0: i32) -> (i32, i32) {
    %c0_i32 = arith.constant 0 : i32
    %c0_i32_0 = arith.constant 0 : i32
    %c0_i32_1 = arith.constant 0 : i32
    return %c0_i32, %c0_i32_0 : i32, i32
  }
  func.func @transform_8(%arg0: i32) -> (i32, i32) {
    %c0_i32 = arith.constant 0 : i32
    %c0_i32_0 = arith.constant 0 : i32
    %c0_i32_1 = arith.constant 0 : i32
    return %c0_i32, %c0_i32_0 : i32, i32
  }
  func.func @transform_9(%arg0: i32) -> (i32, i32) {
    %c0_i32 = arith.constant 0 : i32
    %c0_i32_0 = arith.constant 0 : i32
    return %arg0, %c0_i32 : i32, i32
  }
  func.func @transform_10(%arg0: i32) -> (i32, i32) {
    %c0_i32 = arith.constant 0 : i32
    %c0_i32_0 = arith.constant 0 : i32
    return %arg0, %c0_i32 : i32, i32
  }
  func.func @transform_11(%arg0: i32) -> (i32, i32) {
    %c0_i32 = arith.constant 0 : i32
    %c0_i32_0 = arith.constant 0 : i32
    return %arg0, %c0_i32 : i32, i32
  }
}

</mosaic_0001>

<llo_original>
// kernel: tpu_custom_call.1
$region0: #{tpu_custom_call.1}
  #allocation0 [shape = 'u32[]', space=smem, size = 0x4, offset = 0x4, fixed_abs, tag = 'smem constant byte address 0x4 - core index']
  #allocation1 [shape = 'u32[72,128]{1,0:T(1,128)}', space=vmem, size = 0x9000, scoped, tag = 'internal scratch']
  %s0 = inlined_call_operand.hbm [shape: bf16[8,8,768], index: 0, kind: input, shape index: {}]
  %s1 = inlined_call_operand.hbm [shape: f32[8,8], index: 1, kind: input, shape index: {}]
  %s2 = inlined_call_operand.vmem [shape: s32[8,1], index: 2, kind: input, shape index: {}]
  %s3 = inlined_call_operand.hbm [shape: bf16[768,768], index: 3, kind: input, shape index: {}]
  %s4 = inlined_call_operand.hbm [shape: f32[1,768], index: 4, kind: input, shape index: {}]
  %s5 = inlined_call_operand.hbm [shape: bf16[768,768], index: 5, kind: input, shape index: {}]
  %s6 = inlined_call_operand.hbm [shape: f32[1,768], index: 6, kind: input, shape index: {}]
  %s7 = inlined_call_operand.hbm [shape: bf16[768,128], index: 7, kind: input, shape index: {}]
  %s8 = inlined_call_operand.hbm [shape: f32[1,128], index: 8, kind: input, shape index: {}]
  %s9 = inlined_call_operand.hbm [shape: bf16[8,768], index: 9, kind: output, shape index: {0}]
  %s10 = inlined_call_operand.hbm [shape: f32[8,128], index: 10, kind: output, shape index: {1}]
  %s11 = inlined_call_operand.vmem [shape: f32[8,1], index: 11, kind: output, shape index: {2}]
  %12 = xla_tuple %s9, %s10, %s11
  %s13 = sld [smem:[#allocation0]]
  $region94: #{tpu_custom_call.1} parent=0
    _
  %s15 = ssub.s32 1, %s13
  %s16 = scalar_select 0, %s15, %s13
  $region1: #{tpu_custom_call.1} parent=0
    #allocation2 [shape = 'u8[98304]{0}', space=vmem, size = 0x18000, scoped, tag = 'input window, operand 0, single buffered']
    #allocation3 [shape = 's32[1]{0}', space=sflag, size = 0x4, scoped, tag = 'scoped memory for tpu_custom_call.1']
    #allocation4 [shape = 's32[1]{0}', space=sflag, size = 0x4, scoped, tag = 'scoped memory for tpu_custom_call.1']
    #allocation5 [shape = 'u8[4096]{0}', space=vmem, size = 0x1000, scoped, tag = 'input window, operand 1, single buffered']
    #allocation6 [shape = 's32[1]{0}', space=sflag, size = 0x4, scoped, tag = 'scoped memory for tpu_custom_call.1']
    #allocation7 [shape = 'u8[1179648]{0}', space=vmem, size = 0x120000, scoped, tag = 'input window, operand 3, single buffered']
    #allocation8 [shape = 'u8[3072]{0}', space=vmem, size = 0xc00, scoped, tag = 'input window, operand 4, single buffered']
    #allocation9 [shape = 's32[1]{0}', space=sflag, size = 0x4, scoped, tag = 'scoped memory for tpu_custom_call.1']
    #allocation10 [shape = 'u8[1179648]{0}', space=vmem, size = 0x120000, scoped, tag = 'input window, operand 5, single buffered']
    #allocation11 [shape = 'u8[3072]{0}', space=vmem, size = 0xc00, scoped, tag = 'input window, operand 6, single buffered']
    #allocation12 [shape = 's32[1]{0}', space=sflag, size = 0x4, scoped, tag = 'scoped memory for tpu_custom_call.1']
    #allocation13 [shape = 'u8[196608]{0}', space=vmem, size = 0x30000, scoped, tag = 'input window, operand 7, single buffered']
    #allocation14 [shape = 'u8[512]{0}', space=vmem, size = 0x400, scoped, tag = 'input window, operand 8, single buffered']
    #allocation15 [shape = 's32[1]{0}', space=sflag, size = 0x4, scoped, tag = 'scoped memory for tpu_custom_call.1']
    #allocation16 [shape = 'u8[12288]{0}', space=vmem, size = 0x3000, scoped, tag = 'output window, operand 0, single buffered']
    #allocation17 [shape = 'u8[4096]{0}', space=vmem, size = 0x1000, scoped, tag = 'output window, operand 1, single buffered']
    #allocation18 [shape = 's32[1]{0}', space=sflag, size = 0x4, scoped, tag = 'scoped memory for tpu_custom_call.1']
    %17 = vsyncpa [#allocation3], 0
    %18 = vsyncpa [#allocation6], 0
    %19 = vsyncpa [#allocation9], 0
    %20 = vsyncpa [#allocation12], 0
    %21 = vsyncpa [#allocation15], 0
    %22 = vsyncpa [#allocation4], 0
    %23 = vsyncpa [#allocation18], 0
    // Predicated region
    $region2: #{tpu_custom_call.1} parent=1 // pred_check
      _
    $region3: #{tpu_custom_call.1} parent=1 // pred_check_branch
      %25 = sbr.rel (0) target = $region5
    $region4: #{tpu_custom_call.1} parent=1 // pred_region
      %27 = vsyncadd [#allocation3], 0
      %s28 = sshll.u32 %s0, 4
      %s29 = int_to_ptr.hbm [resolvable:$true] %s28
      %s30 = sshll.u32 [#allocation2], 4
      %s31 = int_to_ptr.vmem [resolvable:$true] %s30
      %36 = dma.hbm_to_vmem [thread:$0]  %s29, 3072, %s31, [#allocation3], 384, 384, 24
    $region5: #{tpu_custom_call.1} parent=1 // pred_fallthru
      _
    // Predicated region
    $region6: #{tpu_custom_call.1} parent=1 // pred_check
      _
    $region7: #{tpu_custom_call.1} parent=1 // pred_check_branch
      %38 = sbr.rel (0) target = $region9
    $region8: #{tpu_custom_call.1} parent=1 // pred_region
      %40 = vsyncadd [#allocation6], 0
      %s42 = sshll.u32 %s1, 4
      %s43 = int_to_ptr.hbm [resolvable:$true] %s42
      %s44 = sshll.u32 [#allocation5], 4
      %s45 = int_to_ptr.vmem [resolvable:$true] %s44
      %47 = dma.hbm_to_vmem [thread:$0]  %s43, 128, %s45, [#allocation6]
    $region9: #{tpu_custom_call.1} parent=1 // pred_fallthru
      _
    // Predicated region
    $region10: #{tpu_custom_call.1} parent=1 // pred_check
      _
    $region11: #{tpu_custom_call.1} parent=1 // pred_check_branch
      %49 = sbr.rel (0) target = $region13
    $region12: #{tpu_custom_call.1} parent=1 // pred_region
      _
    $region13: #{tpu_custom_call.1} parent=1 // pred_fallthru
      _
    // Predicated region
    $region14: #{tpu_custom_call.1} parent=1 // pred_check
      _
    $region15: #{tpu_custom_call.1} parent=1 // pred_check_branch
      %51 = sbr.rel (0) target = $region17
    $region16: #{tpu_custom_call.1} parent=1 // pred_region
      %53 = vsyncadd [#allocation6], 0
      %s54 = sshll.u32 %s3, 4
      %s55 = int_to_ptr.hbm [resolvable:$true] %s54
      %s56 = sshll.u32 [#allocation7], 4
      %s57 = int_to_ptr.vmem [resolvable:$true] %s56
      %62 = dma.hbm_to_vmem [thread:$0]  %s55, 36864, %s57, [#allocation6], 384, 384, 24
    $region17: #{tpu_custom_call.1} parent=1 // pred_fallthru
      _
    // Predicated region
    $region18: #{tpu_custom_call.1} parent=1 // pred_check
      _
    $region19: #{tpu_custom_call.1} parent=1 // pred_check_branch
      %64 = sbr.rel (0) target = $region21
    $region20: #{tpu_custom_call.1} parent=1 // pred_region
      %66 = vsyncadd [#allocation9], 0
      %s68 = sshll.u32 %s4, 4
      %s69 = int_to_ptr.hbm [resolvable:$true] %s68
      %s70 = sshll.u32 [#allocation8], 4
      %s71 = int_to_ptr.vmem [resolvable:$true] %s70
      %73 = dma.hbm_to_vmem [thread:$0]  %s69, 96, %s71, [#allocation9]
    $region21: #{tpu_custom_call.1} parent=1 // pred_fallthru
      _
    // Predicated region
    $region22: #{tpu_custom_call.1} parent=1 // pred_check
      _
    $region23: #{tpu_custom_call.1} parent=1 // pred_check_branch
      %75 = sbr.rel (0) target = $region25
    $region24: #{tpu_custom_call.1} parent=1 // pred_region
      %77 = vsyncadd [#allocation9], 0
      %s78 = sshll.u32 %s5, 4
      %s79 = int_to_ptr.hbm [resolvable:$true] %s78
      %s80 = sshll.u32 [#allocation10], 4
      %s81 = int_to_ptr.vmem [resolvable:$true] %s80
      %86 = dma.hbm_to_vmem [thread:$0]  %s79, 36864, %s81, [#allocation9], 384, 384, 24
    $region25: #{tpu_custom_call.1} parent=1 // pred_fallthru
      _
    // Predicated region
    $region26: #{tpu_custom_call.1} parent=1 // pred_check
      _
    $region27: #{tpu_custom_call.1} parent=1 // pred_check_branch
      %88 = sbr.rel (0) target = $region29
    $region28: #{tpu_custom_call.1} parent=1 // pred_region
      %90 = vsyncadd [#allocation12], 0
      %s92 = sshll.u32 %s6, 4
      %s93 = int_to_ptr.hbm [resolvable:$true] %s92
      %s94 = sshll.u32 [#allocation11], 4
      %s95 = int_to_ptr.vmem [resolvable:$true] %s94
      %97 = dma.hbm_to_vmem [thread:$0]  %s93, 96, %s95, [#allocation12]
    $region29: #{tpu_custom_call.1} parent=1 // pred_fallthru
      _
    // Predicated region
    $region30: #{tpu_custom_call.1} parent=1 // pred_check
      _
    $region31: #{tpu_custom_call.1} parent=1 // pred_check_branch
      %99 = sbr.rel (0) target = $region33
    $region32: #{tpu_custom_call.1} parent=1 // pred_region
      %101 = vsyncadd [#allocation12], 0
      %s102 = sshll.u32 %s7, 4
      %s103 = int_to_ptr.hbm [resolvable:$true] %s102
      %s104 = sshll.u32 [#allocation13], 4
      %s105 = int_to_ptr.vmem [resolvable:$true] %s104
      %110 = dma.hbm_to_vmem [thread:$0]  %s103, 6144, %s105, [#allocation12], 64, 64, 4
    $region33: #{tpu_custom_call.1} parent=1 // pred_fallthru
      _
    // Predicated region
    $region34: #{tpu_custom_call.1} parent=1 // pred_check
      _
    $region35: #{tpu_custom_call.1} parent=1 // pred_check_branch
      %112 = sbr.rel (0) target = $region37
    $region36: #{tpu_custom_call.1} parent=1 // pred_region
      %114 = vsyncadd [#allocation15], 0
      %s116 = sshll.u32 %s8, 4
      %s117 = int_to_ptr.hbm [resolvable:$true] %s116
      %s118 = sshll.u32 [#allocation14], 4
      %s119 = int_to_ptr.vmem [resolvable:$true] %s118
      %121 = dma.hbm_to_vmem [thread:$0]  %s117, 16, %s119, [#allocation15]
    $region37: #{tpu_custom_call.1} parent=1 // pred_fallthru
      _
    // Predicated region
    $region38: #{tpu_custom_call.1} parent=1 // pred_check
      _
    $region39: #{tpu_custom_call.1} parent=1 // pred_check_branch
      %123 = sbr.rel (0) target = $region41
    $region40: #{tpu_custom_call.1} parent=1 // pred_region
      %125 = dma.done [#allocation3], 3072
    $region41: #{tpu_custom_call.1} parent=1 // pred_fallthru
      _
    // Predicated region
    $region42: #{tpu_custom_call.1} parent=1 // pred_check
      _
    $region43: #{tpu_custom_call.1} parent=1 // pred_check_branch
      %127 = sbr.rel (0) target = $region45
    $region44: #{tpu_custom_call.1} parent=1 // pred_region
      %129 = dma.done [#allocation6], 128
    $region45: #{tpu_custom_call.1} parent=1 // pred_fallthru
      _
    // Predicated region
    $region46: #{tpu_custom_call.1} parent=1 // pred_check
      _
    $region47: #{tpu_custom_call.1} parent=1 // pred_check_branch
      %131 = sbr.rel (0) target = $region49
    $region48: #{tpu_custom_call.1} parent=1 // pred_region
      %133 = dma.done [#allocation6], 36864
    $region49: #{tpu_custom_call.1} parent=1 // pred_fallthru
      _
    // Predicated region
    $region50: #{tpu_custom_call.1} parent=1 // pred_check
      _
    $region51: #{tpu_custom_call.1} parent=1 // pred_check_branch
      %135 = sbr.rel (0) target = $region53
    $region52: #{tpu_custom_call.1} parent=1 // pred_region
      %137 = dma.done [#allocation9], 96
    $region53: #{tpu_custom_call.1} parent=1 // pred_fallthru
      _
    // Predicated region
    $region54: #{tpu_custom_call.1} parent=1 // pred_check
      _
    $region55: #{tpu_custom_call.1} parent=1 // pred_check_branch
      %139 = sbr.rel (0) target = $region57
    $region56: #{tpu_custom_call.1} parent=1 // pred_region
      %141 = dma.done [#allocation9], 36864
    $region57: #{tpu_custom_call.1} parent=1 // pred_fallthru
      _
    // Predicated region
    $region58: #{tpu_custom_call.1} parent=1 // pred_check
      _
    $region59: #{tpu_custom_call.1} parent=1 // pred_check_branch
      %143 = sbr.rel (0) target = $region61
    $region60: #{tpu_custom_call.1} parent=1 // pred_region
      %145 = dma.done [#allocation12], 96
    $region61: #{tpu_custom_call.1} parent=1 // pred_fallthru
      _
    // Predicated region
    $region62: #{tpu_custom_call.1} parent=1 // pred_check
      _
    $region63: #{tpu_custom_call.1} parent=1 // pred_check_branch
      %147 = sbr.rel (0) target = $region65
    $region64: #{tpu_custom_call.1} parent=1 // pred_region
      %149 = dma.done [#allocation12], 6144
    $region65: #{tpu_custom_call.1} parent=1 // pred_fallthru
      _
    // Predicated region
    $region66: #{tpu_custom_call.1} parent=1 // pred_check
      _
    $region67: #{tpu_custom_call.1} parent=1 // pred_check_branch
      %151 = sbr.rel (0) target = $region69
    $region68: #{tpu_custom_call.1} parent=1 // pred_region
      %153 = dma.done [#allocation15], 16
    $region69: #{tpu_custom_call.1} parent=1 // pred_fallthru
      _
    %v154 = vld [vmem:[#allocation2] sm:$0xff]
    %v155 = vld [vmem:[#allocation2 + $0x8] sm:$0xff]
    %v156 = vld [vmem:[#allocation2 + $0x10] sm:$0xff]
    %v157 = vld [vmem:[#allocation2 + $0x18] sm:$0xff]
    %v158 = vld [vmem:[#allocation2 + $0x20] sm:$0xff]
    %v159 = vld [vmem:[#allocation2 + $0x28] sm:$0xff]
    %v160 = vld [vmem:[#allocation2 + $0x30] sm:$0xff]
    %v161 = vld [vmem:[#allocation2 + $0x38] sm:$0xff]
    %v162 = vld [vmem:[#allocation2 + $0x40] sm:$0xff]
    %v163 = vld [vmem:[#allocation2 + $0x48] sm:$0xff]
    %v164 = vld [vmem:[#allocation2 + $0x50] sm:$0xff]
    %v165 = vld [vmem:[#allocation2 + $0x58] sm:$0xff]
    %v166 = vld [vmem:[#allocation2 + $0x60] sm:$0xff]
    %v167 = vld [vmem:[#allocation2 + $0x68] sm:$0xff]
    %v168 = vld [vmem:[#allocation2 + $0x70] sm:$0xff]
    %v169 = vld [vmem:[#allocation2 + $0x78] sm:$0xff]
    %v170 = vld [vmem:[#allocation2 + $0x80] sm:$0xff]
    %v171 = vld [vmem:[#allocation2 + $0x88] sm:$0xff]
    %v172 = vld [vmem:[#allocation2 + $0x90] sm:$0xff]
    %v173 = vld [vmem:[#allocation2 + $0x98] sm:$0xff]
    %v174 = vld [vmem:[#allocation2 + $0xa0] sm:$0xff]
    %v175 = vld [vmem:[#allocation2 + $0xa8] sm:$0xff]
    %v176 = vld [vmem:[#allocation2 + $0xb0] sm:$0xff]
    %v177 = vld [vmem:[#allocation2 + $0xb8] sm:$0xff]
    %v178 = vunpack.c.l.bf16 %v154
    %v179 = vunpack.c.h.bf16 %v154
    %v180 = vunpack.c.l.bf16 %v155
    %v181 = vunpack.c.h.bf16 %v155
    %v182 = vunpack.c.l.bf16 %v156
    %v183 = vunpack.c.h.bf16 %v156
    %v184 = vunpack.c.l.bf16 %v157
    %v185 = vunpack.c.h.bf16 %v157
    %v186 = vunpack.c.l.bf16 %v158
    %v187 = vunpack.c.h.bf16 %v158
    %v188 = vunpack.c.l.bf16 %v159
    %v189 = vunpack.c.h.bf16 %v159
    %v190 = vunpack.c.l.bf16 %v160
    %v191 = vunpack.c.h.bf16 %v160
    %v192 = vunpack.c.l.bf16 %v161
    %v193 = vunpack.c.h.bf16 %v161
    %v194 = vunpack.c.l.bf16 %v162
    %v195 = vunpack.c.h.bf16 %v162
    %v196 = vunpack.c.l.bf16 %v163
    %v197 = vunpack.c.h.bf16 %v163
    %v198 = vunpack.c.l.bf16 %v164
    %v199 = vunpack.c.h.bf16 %v164
    %v200 = vunpack.c.l.bf16 %v165
    %v201 = vunpack.c.h.bf16 %v165
    %v202 = vunpack.c.l.bf16 %v166
    %v203 = vunpack.c.h.bf16 %v166
    %v204 = vunpack.c.l.bf16 %v167
    %v205 = vunpack.c.h.bf16 %v167
    %v206 = vunpack.c.l.bf16 %v168
    %v207 = vunpack.c.h.bf16 %v168
    %v208 = vunpack.c.l.bf16 %v169
    %v209 = vunpack.c.h.bf16 %v169
    %v210 = vunpack.c.l.bf16 %v170
    %v211 = vunpack.c.h.bf16 %v170
    %v212 = vunpack.c.l.bf16 %v171
    %v213 = vunpack.c.h.bf16 %v171
    %v214 = vunpack.c.l.bf16 %v172
    %v215 = vunpack.c.h.bf16 %v172
    %v216 = vunpack.c.l.bf16 %v173
    %v217 = vunpack.c.h.bf16 %v173
    %v218 = vunpack.c.l.bf16 %v174
    %v219 = vunpack.c.h.bf16 %v174
    %v220 = vunpack.c.l.bf16 %v175
    %v221 = vunpack.c.h.bf16 %v175
    %v222 = vunpack.c.l.bf16 %v176
    %v223 = vunpack.c.h.bf16 %v176
    %v224 = vunpack.c.l.bf16 %v177
    %v225 = vunpack.c.h.bf16 %v177
    %v226 = vld [vmem:[#allocation5] sm:$0xff]
    %v227 = vperm.slane %v226, 0
    %v228 = vlaneseq
    %v229 = vshrl.u32 %v228, 7
    %231 = vset.pattern.permute.xlu0 %v229
    %232 = vperm.xlu0 %231, %v227
    %v233 = vpop.permute.xlu0 %232
    %v234 = vperm.slane %v226, 1
    %v235 = vlaneseq
    %v236 = vshrl.u32 %v235, 7
    %238 = vset.pattern.permute.xlu0 %v236
    %239 = vperm.xlu0 %238, %v234
    %v240 = vpop.permute.xlu0 %239
    %v241 = vperm.slane %v226, 2
    %v242 = vlaneseq
    %v243 = vshrl.u32 %v242, 7
    %245 = vset.pattern.permute.xlu0 %v243
    %246 = vperm.xlu0 %245, %v241
    %v247 = vpop.permute.xlu0 %246
    %v248 = vperm.slane %v226, 3
    %v249 = vlaneseq
    %v250 = vshrl.u32 %v249, 7
    %252 = vset.pattern.permute.xlu0 %v250
    %253 = vperm.xlu0 %252, %v248
    %v254 = vpop.permute.xlu0 %253
    %v255 = vperm.slane %v226, 4
    %v256 = vlaneseq
    %v257 = vshrl.u32 %v256, 7
    %259 = vset.pattern.permute.xlu0 %v257
    %260 = vperm.xlu0 %259, %v255
    %v261 = vpop.permute.xlu0 %260
    %v262 = vperm.slane %v226, 5
    %v263 = vlaneseq
    %v264 = vshrl.u32 %v263, 7
    %266 = vset.pattern.permute.xlu0 %v264
    %267 = vperm.xlu0 %266, %v262
    %v268 = vpop.permute.xlu0 %267
    %v269 = vperm.slane %v226, 6
    %v270 = vlaneseq
    %v271 = vshrl.u32 %v270, 7
    %273 = vset.pattern.permute.xlu0 %v271
    %274 = vperm.xlu0 %273, %v269
    %v275 = vpop.permute.xlu0 %274
    %v276 = vperm.slane %v226, 7
    %v277 = vlaneseq
    %v278 = vshrl.u32 %v277, 7
    %280 = vset.pattern.permute.xlu0 %v278
    %281 = vperm.xlu0 %280, %v276
    %v282 = vpop.permute.xlu0 %281
    %vm283 = vcmask 64512
    %v284 = vsel %vm283, %v226, 0.0
    %285 = vadd.xlane.f32.xlu0 %v284
    %v286 = vpop.xlane.xlu0 %285
    %v287 = vmax.f32 %v286, 1.0
    %v288 = vrcp.pop %v287
    %v289 = vmul.f32 %v178, %v233
    %v290 = vmul.f32 %v179, %v233
    %v291 = vmul.f32 %v180, %v233
    %v292 = vmul.f32 %v181, %v233
    %v293 = vmul.f32 %v182, %v233
    %v294 = vmul.f32 %v183, %v233
    %v295 = vmul.f32 %v184, %v240
    %v296 = vmul.f32 %v185, %v240
    %v297 = vmul.f32 %v186, %v240
    %v298 = vmul.f32 %v187, %v240
    %v299 = vmul.f32 %v188, %v240
    %v300 = vmul.f32 %v189, %v240
    %v301 = vmul.f32 %v190, %v247
    %v302 = vmul.f32 %v191, %v247
    %v303 = vmul.f32 %v192, %v247
    %v304 = vmul.f32 %v193, %v247
    %v305 = vmul.f32 %v194, %v247
    %v306 = vmul.f32 %v195, %v247
    %v307 = vmul.f32 %v196, %v254
    %v308 = vmul.f32 %v197, %v254
    %v309 = vmul.f32 %v198, %v254
    %v310 = vmul.f32 %v199, %v254
    %v311 = vmul.f32 %v200, %v254
    %v312 = vmul.f32 %v201, %v254
    %v313 = vmul.f32 %v202, %v261
    %v314 = vmul.f32 %v203, %v261
    %v315 = vmul.f32 %v204, %v261
    %v316 = vmul.f32 %v205, %v261
    %v317 = vmul.f32 %v206, %v261
    %v318 = vmul.f32 %v207, %v261
    %v319 = vmul.f32 %v208, %v268
    %v320 = vmul.f32 %v209, %v268
    %v321 = vmul.f32 %v210, %v268
    %v322 = vmul.f32 %v211, %v268
    %v323 = vmul.f32 %v212, %v268
    %v324 = vmul.f32 %v213, %v268
    %v325 = vmul.f32 %v214, %v275
    %v326 = vmul.f32 %v215, %v275
    %v327 = vmul.f32 %v216, %v275
    %v328 = vmul.f32 %v217, %v275
    %v329 = vmul.f32 %v218, %v275
    %v330 = vmul.f32 %v219, %v275
    %v331 = vmul.f32 %v220, %v282
    %v332 = vmul.f32 %v221, %v282
    %v333 = vmul.f32 %v222, %v282
    %v334 = vmul.f32 %v223, %v282
    %v335 = vmul.f32 %v224, %v282
    %v336 = vmul.f32 %v225, %v282
    %v337 = vrot.slane %v289, 4
    %v338 = vadd.f32 %v289, %v337
    %v339 = vrot.slane %v338, 2
    %v340 = vadd.f32 %v338, %v339
    %v341 = vrot.slane %v340, 1
    %v342 = vadd.f32 %v340, %v341
    %v343 = vrot.slane %v290, 4
    %v344 = vadd.f32 %v290, %v343
    %v345 = vrot.slane %v344, 2
    %v346 = vadd.f32 %v344, %v345
    %v347 = vrot.slane %v346, 1
    %v348 = vadd.f32 %v346, %v347
    %v349 = vrot.slane %v291, 4
    %v350 = vadd.f32 %v291, %v349
    %v351 = vrot.slane %v350, 2
    %v352 = vadd.f32 %v350, %v351
    %v353 = vrot.slane %v352, 1
    %v354 = vadd.f32 %v352, %v353
    %v355 = vrot.slane %v292, 4
    %v356 = vadd.f32 %v292, %v355
    %v357 = vrot.slane %v356, 2
    %v358 = vadd.f32 %v356, %v357
    %v359 = vrot.slane %v358, 1
    %v360 = vadd.f32 %v358, %v359
    %v361 = vrot.slane %v293, 4
    %v362 = vadd.f32 %v293, %v361
    %v363 = vrot.slane %v362, 2
    %v364 = vadd.f32 %v362, %v363
    %v365 = vrot.slane %v364, 1
    %v366 = vadd.f32 %v364, %v365
    %v367 = vrot.slane %v294, 4
    %v368 = vadd.f32 %v294, %v367
    %v369 = vrot.slane %v368, 2
    %v370 = vadd.f32 %v368, %v369
    %v371 = vrot.slane %v370, 1
    %v372 = vadd.f32 %v370, %v371
    %v373 = vrot.slane %v295, 4
    %v374 = vadd.f32 %v295, %v373
    %v375 = vrot.slane %v374, 2
    %v376 = vadd.f32 %v374, %v375
    %v377 = vrot.slane %v376, 1
    %v378 = vadd.f32 %v376, %v377
    %v379 = vrot.slane %v296, 4
    %v380 = vadd.f32 %v296, %v379
    %v381 = vrot.slane %v380, 2
    %v382 = vadd.f32 %v380, %v381
    %v383 = vrot.slane %v382, 1
    %v384 = vadd.f32 %v382, %v383
    %v385 = vrot.slane %v297, 4
    %v386 = vadd.f32 %v297, %v385
    %v387 = vrot.slane %v386, 2
    %v388 = vadd.f32 %v386, %v387
    %v389 = vrot.slane %v388, 1
    %v390 = vadd.f32 %v388, %v389
    %v391 = vrot.slane %v298, 4
    %v392 = vadd.f32 %v298, %v391
    %v393 = vrot.slane %v392, 2
    %v394 = vadd.f32 %v392, %v393
    %v395 = vrot.slane %v394, 1
    %v396 = vadd.f32 %v394, %v395
    %v397 = vrot.slane %v299, 4
    %v398 = vadd.f32 %v299, %v397
    %v399 = vrot.slane %v398, 2
    %v400 = vadd.f32 %v398, %v399
    %v401 = vrot.slane %v400, 1
    %v402 = vadd.f32 %v400, %v401
    %v403 = vrot.slane %v300, 4
    %v404 = vadd.f32 %v300, %v403
    %v405 = vrot.slane %v404, 2
    %v406 = vadd.f32 %v404, %v405
    %v407 = vrot.slane %v406, 1
    %v408 = vadd.f32 %v406, %v407
    %v409 = vrot.slane %v301, 4
    %v410 = vadd.f32 %v301, %v409
    %v411 = vrot.slane %v410, 2
    %v412 = vadd.f32 %v410, %v411
    %v413 = vrot.slane %v412, 1
    %v414 = vadd.f32 %v412, %v413
    %v415 = vrot.slane %v302, 4
    %v416 = vadd.f32 %v302, %v415
    %v417 = vrot.slane %v416, 2
    %v418 = vadd.f32 %v416, %v417
    %v419 = vrot.slane %v418, 1
    %v420 = vadd.f32 %v418, %v419
    %v421 = vrot.slane %v303, 4
    %v422 = vadd.f32 %v303, %v421
    %v423 = vrot.slane %v422, 2
    %v424 = vadd.f32 %v422, %v423
    %v425 = vrot.slane %v424, 1
    %v426 = vadd.f32 %v424, %v425
    %v427 = vrot.slane %v304, 4
    %v428 = vadd.f32 %v304, %v427
    %v429 = vrot.slane %v428, 2
    %v430 = vadd.f32 %v428, %v429
    %v431 = vrot.slane %v430, 1
    %v432 = vadd.f32 %v430, %v431
    %v433 = vrot.slane %v305, 4
    %v434 = vadd.f32 %v305, %v433
    %v435 = vrot.slane %v434, 2
    %v436 = vadd.f32 %v434, %v435
    %v437 = vrot.slane %v436, 1
    %v438 = vadd.f32 %v436, %v437
    %v439 = vrot.slane %v306, 4
    %v440 = vadd.f32 %v306, %v439
    %v441 = vrot.slane %v440, 2
    %v442 = vadd.f32 %v440, %v441
    %v443 = vrot.slane %v442, 1
    %v444 = vadd.f32 %v442, %v443
    %v445 = vrot.slane %v307, 4
    %v446 = vadd.f32 %v307, %v445
    %v447 = vrot.slane %v446, 2
    %v448 = vadd.f32 %v446, %v447
    %v449 = vrot.slane %v448, 1
    %v450 = vadd.f32 %v448, %v449
    %v451 = vrot.slane %v308, 4
    %v452 = vadd.f32 %v308, %v451
    %v453 = vrot.slane %v452, 2
    %v454 = vadd.f32 %v452, %v453
    %v455 = vrot.slane %v454, 1
    %v456 = vadd.f32 %v454, %v455
    %v457 = vrot.slane %v309, 4
    %v458 = vadd.f32 %v309, %v457
    %v459 = vrot.slane %v458, 2
    %v460 = vadd.f32 %v458, %v459
    %v461 = vrot.slane %v460, 1
    %v462 = vadd.f32 %v460, %v461
    %v463 = vrot.slane %v310, 4
    %v464 = vadd.f32 %v310, %v463
    %v465 = vrot.slane %v464, 2
    %v466 = vadd.f32 %v464, %v465
    %v467 = vrot.slane %v466, 1
    %v468 = vadd.f32 %v466, %v467
    %v469 = vrot.slane %v311, 4
    %v470 = vadd.f32 %v311, %v469
    %v471 = vrot.slane %v470, 2
    %v472 = vadd.f32 %v470, %v471
    %v473 = vrot.slane %v472, 1
    %v474 = vadd.f32 %v472, %v473
    %v475 = vrot.slane %v312, 4
    %v476 = vadd.f32 %v312, %v475
    %v477 = vrot.slane %v476, 2
    %v478 = vadd.f32 %v476, %v477
    %v479 = vrot.slane %v478, 1
    %v480 = vadd.f32 %v478, %v479
    %v481 = vrot.slane %v313, 4
    %v482 = vadd.f32 %v313, %v481
    %v483 = vrot.slane %v482, 2
    %v484 = vadd.f32 %v482, %v483
    %v485 = vrot.slane %v484, 1
    %v486 = vadd.f32 %v484, %v485
    %v487 = vrot.slane %v314, 4
    %v488 = vadd.f32 %v314, %v487
    %v489 = vrot.slane %v488, 2
    %v490 = vadd.f32 %v488, %v489
    %v491 = vrot.slane %v490, 1
    %v492 = vadd.f32 %v490, %v491
    %v493 = vrot.slane %v315, 4
    %v494 = vadd.f32 %v315, %v493
    %v495 = vrot.slane %v494, 2
    %v496 = vadd.f32 %v494, %v495
    %v497 = vrot.slane %v496, 1
    %v498 = vadd.f32 %v496, %v497
    %v499 = vrot.slane %v316, 4
    %v500 = vadd.f32 %v316, %v499
    %v501 = vrot.slane %v500, 2
    %v502 = vadd.f32 %v500, %v501
    %v503 = vrot.slane %v502, 1
    %v504 = vadd.f32 %v502, %v503
    %v505 = vrot.slane %v317, 4
    %v506 = vadd.f32 %v317, %v505
    %v507 = vrot.slane %v506, 2
    %v508 = vadd.f32 %v506, %v507
    %v509 = vrot.slane %v508, 1
    %v510 = vadd.f32 %v508, %v509
    %v511 = vrot.slane %v318, 4
    %v512 = vadd.f32 %v318, %v511
    %v513 = vrot.slane %v512, 2
    %v514 = vadd.f32 %v512, %v513
    %v515 = vrot.slane %v514, 1
    %v516 = vadd.f32 %v514, %v515
    %v517 = vrot.slane %v319, 4
    %v518 = vadd.f32 %v319, %v517
    %v519 = vrot.slane %v518, 2
    %v520 = vadd.f32 %v518, %v519
    %v521 = vrot.slane %v520, 1
    %v522 = vadd.f32 %v520, %v521
    %v523 = vrot.slane %v320, 4
    %v524 = vadd.f32 %v320, %v523
    %v525 = vrot.slane %v524, 2
    %v526 = vadd.f32 %v524, %v525
    %v527 = vrot.slane %v526, 1
    %v528 = vadd.f32 %v526, %v527
    %v529 = vrot.slane %v321, 4
    %v530 = vadd.f32 %v321, %v529
    %v531 = vrot.slane %v530, 2
    %v532 = vadd.f32 %v530, %v531
    %v533 = vrot.slane %v532, 1
    %v534 = vadd.f32 %v532, %v533
    %v535 = vrot.slane %v322, 4
    %v536 = vadd.f32 %v322, %v535
    %v537 = vrot.slane %v536, 2
    %v538 = vadd.f32 %v536, %v537
    %v539 = vrot.slane %v538, 1
    %v540 = vadd.f32 %v538, %v539
    %v541 = vrot.slane %v323, 4
    %v542 = vadd.f32 %v323, %v541
    %v543 = vrot.slane %v542, 2
    %v544 = vadd.f32 %v542, %v543
    %v545 = vrot.slane %v544, 1
    %v546 = vadd.f32 %v544, %v545
    %v547 = vrot.slane %v324, 4
    %v548 = vadd.f32 %v324, %v547
    %v549 = vrot.slane %v548, 2
    %v550 = vadd.f32 %v548, %v549
    %v551 = vrot.slane %v550, 1
    %v552 = vadd.f32 %v550, %v551
    %v553 = vrot.slane %v325, 4
    %v554 = vadd.f32 %v325, %v553
    %v555 = vrot.slane %v554, 2
    %v556 = vadd.f32 %v554, %v555
    %v557 = vrot.slane %v556, 1
    %v558 = vadd.f32 %v556, %v557
    %v559 = vrot.slane %v326, 4
    %v560 = vadd.f32 %v326, %v559
    %v561 = vrot.slane %v560, 2
    %v562 = vadd.f32 %v560, %v561
    %v563 = vrot.slane %v562, 1
    %v564 = vadd.f32 %v562, %v563
    %v565 = vrot.slane %v327, 4
    %v566 = vadd.f32 %v327, %v565
    %v567 = vrot.slane %v566, 2
    %v568 = vadd.f32 %v566, %v567
    %v569 = vrot.slane %v568, 1
    %v570 = vadd.f32 %v568, %v569
    %v571 = vrot.slane %v328, 4
    %v572 = vadd.f32 %v328, %v571
    %v573 = vrot.slane %v572, 2
    %v574 = vadd.f32 %v572, %v573
    %v575 = vrot.slane %v574, 1
    %v576 = vadd.f32 %v574, %v575
    %v577 = vrot.slane %v329, 4
    %v578 = vadd.f32 %v329, %v577
    %v579 = vrot.slane %v578, 2
    %v580 = vadd.f32 %v578, %v579
    %v581 = vrot.slane %v580, 1
    %v582 = vadd.f32 %v580, %v581
    %v583 = vrot.slane %v330, 4
    %v584 = vadd.f32 %v330, %v583
    %v585 = vrot.slane %v584, 2
    %v586 = vadd.f32 %v584, %v585
    %v587 = vrot.slane %v586, 1
    %v588 = vadd.f32 %v586, %v587
    %v589 = vrot.slane %v331, 4
    %v590 = vadd.f32 %v331, %v589
    %v591 = vrot.slane %v590, 2
    %v592 = vadd.f32 %v590, %v591
    %v593 = vrot.slane %v592, 1
    %v594 = vadd.f32 %v592, %v593
    %v595 = vrot.slane %v332, 4
    %v596 = vadd.f32 %v332, %v595
    %v597 = vrot.slane %v596, 2
    %v598 = vadd.f32 %v596, %v597
    %v599 = vrot.slane %v598, 1
    %v600 = vadd.f32 %v598, %v599
    %v601 = vrot.slane %v333, 4
    %v602 = vadd.f32 %v333, %v601
    %v603 = vrot.slane %v602, 2
    %v604 = vadd.f32 %v602, %v603
    %v605 = vrot.slane %v604, 1
    %v606 = vadd.f32 %v604, %v605
    %v607 = vrot.slane %v334, 4
    %v608 = vadd.f32 %v334, %v607
    %v609 = vrot.slane %v608, 2
    %v610 = vadd.f32 %v608, %v609
    %v611 = vrot.slane %v610, 1
    %v612 = vadd.f32 %v610, %v611
    %v613 = vrot.slane %v335, 4
    %v614 = vadd.f32 %v335, %v613
    %v615 = vrot.slane %v614, 2
    %v616 = vadd.f32 %v614, %v615
    %v617 = vrot.slane %v616, 1
    %v618 = vadd.f32 %v616, %v617
    %v619 = vrot.slane %v336, 4
    %v620 = vadd.f32 %v336, %v619
    %v621 = vrot.slane %v620, 2
    %v622 = vadd.f32 %v620, %v621
    %v623 = vrot.slane %v622, 1
    %v624 = vadd.f32 %v622, %v623
    %v626 = vrot.slane %v288, 1
    %v627 = vrot.slane %v288, 2
    %v628 = vrot.slane %v288, 3
    %v629 = vrot.slane %v288, 4
    %v630 = vrot.slane %v288, 5
    %v631 = vrot.slane %v288, 6
    %v632 = vrot.slane %v288, 7
    %v641 = vmul.f32 %v342, %v288
    %v642 = vmul.f32 %v348, %v288
    %v643 = vmul.f32 %v354, %v288
    %v644 = vmul.f32 %v360, %v288
    %v645 = vmul.f32 %v366, %v288
    %v646 = vmul.f32 %v372, %v288
    %v647 = vmul.f32 %v378, %v626
    %v648 = vmul.f32 %v384, %v626
    %v649 = vmul.f32 %v390, %v626
    %v650 = vmul.f32 %v396, %v626
    %v651 = vmul.f32 %v402, %v626
    %v652 = vmul.f32 %v408, %v626
    %v653 = vmul.f32 %v414, %v627
    %v654 = vmul.f32 %v420, %v627
    %v655 = vmul.f32 %v426, %v627
    %v656 = vmul.f32 %v432, %v627
    %v657 = vmul.f32 %v438, %v627
    %v658 = vmul.f32 %v444, %v627
    %v659 = vmul.f32 %v450, %v628
    %v660 = vmul.f32 %v456, %v628
    %v661 = vmul.f32 %v462, %v628
    %v662 = vmul.f32 %v468, %v628
    %v663 = vmul.f32 %v474, %v628
    %v664 = vmul.f32 %v480, %v628
    %v665 = vmul.f32 %v486, %v629
    %v666 = vmul.f32 %v492, %v629
    %v667 = vmul.f32 %v498, %v629
    %v668 = vmul.f32 %v504, %v629
    %v669 = vmul.f32 %v510, %v629
    %v670 = vmul.f32 %v516, %v629
    %v671 = vmul.f32 %v522, %v630
    %v672 = vmul.f32 %v528, %v630
    %v673 = vmul.f32 %v534, %v630
    %v674 = vmul.f32 %v540, %v630
    %v675 = vmul.f32 %v546, %v630
    %v676 = vmul.f32 %v552, %v630
    %v677 = vmul.f32 %v558, %v631
    %v678 = vmul.f32 %v564, %v631
    %v679 = vmul.f32 %v570, %v631
    %v680 = vmul.f32 %v576, %v631
    %v681 = vmul.f32 %v582, %v631
    %v682 = vmul.f32 %v588, %v631
    %v683 = vmul.f32 %v594, %v632
    %v684 = vmul.f32 %v600, %v632
    %v685 = vmul.f32 %v606, %v632
    %v686 = vmul.f32 %v612, %v632
    %v687 = vmul.f32 %v618, %v632
    %v688 = vmul.f32 %v624, %v632
    %v689 = vpack.c.bf16 %v641, %v641
    %v690 = vpack.c.bf16 %v642, %v642
    %v691 = vpack.c.bf16 %v643, %v643
    %v692 = vpack.c.bf16 %v644, %v644
    %v693 = vpack.c.bf16 %v645, %v645
    %v694 = vpack.c.bf16 %v646, %v646
    %v695 = vpack.c.bf16 %v647, %v647
    %v696 = vpack.c.bf16 %v648, %v648
    %v697 = vpack.c.bf16 %v649, %v649
    %v698 = vpack.c.bf16 %v650, %v650
    %v699 = vpack.c.bf16 %v651, %v651
    %v700 = vpack.c.bf16 %v652, %v652
    %v701 = vpack.c.bf16 %v653, %v653
    %v702 = vpack.c.bf16 %v654, %v654
    %v703 = vpack.c.bf16 %v655, %v655
    %v704 = vpack.c.bf16 %v656, %v656
    %v705 = vpack.c.bf16 %v657, %v657
    %v706 = vpack.c.bf16 %v658, %v658
    %v707 = vpack.c.bf16 %v659, %v659
    %v708 = vpack.c.bf16 %v660, %v660
    %v709 = vpack.c.bf16 %v661, %v661
    %v710 = vpack.c.bf16 %v662, %v662
    %v711 = vpack.c.bf16 %v663, %v663
    %v712 = vpack.c.bf16 %v664, %v664
    %v713 = vpack.c.bf16 %v665, %v665
    %v714 = vpack.c.bf16 %v666, %v666
    %v715 = vpack.c.bf16 %v667, %v667
    %v716 = vpack.c.bf16 %v668, %v668
    %v717 = vpack.c.bf16 %v669, %v669
    %v718 = vpack.c.bf16 %v670, %v670
    %v719 = vpack.c.bf16 %v671, %v671
    %v720 = vpack.c.bf16 %v672, %v672
    %v721 = vpack.c.bf16 %v673, %v673
    %v722 = vpack.c.bf16 %v674, %v674
    %v723 = vpack.c.bf16 %v675, %v675
    %v724 = vpack.c.bf16 %v676, %v676
    %v725 = vpack.c.bf16 %v677, %v677
    %v726 = vpack.c.bf16 %v678, %v678
    %v727 = vpack.c.bf16 %v679, %v679
    %v728 = vpack.c.bf16 %v680, %v680
    %v729 = vpack.c.bf16 %v681, %v681
    %v730 = vpack.c.bf16 %v682, %v682
    %v731 = vpack.c.bf16 %v683, %v683
    %v732 = vpack.c.bf16 %v684, %v684
    %v733 = vpack.c.bf16 %v685, %v685
    %v734 = vpack.c.bf16 %v686, %v686
    %v735 = vpack.c.bf16 %v687, %v687
    %v736 = vpack.c.bf16 %v688, %v688
    %v737 = vld [vmem:[#allocation7] sm:$0xff]
    %v738 = vld [vmem:[#allocation7 + $0x8] sm:$0xff]
    %v739 = vld [vmem:[#allocation7 + $0x10] sm:$0xff]
    %v740 = vld [vmem:[#allocation7 + $0x18] sm:$0xff]
    %v741 = vld [vmem:[#allocation7 + $0x20] sm:$0xff]
    %v742 = vld [vmem:[#allocation7 + $0x28] sm:$0xff]
    %v743 = vld [vmem:[#allocation7 + $0x30] sm:$0xff]
    %v744 = vld [vmem:[#allocation7 + $0x38] sm:$0xff]
    %v745 = vld [vmem:[#allocation7 + $0x40] sm:$0xff]
    %v746 = vld [vmem:[#allocation7 + $0x48] sm:$0xff]
    %v747 = vld [vmem:[#allocation7 + $0x50] sm:$0xff]
    %v748 = vld [vmem:[#allocation7 + $0x58] sm:$0xff]
    %v749 = vld [vmem:[#allocation7 + $0x60] sm:$0xff]
    %v750 = vld [vmem:[#allocation7 + $0x68] sm:$0xff]
    %v751 = vld [vmem:[#allocation7 + $0x70] sm:$0xff]
    %v752 = vld [vmem:[#allocation7 + $0x78] sm:$0xff]
    %v753 = vld [vmem:[#allocation7 + $0x80] sm:$0xff]
    %v754 = vld [vmem:[#allocation7 + $0x88] sm:$0xff]
    %v755 = vld [vmem:[#allocation7 + $0x90] sm:$0xff]
    %v756 = vld [vmem:[#allocation7 + $0x98] sm:$0xff]
    %v757 = vld [vmem:[#allocation7 + $0xa0] sm:$0xff]
    %v758 = vld [vmem:[#allocation7 + $0xa8] sm:$0xff]
    %v759 = vld [vmem:[#allocation7 + $0xb0] sm:$0xff]
    %v760 = vld [vmem:[#allocation7 + $0xb8] sm:$0xff]
    %v761 = vld [vmem:[#allocation7 + $0xc0] sm:$0xff]
    %v762 = vld [vmem:[#allocation7 + $0xc8] sm:$0xff]
    %v763 = vld [vmem:[#allocation7 + $0xd0] sm:$0xff]
    %v764 = vld [vmem:[#allocation7 + $0xd8] sm:$0xff]
    %v765 = vld [vmem:[#allocation7 + $0xe0] sm:$0xff]
    %v766 = vld [vmem:[#allocation7 + $0xe8] sm:$0xff]
    %v767 = vld [vmem:[#allocation7 + $0xf0] sm:$0xff]
    %v768 = vld [vmem:[#allocation7 + $0xf8] sm:$0xff]
    %v769 = vld [vmem:[#allocation7 + $0x100] sm:$0xff]
    %v770 = vld [vmem:[#allocation7 + $0x108] sm:$0xff]
    %v771 = vld [vmem:[#allocation7 + $0x110] sm:$0xff]
    %v772 = vld [vmem:[#allocation7 + $0x118] sm:$0xff]
    %v773 = vld [vmem:[#allocation7 + $0x120] sm:$0xff]
    %v774 = vld [vmem:[#allocation7 + $0x128] sm:$0xff]
    %v775 = vld [vmem:[#allocation7 + $0x130] sm:$0xff]
    %v776 = vld [vmem:[#allocation7 + $0x138] sm:$0xff]
    %v777 = vld [vmem:[#allocation7 + $0x140] sm:$0xff]
    %v778 = vld [vmem:[#allocation7 + $0x148] sm:$0xff]
    %v779 = vld [vmem:[#allocation7 + $0x150] sm:$0xff]
    %v780 = vld [vmem:[#allocation7 + $0x158] sm:$0xff]
    %v781 = vld [vmem:[#allocation7 + $0x160] sm:$0xff]
    %v782 = vld [vmem:[#allocation7 + $0x168] sm:$0xff]
    %v783 = vld [vmem:[#allocation7 + $0x170] sm:$0xff]
    %v784 = vld [vmem:[#allocation7 + $0x178] sm:$0xff]
    %v785 = vld [vmem:[#allocation7 + $0x180] sm:$0xff]
    %v786 = vld [vmem:[#allocation7 + $0x188] sm:$0xff]
    %v787 = vld [vmem:[#allocation7 + $0x190] sm:$0xff]
    %v788 = vld [vmem:[#allocation7 + $0x198] sm:$0xff]
    %v789 = vld [vmem:[#allocation7 + $0x1a0] sm:$0xff]
    %v790 = vld [vmem:[#allocation7 + $0x1a8] sm:$0xff]
    %v791 = vld [vmem:[#allocation7 + $0x1b0] sm:$0xff]
    %v792 = vld [vmem:[#allocation7 + $0x1b8] sm:$0xff]
    %v793 = vld [vmem:[#allocation7 + $0x1c0] sm:$0xff]
    %v794 = vld [vmem:[#allocation7 + $0x1c8] sm:$0xff]
    %v795 = vld [vmem:[#allocation7 + $0x1d0] sm:$0xff]
    %v796 = vld [vmem:[#allocation7 + $0x1d8] sm:$0xff]
    %v797 = vld [vmem:[#allocation7 + $0x1e0] sm:$0xff]
    %v798 = vld [vmem:[#allocation7 + $0x1e8] sm:$0xff]
    %v799 = vld [vmem:[#allocation7 + $0x1f0] sm:$0xff]
    %v800 = vld [vmem:[#allocation7 + $0x1f8] sm:$0xff]
    %v801 = vld [vmem:[#allocation7 + $0x200] sm:$0xff]
    %v802 = vld [vmem:[#allocation7 + $0x208] sm:$0xff]
    %v803 = vld [vmem:[#allocation7 + $0x210] sm:$0xff]
    %v804 = vld [vmem:[#allocation7 + $0x218] sm:$0xff]
    %v805 = vld [vmem:[#allocation7 + $0x220] sm:$0xff]
    %v806 = vld [vmem:[#allocation7 + $0x228] sm:$0xff]
    %v807 = vld [vmem:[#allocation7 + $0x230] sm:$0xff]
    %v808 = vld [vmem:[#allocation7 + $0x238] sm:$0xff]
    %v809 = vld [vmem:[#allocation7 + $0x240] sm:$0xff]
    %v810 = vld [vmem:[#allocation7 + $0x248] sm:$0xff]
    %v811 = vld [vmem:[#allocation7 + $0x250] sm:$0xff]
    %v812 = vld [vmem:[#allocation7 + $0x258] sm:$0xff]
    %v813 = vld [vmem:[#allocation7 + $0x260] sm:$0xff]
    %v814 = vld [vmem:[#allocation7 + $0x268] sm:$0xff]
    %v815 = vld [vmem:[#allocation7 + $0x270] sm:$0xff]
    %v816 = vld [vmem:[#allocation7 + $0x278] sm:$0xff]
    %v817 = vld [vmem:[#allocation7 + $0x280] sm:$0xff]
    %v818 = vld [vmem:[#allocation7 + $0x288] sm:$0xff]
    %v819 = vld [vmem:[#allocation7 + $0x290] sm:$0xff]
    %v820 = vld [vmem:[#allocation7 + $0x298] sm:$0xff]
    %v821 = vld [vmem:[#allocation7 + $0x2a0] sm:$0xff]
    %v822 = vld [vmem:[#allocation7 + $0x2a8] sm:$0xff]
    %v823 = vld [vmem:[#allocation7 + $0x2b0] sm:$0xff]
    %v824 = vld [vmem:[#allocation7 + $0x2b8] sm:$0xff]
    %v825 = vld [vmem:[#allocation7 + $0x2c0] sm:$0xff]
    %v826 = vld [vmem:[#allocation7 + $0x2c8] sm:$0xff]
    %v827 = vld [vmem:[#allocation7 + $0x2d0] sm:$0xff]
    %v828 = vld [vmem:[#allocation7 + $0x2d8] sm:$0xff]
    %v829 = vld [vmem:[#allocation7 + $0x2e0] sm:$0xff]
    %v830 = vld [vmem:[#allocation7 + $0x2e8] sm:$0xff]
    %v831 = vld [vmem:[#allocation7 + $0x2f0] sm:$0xff]
    %v832 = vld [vmem:[#allocation7 + $0x2f8] sm:$0xff]
    %v833 = vld [vmem:[#allocation7 + $0x300] sm:$0xff]
    %v834 = vld [vmem:[#allocation7 + $0x308] sm:$0xff]
    %v835 = vld [vmem:[#allocation7 + $0x310] sm:$0xff]
    %v836 = vld [vmem:[#allocation7 + $0x318] sm:$0xff]
    %v837 = vld [vmem:[#allocation7 + $0x320] sm:$0xff]
    %v838 = vld [vmem:[#allocation7 + $0x328] sm:$0xff]
    %v839 = vld [vmem:[#allocation7 + $0x330] sm:$0xff]
    %v840 = vld [vmem:[#allocation7 + $0x338] sm:$0xff]
    %v841 = vld [vmem:[#allocation7 + $0x340] sm:$0xff]
    %v842 = vld [vmem:[#allocation7 + $0x348] sm:$0xff]
    %v843 = vld [vmem:[#allocation7 + $0x350] sm:$0xff]
    %v844 = vld [vmem:[#allocation7 + $0x358] sm:$0xff]
    %v845 = vld [vmem:[#allocation7 + $0x360] sm:$0xff]
    %v846 = vld [vmem:[#allocation7 + $0x368] sm:$0xff]
    %v847 = vld [vmem:[#allocation7 + $0x370] sm:$0xff]
    %v848 = vld [vmem:[#allocation7 + $0x378] sm:$0xff]
    %v849 = vld [vmem:[#allocation7 + $0x380] sm:$0xff]
    %v850 = vld [vmem:[#allocation7 + $0x388] sm:$0xff]
    %v851 = vld [vmem:[#allocation7 + $0x390] sm:$0xff]
    %v852 = vld [vmem:[#allocation7 + $0x398] sm:$0xff]
    %v853 = vld [vmem:[#allocation7 + $0x3a0] sm:$0xff]
    %v854 = vld [vmem:[#allocation7 + $0x3a8] sm:$0xff]
    %v855 = vld [vmem:[#allocation7 + $0x3b0] sm:$0xff]
    %v856 = vld [vmem:[#allocation7 + $0x3b8] sm:$0xff]
    %v857 = vld [vmem:[#allocation7 + $0x3c0] sm:$0xff]
    %v858 = vld [vmem:[#allocation7 + $0x3c8] sm:$0xff]
    %v859 = vld [vmem:[#allocation7 + $0x3d0] sm:$0xff]
    %v860 = vld [vmem:[#allocation7 + $0x3d8] sm:$0xff]
    %v861 = vld [vmem:[#allocation7 + $0x3e0] sm:$0xff]
    %v862 = vld [vmem:[#allocation7 + $0x3e8] sm:$0xff]
    %v863 = vld [vmem:[#allocation7 + $0x3f0] sm:$0xff]
    %v864 = vld [vmem:[#allocation7 + $0x3f8] sm:$0xff]
    %v865 = vld [vmem:[#allocation7 + $0x400] sm:$0xff]
    %v866 = vld [vmem:[#allocation7 + $0x408] sm:$0xff]
    %v867 = vld [vmem:[#allocation7 + $0x410] sm:$0xff]
    %v868 = vld [vmem:[#allocation7 + $0x418] sm:$0xff]
    %v869 = vld [vmem:[#allocation7 + $0x420] sm:$0xff]
    %v870 = vld [vmem:[#allocation7 + $0x428] sm:$0xff]
    %v871 = vld [vmem:[#allocation7 + $0x430] sm:$0xff]
    %v872 = vld [vmem:[#allocation7 + $0x438] sm:$0xff]
    %v873 = vld [vmem:[#allocation7 + $0x440] sm:$0xff]
    %v874 = vld [vmem:[#allocation7 + $0x448] sm:$0xff]
    %v875 = vld [vmem:[#allocation7 + $0x450] sm:$0xff]
    %v876 = vld [vmem:[#allocation7 + $0x458] sm:$0xff]
    %v877 = vld [vmem:[#allocation7 + $0x460] sm:$0xff]
    %v878 = vld [vmem:[#allocation7 + $0x468] sm:$0xff]
    %v879 = vld [vmem:[#allocation7 + $0x470] sm:$0xff]
    %v880 = vld [vmem:[#allocation7 + $0x478] sm:$0xff]
    %v881 = vld [vmem:[#allocation7 + $0x480] sm:$0xff]
    %v882 = vld [vmem:[#allocation7 + $0x488] sm:$0xff]
    %v883 = vld [vmem:[#allocation7 + $0x490] sm:$0xff]
    %v884 = vld [vmem:[#allocation7 + $0x498] sm:$0xff]
    %v885 = vld [vmem:[#allocation7 + $0x4a0] sm:$0xff]
    %v886 = vld [vmem:[#allocation7 + $0x4a8] sm:$0xff]
    %v887 = vld [vmem:[#allocation7 + $0x4b0] sm:$0xff]
    %v888 = vld [vmem:[#allocation7 + $0x4b8] sm:$0xff]
    %v889 = vld [vmem:[#allocation7 + $0x4c0] sm:$0xff]
    %v890 = vld [vmem:[#allocation7 + $0x4c8] sm:$0xff]
    %v891 = vld [vmem:[#allocation7 + $0x4d0] sm:$0xff]
    %v892 = vld [vmem:[#allocation7 + $0x4d8] sm:$0xff]
    %v893 = vld [vmem:[#allocation7 + $0x4e0] sm:$0xff]
    %v894 = vld [vmem:[#allocation7 + $0x4e8] sm:$0xff]
    %v895 = vld [vmem:[#allocation7 + $0x4f0] sm:$0xff]
    %v896 = vld [vmem:[#allocation7 + $0x4f8] sm:$0xff]
    %v897 = vld [vmem:[#allocation7 + $0x500] sm:$0xff]
    %v898 = vld [vmem:[#allocation7 + $0x508] sm:$0xff]
    %v899 = vld [vmem:[#allocation7 + $0x510] sm:$0xff]
    %v900 = vld [vmem:[#allocation7 + $0x518] sm:$0xff]
    %v901 = vld [vmem:[#allocation7 + $0x520] sm:$0xff]
    %v902 = vld [vmem:[#allocation7 + $0x528] sm:$0xff]
    %v903 = vld [vmem:[#allocation7 + $0x530] sm:$0xff]
    %v904 = vld [vmem:[#allocation7 + $0x538] sm:$0xff]
    %v905 = vld [vmem:[#allocation7 + $0x540] sm:$0xff]
    %v906 = vld [vmem:[#allocation7 + $0x548] sm:$0xff]
    %v907 = vld [vmem:[#allocation7 + $0x550] sm:$0xff]
    %v908 = vld [vmem:[#allocation7 + $0x558] sm:$0xff]
    %v909 = vld [vmem:[#allocation7 + $0x560] sm:$0xff]
    %v910 = vld [vmem:[#allocation7 + $0x568] sm:$0xff]
    %v911 = vld [vmem:[#allocation7 + $0x570] sm:$0xff]
    %v912 = vld [vmem:[#allocation7 + $0x578] sm:$0xff]
    %v913 = vld [vmem:[#allocation7 + $0x580] sm:$0xff]
    %v914 = vld [vmem:[#allocation7 + $0x588] sm:$0xff]
    %v915 = vld [vmem:[#allocation7 + $0x590] sm:$0xff]
    %v916 = vld [vmem:[#allocation7 + $0x598] sm:$0xff]
    %v917 = vld [vmem:[#allocation7 + $0x5a0] sm:$0xff]
    %v918 = vld [vmem:[#allocation7 + $0x5a8] sm:$0xff]
    %v919 = vld [vmem:[#allocation7 + $0x5b0] sm:$0xff]
    %v920 = vld [vmem:[#allocation7 + $0x5b8] sm:$0xff]
    %v921 = vld [vmem:[#allocation7 + $0x5c0] sm:$0xff]
    %v922 = vld [vmem:[#allocation7 + $0x5c8] sm:$0xff]
    %v923 = vld [vmem:[#allocation7 + $0x5d0] sm:$0xff]
    %v924 = vld [vmem:[#allocation7 + $0x5d8] sm:$0xff]
    %v925 = vld [vmem:[#allocation7 + $0x5e0] sm:$0xff]
    %v926 = vld [vmem:[#allocation7 + $0x5e8] sm:$0xff]
    %v927 = vld [vmem:[#allocation7 + $0x5f0] sm:$0xff]
    %v928 = vld [vmem:[#allocation7 + $0x5f8] sm:$0xff]
    %v929 = vld [vmem:[#allocation7 + $0x600] sm:$0xff]
    %v930 = vld [vmem:[#allocation7 + $0x608] sm:$0xff]
    %v931 = vld [vmem:[#allocation7 + $0x610] sm:$0xff]
    %v932 = vld [vmem:[#allocation7 + $0x618] sm:$0xff]
    %v933 = vld [vmem:[#allocation7 + $0x620] sm:$0xff]
    %v934 = vld [vmem:[#allocation7 + $0x628] sm:$0xff]
    %v935 = vld [vmem:[#allocation7 + $0x630] sm:$0xff]
    %v936 = vld [vmem:[#allocation7 + $0x638] sm:$0xff]
    %v937 = vld [vmem:[#allocation7 + $0x640] sm:$0xff]
    %v938 = vld [vmem:[#allocation7 + $0x648] sm:$0xff]
    %v939 = vld [vmem:[#allocation7 + $0x650] sm:$0xff]
    %v940 = vld [vmem:[#allocation7 + $0x658] sm:$0xff]
    %v941 = vld [vmem:[#allocation7 + $0x660] sm:$0xff]
    %v942 = vld [vmem:[#allocation7 + $0x668] sm:$0xff]
    %v943 = vld [vmem:[#allocation7 + $0x670] sm:$0xff]
    %v944 = vld [vmem:[#allocation7 + $0x678] sm:$0xff]
    %v945 = vld [vmem:[#allocation7 + $0x680] sm:$0xff]
    %v946 = vld [vmem:[#allocation7 + $0x688] sm:$0xff]
    %v947 = vld [vmem:[#allocation7 + $0x690] sm:$0xff]
    %v948 = vld [vmem:[#allocation7 + $0x698] sm:$0xff]
    %v949 = vld [vmem:[#allocation7 + $0x6a0] sm:$0xff]
    %v950 = vld [vmem:[#allocation7 + $0x6a8] sm:$0xff]
    %v951 = vld [vmem:[#allocation7 + $0x6b0] sm:$0xff]
    %v952 = vld [vmem:[#allocation7 + $0x6b8] sm:$0xff]
    %v953 = vld [vmem:[#allocation7 + $0x6c0] sm:$0xff]
    %v954 = vld [vmem:[#allocation7 + $0x6c8] sm:$0xff]
    %v955 = vld [vmem:[#allocation7 + $0x6d0] sm:$0xff]
    %v956 = vld [vmem:[#allocation7 + $0x6d8] sm:$0xff]
    %v957 = vld [vmem:[#allocation7 + $0x6e0] sm:$0xff]
    %v958 = vld [vmem:[#allocation7 + $0x6e8] sm:$0xff]
    %v959 = vld [vmem:[#allocation7 + $0x6f0] sm:$0xff]
    %v960 = vld [vmem:[#allocation7 + $0x6f8] sm:$0xff]
    %v961 = vld [vmem:[#allocation7 + $0x700] sm:$0xff]
    %v962 = vld [vmem:[#allocation7 + $0x708] sm:$0xff]
    %v963 = vld [vmem:[#allocation7 + $0x710] sm:$0xff]
    %v964 = vld [vmem:[#allocation7 + $0x718] sm:$0xff]
    %v965 = vld [vmem:[#allocation7 + $0x720] sm:$0xff]
    %v966 = vld [vmem:[#allocation7 + $0x728] sm:$0xff]
    %v967 = vld [vmem:[#allocation7 + $0x730] sm:$0xff]
    %v968 = vld [vmem:[#allocation7 + $0x738] sm:$0xff]
    %v969 = vld [vmem:[#allocation7 + $0x740] sm:$0xff]
    %v970 = vld [vmem:[#allocation7 + $0x748] sm:$0xff]
    %v971 = vld [vmem:[#allocation7 + $0x750] sm:$0xff]
    %v972 = vld [vmem:[#allocation7 + $0x758] sm:$0xff]
    %v973 = vld [vmem:[#allocation7 + $0x760] sm:$0xff]
    %v974 = vld [vmem:[#allocation7 + $0x768] sm:$0xff]
    %v975 = vld [vmem:[#allocation7 + $0x770] sm:$0xff]
    %v976 = vld [vmem:[#allocation7 + $0x778] sm:$0xff]
    %v977 = vld [vmem:[#allocation7 + $0x780] sm:$0xff]
    %v978 = vld [vmem:[#allocation7 + $0x788] sm:$0xff]
    %v979 = vld [vmem:[#allocation7 + $0x790] sm:$0xff]
    %v980 = vld [vmem:[#allocation7 + $0x798] sm:$0xff]
    %v981 = vld [vmem:[#allocation7 + $0x7a0] sm:$0xff]
    %v982 = vld [vmem:[#allocation7 + $0x7a8] sm:$0xff]
    %v983 = vld [vmem:[#allocation7 + $0x7b0] sm:$0xff]
    %v984 = vld [vmem:[#allocation7 + $0x7b8] sm:$0xff]
    %v985 = vld [vmem:[#allocation7 + $0x7c0] sm:$0xff]
    %v986 = vld [vmem:[#allocation7 + $0x7c8] sm:$0xff]
    %v987 = vld [vmem:[#allocation7 + $0x7d0] sm:$0xff]
    %v988 = vld [vmem:[#allocation7 + $0x7d8] sm:$0xff]
    %v989 = vld [vmem:[#allocation7 + $0x7e0] sm:$0xff]
    %v990 = vld [vmem:[#allocation7 + $0x7e8] sm:$0xff]
    %v991 = vld [vmem:[#allocation7 + $0x7f0] sm:$0xff]
    %v992 = vld [vmem:[#allocation7 + $0x7f8] sm:$0xff]
    %v993 = vld [vmem:[#allocation7 + $0x800] sm:$0xff]
    %v994 = vld [vmem:[#allocation7 + $0x808] sm:$0xff]
    %v995 = vld [vmem:[#allocation7 + $0x810] sm:$0xff]
    %v996 = vld [vmem:[#allocation7 + $0x818] sm:$0xff]
    %v997 = vld [vmem:[#allocation7 + $0x820] sm:$0xff]
    %v998 = vld [vmem:[#allocation7 + $0x828] sm:$0xff]
    %v999 = vld [vmem:[#allocation7 + $0x830] sm:$0xff]
    %v1000 = vld [vmem:[#allocation7 + $0x838] sm:$0xff]
    %v1001 = vld [vmem:[#allocation7 + $0x840] sm:$0xff]
    %v1002 = vld [vmem:[#allocation7 + $0x848] sm:$0xff]
    %v1003 = vld [vmem:[#allocation7 + $0x850] sm:$0xff]
    %v1004 = vld [vmem:[#allocation7 + $0x858] sm:$0xff]
    %v1005 = vld [vmem:[#allocation7 + $0x860] sm:$0xff]
    %v1006 = vld [vmem:[#allocation7 + $0x868] sm:$0xff]
    %v1007 = vld [vmem:[#allocation7 + $0x870] sm:$0xff]
    %v1008 = vld [vmem:[#allocation7 + $0x878] sm:$0xff]
    %v1009 = vld [vmem:[#allocation7 + $0x880] sm:$0xff]
    %v1010 = vld [vmem:[#allocation7 + $0x888] sm:$0xff]
    %v1011 = vld [vmem:[#allocation7 + $0x890] sm:$0xff]
    %v1012 = vld [vmem:[#allocation7 + $0x898] sm:$0xff]
    %v1013 = vld [vmem:[#allocation7 + $0x8a0] sm:$0xff]
    %v1014 = vld [vmem:[#allocation7 + $0x8a8] sm:$0xff]
    %v1015 = vld [vmem:[#allocation7 + $0x8b0] sm:$0xff]
    %v1016 = vld [vmem:[#allocation7 + $0x8b8] sm:$0xff]
    %v1017 = vld [vmem:[#allocation7 + $0x8c0] sm:$0xff]
    %v1018 = vld [vmem:[#allocation7 + $0x8c8] sm:$0xff]
    %v1019 = vld [vmem:[#allocation7 + $0x8d0] sm:$0xff]
    %v1020 = vld [vmem:[#allocation7 + $0x8d8] sm:$0xff]
    %v1021 = vld [vmem:[#allocation7 + $0x8e0] sm:$0xff]
    %v1022 = vld [vmem:[#allocation7 + $0x8e8] sm:$0xff]
    %v1023 = vld [vmem:[#allocation7 + $0x8f0] sm:$0xff]
    %v1024 = vld [vmem:[#allocation7 + $0x8f8] sm:$0xff]
    %v1025 = vld [vmem:[#allocation8] sm:$0x3f]
    %v1027 = vperm.slane %v1025, 0
    %v1028 = vperm.slane %v1025, 1
    %v1029 = vperm.slane %v1025, 2
    %v1030 = vperm.slane %v1025, 3
    %v1031 = vperm.slane %v1025, 4
    %v1032 = vperm.slane %v1025, 5
    %v1087 = vunpack.c.l.b16 %v689
    %v1088 = vunpack.c.l.b16 %v690
    %v1089 = vunpack.c.l.b16 %v691
    %v1090 = vunpack.c.l.b16 %v692
    %v1091 = vunpack.c.l.b16 %v693
    %v1092 = vunpack.c.l.b16 %v694
    %v1093 = vunpack.c.l.b16 %v695
    %v1094 = vunpack.c.l.b16 %v696
    %v1095 = vunpack.c.l.b16 %v697
    %v1096 = vunpack.c.l.b16 %v698
    %v1097 = vunpack.c.l.b16 %v699
    %v1098 = vunpack.c.l.b16 %v700
    %v1099 = vunpack.c.l.b16 %v701
    %v1100 = vunpack.c.l.b16 %v702
    %v1101 = vunpack.c.l.b16 %v703
    %v1102 = vunpack.c.l.b16 %v704
    %v1103 = vunpack.c.l.b16 %v705
    %v1104 = vunpack.c.l.b16 %v706
    %v1105 = vunpack.c.l.b16 %v707
    %v1106 = vunpack.c.l.b16 %v708
    %v1107 = vunpack.c.l.b16 %v709
    %v1108 = vunpack.c.l.b16 %v710
    %v1109 = vunpack.c.l.b16 %v711
    %v1110 = vunpack.c.l.b16 %v712
    %v1111 = vunpack.c.l.b16 %v713
    %v1112 = vunpack.c.l.b16 %v714
    %v1113 = vunpack.c.l.b16 %v715
    %v1114 = vunpack.c.l.b16 %v716
    %v1115 = vunpack.c.l.b16 %v717
    %v1116 = vunpack.c.l.b16 %v718
    %v1117 = vunpack.c.l.b16 %v719
    %v1118 = vunpack.c.l.b16 %v720
    %v1119 = vunpack.c.l.b16 %v721
    %v1120 = vunpack.c.l.b16 %v722
    %v1121 = vunpack.c.l.b16 %v723
    %v1122 = vunpack.c.l.b16 %v724
    %v1123 = vunpack.c.l.b16 %v725
    %v1124 = vunpack.c.l.b16 %v726
    %v1125 = vunpack.c.l.b16 %v727
    %v1126 = vunpack.c.l.b16 %v728
    %v1127 = vunpack.c.l.b16 %v729
    %v1128 = vunpack.c.l.b16 %v730
    %v1129 = vunpack.c.l.b16 %v731
    %v1130 = vunpack.c.l.b16 %v732
    %v1131 = vunpack.c.l.b16 %v733
    %v1132 = vunpack.c.l.b16 %v734
    %v1133 = vunpack.c.l.b16 %v735
    %v1134 = vunpack.c.l.b16 %v736
    %v1135 = vrot.slane %v1093, 7
    %vm1136 = vcmask 1041409
    %v1137 = vsel %vm1136, %v1135, %v1087
    %v1138 = vrot.slane %v1099, 6
    %vm1139 = vcmask 1042434
    %v1140 = vsel %vm1139, %v1138, %v1137
    %v1141 = vrot.slane %v1105, 5
    %vm1142 = vcmask 1043459
    %v1143 = vsel %vm1142, %v1141, %v1140
    %v1144 = vrot.slane %v1111, 4
    %vm1145 = vcmask 1044484
    %v1146 = vsel %vm1145, %v1144, %v1143
    %v1147 = vrot.slane %v1117, 3
    %vm1148 = vcmask 1045509
    %v1149 = vsel %vm1148, %v1147, %v1146
    %v1150 = vrot.slane %v1123, 2
    %vm1151 = vcmask 1046534
    %v1152 = vsel %vm1151, %v1150, %v1149
    %v1153 = vrot.slane %v1129, 1
    %vm1154 = vcmask 1047559
    %v1155 = vsel %vm1154, %v1153, %v1152
    %v1156 = vrot.slane %v1094, 7
    %v1157 = vsel %vm1136, %v1156, %v1088
    %v1158 = vrot.slane %v1100, 6
    %v1159 = vsel %vm1139, %v1158, %v1157
    %v1160 = vrot.slane %v1106, 5
    %v1161 = vsel %vm1142, %v1160, %v1159
    %v1162 = vrot.slane %v1112, 4
    %v1163 = vsel %vm1145, %v1162, %v1161
    %v1164 = vrot.slane %v1118, 3
    %v1165 = vsel %vm1148, %v1164, %v1163
    %v1166 = vrot.slane %v1124, 2
    %v1167 = vsel %vm1151, %v1166, %v1165
    %v1168 = vrot.slane %v1130, 1
    %v1169 = vsel %vm1154, %v1168, %v1167
    %v1170 = vrot.slane %v1095, 7
    %v1171 = vsel %vm1136, %v1170, %v1089
    %v1172 = vrot.slane %v1101, 6
    %v1173 = vsel %vm1139, %v1172, %v1171
    %v1174 = vrot.slane %v1107, 5
    %v1175 = vsel %vm1142, %v1174, %v1173
    %v1176 = vrot.slane %v1113, 4
    %v1177 = vsel %vm1145, %v1176, %v1175
    %v1178 = vrot.slane %v1119, 3
    %v1179 = vsel %vm1148, %v1178, %v1177
    %v1180 = vrot.slane %v1125, 2
    %v1181 = vsel %vm1151, %v1180, %v1179
    %v1182 = vrot.slane %v1131, 1
    %v1183 = vsel %vm1154, %v1182, %v1181
    %v1184 = vrot.slane %v1096, 7
    %v1185 = vsel %vm1136, %v1184, %v1090
    %v1186 = vrot.slane %v1102, 6
    %v1187 = vsel %vm1139, %v1186, %v1185
    %v1188 = vrot.slane %v1108, 5
    %v1189 = vsel %vm1142, %v1188, %v1187
    %v1190 = vrot.slane %v1114, 4
    %v1191 = vsel %vm1145, %v1190, %v1189
    %v1192 = vrot.slane %v1120, 3
    %v1193 = vsel %vm1148, %v1192, %v1191
    %v1194 = vrot.slane %v1126, 2
    %v1195 = vsel %vm1151, %v1194, %v1193
    %v1196 = vrot.slane %v1132, 1
    %v1197 = vsel %vm1154, %v1196, %v1195
    %v1198 = vrot.slane %v1097, 7
    %v1199 = vsel %vm1136, %v1198, %v1091
    %v1200 = vrot.slane %v1103, 6
    %v1201 = vsel %vm1139, %v1200, %v1199
    %v1202 = vrot.slane %v1109, 5
    %v1203 = vsel %vm1142, %v1202, %v1201
    %v1204 = vrot.slane %v1115, 4
    %v1205 = vsel %vm1145, %v1204, %v1203
    %v1206 = vrot.slane %v1121, 3
    %v1207 = vsel %vm1148, %v1206, %v1205
    %v1208 = vrot.slane %v1127, 2
    %v1209 = vsel %vm1151, %v1208, %v1207
    %v1210 = vrot.slane %v1133, 1
    %v1211 = vsel %vm1154, %v1210, %v1209
    %v1212 = vrot.slane %v1098, 7
    %v1213 = vsel %vm1136, %v1212, %v1092
    %v1214 = vrot.slane %v1104, 6
    %v1215 = vsel %vm1139, %v1214, %v1213
    %v1216 = vrot.slane %v1110, 5
    %v1217 = vsel %vm1142, %v1216, %v1215
    %v1218 = vrot.slane %v1116, 4
    %v1219 = vsel %vm1145, %v1218, %v1217
    %v1220 = vrot.slane %v1122, 3
    %v1221 = vsel %vm1148, %v1220, %v1219
    %v1222 = vrot.slane %v1128, 2
    %v1223 = vsel %vm1151, %v1222, %v1221
    %v1224 = vrot.slane %v1134, 1
    %v1225 = vsel %vm1154, %v1224, %v1223
    %v1226 = vpack.c.b16 %v1155, %v1155
    %v1227 = vpack.c.b16 %v1169, %v1169
    %v1228 = vpack.c.b16 %v1183, %v1183
    %v1229 = vpack.c.b16 %v1197, %v1197
    %v1230 = vpack.c.b16 %v1211, %v1211
    %v1231 = vpack.c.b16 %v1225, %v1225
    %v1526 = vunpack.c.l.b16 %v737
    %v1527 = vunpack.c.h.b16 %v737
    %v1528 = vunpack.c.l.b16 %v738
    %v1529 = vunpack.c.h.b16 %v738
    %v1530 = vunpack.c.l.b16 %v739
    %v1531 = vunpack.c.h.b16 %v739
    %v1532 = vunpack.c.l.b16 %v740
    %v1533 = vunpack.c.h.b16 %v740
    %v1534 = vunpack.c.l.b16 %v741
    %v1535 = vunpack.c.h.b16 %v741
    %v1536 = vunpack.c.l.b16 %v742
    %v1537 = vunpack.c.h.b16 %v742
    %v1538 = vunpack.c.l.b16 %v743
    %v1539 = vunpack.c.h.b16 %v743
    %v1540 = vunpack.c.l.b16 %v744
    %v1541 = vunpack.c.h.b16 %v744
    %v1542 = vunpack.c.l.b16 %v745
    %v1543 = vunpack.c.h.b16 %v745
    %v1544 = vunpack.c.l.b16 %v746
    %v1545 = vunpack.c.h.b16 %v746
    %v1546 = vunpack.c.l.b16 %v747
    %v1547 = vunpack.c.h.b16 %v747
    %v1548 = vunpack.c.l.b16 %v748
    %v1549 = vunpack.c.h.b16 %v748
    %v1550 = vunpack.c.l.b16 %v749
    %v1551 = vunpack.c.h.b16 %v749
    %v1552 = vunpack.c.l.b16 %v750
    %v1553 = vunpack.c.h.b16 %v750
    %v1554 = vunpack.c.l.b16 %v751
    %v1555 = vunpack.c.h.b16 %v751
    %v1556 = vunpack.c.l.b16 %v752
    %v1557 = vunpack.c.h.b16 %v752
    %v1558 = vunpack.c.l.b16 %v753
    %v1559 = vunpack.c.h.b16 %v753
    %v1560 = vunpack.c.l.b16 %v754
    %v1561 = vunpack.c.h.b16 %v754
    %v1562 = vunpack.c.l.b16 %v755
    %v1563 = vunpack.c.h.b16 %v755
    %v1564 = vunpack.c.l.b16 %v756
    %v1565 = vunpack.c.h.b16 %v756
    %v1566 = vunpack.c.l.b16 %v757
    %v1567 = vunpack.c.h.b16 %v757
    %v1568 = vunpack.c.l.b16 %v758
    %v1569 = vunpack.c.h.b16 %v758
    %v1570 = vunpack.c.l.b16 %v759
    %v1571 = vunpack.c.h.b16 %v759
    %v1572 = vunpack.c.l.b16 %v760
    %v1573 = vunpack.c.h.b16 %v760
    %v1574 = vunpack.c.l.b16 %v761
    %v1575 = vunpack.c.h.b16 %v761
    %v1576 = vunpack.c.l.b16 %v762
    %v1577 = vunpack.c.h.b16 %v762
    %v1578 = vunpack.c.l.b16 %v763
    %v1579 = vunpack.c.h.b16 %v763
    %v1580 = vunpack.c.l.b16 %v764
    %v1581 = vunpack.c.h.b16 %v764
    %v1582 = vunpack.c.l.b16 %v765
    %v1583 = vunpack.c.h.b16 %v765
    %v1584 = vunpack.c.l.b16 %v766
    %v1585 = vunpack.c.h.b16 %v766
    %v1586 = vunpack.c.l.b16 %v767
    %v1587 = vunpack.c.h.b16 %v767
    %v1588 = vunpack.c.l.b16 %v768
    %v1589 = vunpack.c.h.b16 %v768
    %v1590 = vunpack.c.l.b16 %v769
    %v1591 = vunpack.c.h.b16 %v769
    %v1592 = vunpack.c.l.b16 %v770
    %v1593 = vunpack.c.h.b16 %v770
    %v1594 = vunpack.c.l.b16 %v771
    %v1595 = vunpack.c.h.b16 %v771
    %v1596 = vunpack.c.l.b16 %v772
    %v1597 = vunpack.c.h.b16 %v772
    %v1598 = vunpack.c.l.b16 %v773
    %v1599 = vunpack.c.h.b16 %v773
    %v1600 = vunpack.c.l.b16 %v774
    %v1601 = vunpack.c.h.b16 %v774
    %v1602 = vunpack.c.l.b16 %v775
    %v1603 = vunpack.c.h.b16 %v775
    %v1604 = vunpack.c.l.b16 %v776
    %v1605 = vunpack.c.h.b16 %v776
    %v1606 = vunpack.c.l.b16 %v777
    %v1607 = vunpack.c.h.b16 %v777
    %v1608 = vunpack.c.l.b16 %v778
    %v1609 = vunpack.c.h.b16 %v778
    %v1610 = vunpack.c.l.b16 %v779
    %v1611 = vunpack.c.h.b16 %v779
    %v1612 = vunpack.c.l.b16 %v780
    %v1613 = vunpack.c.h.b16 %v780
    %v1614 = vunpack.c.l.b16 %v781
    %v1615 = vunpack.c.h.b16 %v781
    %v1616 = vunpack.c.l.b16 %v782
    %v1617 = vunpack.c.h.b16 %v782
    %v1618 = vunpack.c.l.b16 %v783
    %v1619 = vunpack.c.h.b16 %v783
    %v1620 = vunpack.c.l.b16 %v784
    %v1621 = vunpack.c.h.b16 %v784
    %v1622 = vunpack.c.l.b16 %v785
    %v1623 = vunpack.c.h.b16 %v785
    %v1624 = vunpack.c.l.b16 %v786
    %v1625 = vunpack.c.h.b16 %v786
    %v1626 = vunpack.c.l.b16 %v787
    %v1627 = vunpack.c.h.b16 %v787
    %v1628 = vunpack.c.l.b16 %v788
    %v1629 = vunpack.c.h.b16 %v788
    %v1630 = vunpack.c.l.b16 %v789
    %v1631 = vunpack.c.h.b16 %v789
    %v1632 = vunpack.c.l.b16 %v790
    %v1633 = vunpack.c.h.b16 %v790
    %v1634 = vunpack.c.l.b16 %v791
    %v1635 = vunpack.c.h.b16 %v791
    %v1636 = vunpack.c.l.b16 %v792
    %v1637 = vunpack.c.h.b16 %v792
    %v1638 = vunpack.c.l.b16 %v793
    %v1639 = vunpack.c.h.b16 %v793
    %v1640 = vunpack.c.l.b16 %v794
    %v1641 = vunpack.c.h.b16 %v794
    %v1642 = vunpack.c.l.b16 %v795
    %v1643 = vunpack.c.h.b16 %v795
    %v1644 = vunpack.c.l.b16 %v796
    %v1645 = vunpack.c.h.b16 %v796
    %v1646 = vunpack.c.l.b16 %v797
    %v1647 = vunpack.c.h.b16 %v797
    %v1648 = vunpack.c.l.b16 %v798
    %v1649 = vunpack.c.h.b16 %v798
    %v1650 = vunpack.c.l.b16 %v799
    %v1651 = vunpack.c.h.b16 %v799
    %v1652 = vunpack.c.l.b16 %v800
    %v1653 = vunpack.c.h.b16 %v800
    %v1654 = vunpack.c.l.b16 %v801
    %v1655 = vunpack.c.h.b16 %v801
    %v1656 = vunpack.c.l.b16 %v802
    %v1657 = vunpack.c.h.b16 %v802
    %v1658 = vunpack.c.l.b16 %v803
    %v1659 = vunpack.c.h.b16 %v803
    %v1660 = vunpack.c.l.b16 %v804
    %v1661 = vunpack.c.h.b16 %v804
    %v1662 = vunpack.c.l.b16 %v805
    %v1663 = vunpack.c.h.b16 %v805
    %v1664 = vunpack.c.l.b16 %v806
    %v1665 = vunpack.c.h.b16 %v806
    %v1666 = vunpack.c.l.b16 %v807
    %v1667 = vunpack.c.h.b16 %v807
    %v1668 = vunpack.c.l.b16 %v808
    %v1669 = vunpack.c.h.b16 %v808
    %v1670 = vunpack.c.l.b16 %v809
    %v1671 = vunpack.c.h.b16 %v809
    %v1672 = vunpack.c.l.b16 %v810
    %v1673 = vunpack.c.h.b16 %v810
    %v1674 = vunpack.c.l.b16 %v811
    %v1675 = vunpack.c.h.b16 %v811
    %v1676 = vunpack.c.l.b16 %v812
    %v1677 = vunpack.c.h.b16 %v812
    %v1678 = vunpack.c.l.b16 %v813
    %v1679 = vunpack.c.h.b16 %v813
    %v1680 = vunpack.c.l.b16 %v814
    %v1681 = vunpack.c.h.b16 %v814
    %v1682 = vunpack.c.l.b16 %v815
    %v1683 = vunpack.c.h.b16 %v815
    %v1684 = vunpack.c.l.b16 %v816
    %v1685 = vunpack.c.h.b16 %v816
    %v1686 = vunpack.c.l.b16 %v817
    %v1687 = vunpack.c.h.b16 %v817
    %v1688 = vunpack.c.l.b16 %v818
    %v1689 = vunpack.c.h.b16 %v818
    %v1690 = vunpack.c.l.b16 %v819
    %v1691 = vunpack.c.h.b16 %v819
    %v1692 = vunpack.c.l.b16 %v820
    %v1693 = vunpack.c.h.b16 %v820
    %v1694 = vunpack.c.l.b16 %v821
    %v1695 = vunpack.c.h.b16 %v821
    %v1696 = vunpack.c.l.b16 %v822
    %v1697 = vunpack.c.h.b16 %v822
    %v1698 = vunpack.c.l.b16 %v823
    %v1699 = vunpack.c.h.b16 %v823
    %v1700 = vunpack.c.l.b16 %v824
    %v1701 = vunpack.c.h.b16 %v824
    %v1702 = vunpack.c.l.b16 %v825
    %v1703 = vunpack.c.h.b16 %v825
    %v1704 = vunpack.c.l.b16 %v826
    %v1705 = vunpack.c.h.b16 %v826
    %v1706 = vunpack.c.l.b16 %v827
    %v1707 = vunpack.c.h.b16 %v827
    %v1708 = vunpack.c.l.b16 %v828
    %v1709 = vunpack.c.h.b16 %v828
    %v1710 = vunpack.c.l.b16 %v829
    %v1711 = vunpack.c.h.b16 %v829
    %v1712 = vunpack.c.l.b16 %v830
    %v1713 = vunpack.c.h.b16 %v830
    %v1714 = vunpack.c.l.b16 %v831
    %v1715 = vunpack.c.h.b16 %v831
    %v1716 = vunpack.c.l.b16 %v832
    %v1717 = vunpack.c.h.b16 %v832
    %v1718 = vunpack.c.l.b16 %v833
    %v1719 = vunpack.c.h.b16 %v833
    %v1720 = vunpack.c.l.b16 %v834
    %v1721 = vunpack.c.h.b16 %v834
    %v1722 = vunpack.c.l.b16 %v835
    %v1723 = vunpack.c.h.b16 %v835
    %v1724 = vunpack.c.l.b16 %v836
    %v1725 = vunpack.c.h.b16 %v836
    %v1726 = vunpack.c.l.b16 %v837
    %v1727 = vunpack.c.h.b16 %v837
    %v1728 = vunpack.c.l.b16 %v838
    %v1729 = vunpack.c.h.b16 %v838
    %v1730 = vunpack.c.l.b16 %v839
    %v1731 = vunpack.c.h.b16 %v839
    %v1732 = vunpack.c.l.b16 %v840
    %v1733 = vunpack.c.h.b16 %v840
    %v1734 = vunpack.c.l.b16 %v841
    %v1735 = vunpack.c.h.b16 %v841
    %v1736 = vunpack.c.l.b16 %v842
    %v1737 = vunpack.c.h.b16 %v842
    %v1738 = vunpack.c.l.b16 %v843
    %v1739 = vunpack.c.h.b16 %v843
    %v1740 = vunpack.c.l.b16 %v844
    %v1741 = vunpack.c.h.b16 %v844
    %v1742 = vunpack.c.l.b16 %v845
    %v1743 = vunpack.c.h.b16 %v845
    %v1744 = vunpack.c.l.b16 %v846
    %v1745 = vunpack.c.h.b16 %v846
    %v1746 = vunpack.c.l.b16 %v847
    %v1747 = vunpack.c.h.b16 %v847
    %v1748 = vunpack.c.l.b16 %v848
    %v1749 = vunpack.c.h.b16 %v848
    %v1750 = vunpack.c.l.b16 %v849
    %v1751 = vunpack.c.h.b16 %v849
    %v1752 = vunpack.c.l.b16 %v850
    %v1753 = vunpack.c.h.b16 %v850
    %v1754 = vunpack.c.l.b16 %v851
    %v1755 = vunpack.c.h.b16 %v851
    %v1756 = vunpack.c.l.b16 %v852
    %v1757 = vunpack.c.h.b16 %v852
    %v1758 = vunpack.c.l.b16 %v853
    %v1759 = vunpack.c.h.b16 %v853
    %v1760 = vunpack.c.l.b16 %v854
    %v1761 = vunpack.c.h.b16 %v854
    %v1762 = vunpack.c.l.b16 %v855
    %v1763 = vunpack.c.h.b16 %v855
    %v1764 = vunpack.c.l.b16 %v856
    %v1765 = vunpack.c.h.b16 %v856
    %v1766 = vunpack.c.l.b16 %v857
    %v1767 = vunpack.c.h.b16 %v857
    %v1768 = vunpack.c.l.b16 %v858
    %v1769 = vunpack.c.h.b16 %v858
    %v1770 = vunpack.c.l.b16 %v859
    %v1771 = vunpack.c.h.b16 %v859
    %v1772 = vunpack.c.l.b16 %v860
    %v1773 = vunpack.c.h.b16 %v860
    %v1774 = vunpack.c.l.b16 %v861
    %v1775 = vunpack.c.h.b16 %v861
    %v1776 = vunpack.c.l.b16 %v862
    %v1777 = vunpack.c.h.b16 %v862
    %v1778 = vunpack.c.l.b16 %v863
    %v1779 = vunpack.c.h.b16 %v863
    %v1780 = vunpack.c.l.b16 %v864
    %v1781 = vunpack.c.h.b16 %v864
    %v1782 = vunpack.c.l.b16 %v865
    %v1783 = vunpack.c.h.b16 %v865
    %v1784 = vunpack.c.l.b16 %v866
    %v1785 = vunpack.c.h.b16 %v866
    %v1786 = vunpack.c.l.b16 %v867
    %v1787 = vunpack.c.h.b16 %v867
    %v1788 = vunpack.c.l.b16 %v868
    %v1789 = vunpack.c.h.b16 %v868
    %v1790 = vunpack.c.l.b16 %v869
    %v1791 = vunpack.c.h.b16 %v869
    %v1792 = vunpack.c.l.b16 %v870
    %v1793 = vunpack.c.h.b16 %v870
    %v1794 = vunpack.c.l.b16 %v871
    %v1795 = vunpack.c.h.b16 %v871
    %v1796 = vunpack.c.l.b16 %v872
    %v1797 = vunpack.c.h.b16 %v872
    %v1798 = vunpack.c.l.b16 %v873
    %v1799 = vunpack.c.h.b16 %v873
    %v1800 = vunpack.c.l.b16 %v874
    %v1801 = vunpack.c.h.b16 %v874
    %v1802 = vunpack.c.l.b16 %v875
    %v1803 = vunpack.c.h.b16 %v875
    %v1804 = vunpack.c.l.b16 %v876
    %v1805 = vunpack.c.h.b16 %v876
    %v1806 = vunpack.c.l.b16 %v877
    %v1807 = vunpack.c.h.b16 %v877
    %v1808 = vunpack.c.l.b16 %v878
    %v1809 = vunpack.c.h.b16 %v878
    %v1810 = vunpack.c.l.b16 %v879
    %v1811 = vunpack.c.h.b16 %v879
    %v1812 = vunpack.c.l.b16 %v880
    %v1813 = vunpack.c.h.b16 %v880
    %v1814 = vunpack.c.l.b16 %v881
    %v1815 = vunpack.c.h.b16 %v881
    %v1816 = vunpack.c.l.b16 %v882
    %v1817 = vunpack.c.h.b16 %v882
    %v1818 = vunpack.c.l.b16 %v883
    %v1819 = vunpack.c.h.b16 %v883
    %v1820 = vunpack.c.l.b16 %v884
    %v1821 = vunpack.c.h.b16 %v884
    %v1822 = vunpack.c.l.b16 %v885
    %v1823 = vunpack.c.h.b16 %v885
    %v1824 = vunpack.c.l.b16 %v886
    %v1825 = vunpack.c.h.b16 %v886
    %v1826 = vunpack.c.l.b16 %v887
    %v1827 = vunpack.c.h.b16 %v887
    %v1828 = vunpack.c.l.b16 %v888
    %v1829 = vunpack.c.h.b16 %v888
    %v1830 = vunpack.c.l.b16 %v889
    %v1831 = vunpack.c.h.b16 %v889
    %v1832 = vunpack.c.l.b16 %v890
    %v1833 = vunpack.c.h.b16 %v890
    %v1834 = vunpack.c.l.b16 %v891
    %v1835 = vunpack.c.h.b16 %v891
    %v1836 = vunpack.c.l.b16 %v892
    %v1837 = vunpack.c.h.b16 %v892
    %v1838 = vunpack.c.l.b16 %v893
    %v1839 = vunpack.c.h.b16 %v893
    %v1840 = vunpack.c.l.b16 %v894
    %v1841 = vunpack.c.h.b16 %v894
    %v1842 = vunpack.c.l.b16 %v895
    %v1843 = vunpack.c.h.b16 %v895
    %v1844 = vunpack.c.l.b16 %v896
    %v1845 = vunpack.c.h.b16 %v896
    %v1846 = vunpack.c.l.b16 %v897
    %v1847 = vunpack.c.h.b16 %v897
    %v1848 = vunpack.c.l.b16 %v898
    %v1849 = vunpack.c.h.b16 %v898
    %v1850 = vunpack.c.l.b16 %v899
    %v1851 = vunpack.c.h.b16 %v899
    %v1852 = vunpack.c.l.b16 %v900
    %v1853 = vunpack.c.h.b16 %v900
    %v1854 = vunpack.c.l.b16 %v901
    %v1855 = vunpack.c.h.b16 %v901
    %v1856 = vunpack.c.l.b16 %v902
    %v1857 = vunpack.c.h.b16 %v902
    %v1858 = vunpack.c.l.b16 %v903
    %v1859 = vunpack.c.h.b16 %v903
    %v1860 = vunpack.c.l.b16 %v904
    %v1861 = vunpack.c.h.b16 %v904
    %v1862 = vunpack.c.l.b16 %v905
    %v1863 = vunpack.c.h.b16 %v905
    %v1864 = vunpack.c.l.b16 %v906
    %v1865 = vunpack.c.h.b16 %v906
    %v1866 = vunpack.c.l.b16 %v907
    %v1867 = vunpack.c.h.b16 %v907
    %v1868 = vunpack.c.l.b16 %v908
    %v1869 = vunpack.c.h.b16 %v908
    %v1870 = vunpack.c.l.b16 %v909
    %v1871 = vunpack.c.h.b16 %v909
    %v1872 = vunpack.c.l.b16 %v910
    %v1873 = vunpack.c.h.b16 %v910
    %v1874 = vunpack.c.l.b16 %v911
    %v1875 = vunpack.c.h.b16 %v911
    %v1876 = vunpack.c.l.b16 %v912
    %v1877 = vunpack.c.h.b16 %v912
    %v1878 = vunpack.c.l.b16 %v913
    %v1879 = vunpack.c.h.b16 %v913
    %v1880 = vunpack.c.l.b16 %v914
    %v1881 = vunpack.c.h.b16 %v914
    %v1882 = vunpack.c.l.b16 %v915
    %v1883 = vunpack.c.h.b16 %v915
    %v1884 = vunpack.c.l.b16 %v916
    %v1885 = vunpack.c.h.b16 %v916
    %v1886 = vunpack.c.l.b16 %v917
    %v1887 = vunpack.c.h.b16 %v917
    %v1888 = vunpack.c.l.b16 %v918
    %v1889 = vunpack.c.h.b16 %v918
    %v1890 = vunpack.c.l.b16 %v919
    %v1891 = vunpack.c.h.b16 %v919
    %v1892 = vunpack.c.l.b16 %v920
    %v1893 = vunpack.c.h.b16 %v920
    %v1894 = vunpack.c.l.b16 %v921
    %v1895 = vunpack.c.h.b16 %v921
    %v1896 = vunpack.c.l.b16 %v922
    %v1897 = vunpack.c.h.b16 %v922
    %v1898 = vunpack.c.l.b16 %v923
    %v1899 = vunpack.c.h.b16 %v923
    %v1900 = vunpack.c.l.b16 %v924
    %v1901 = vunpack.c.h.b16 %v924
    %v1902 = vunpack.c.l.b16 %v925
    %v1903 = vunpack.c.h.b16 %v925
    %v1904 = vunpack.c.l.b16 %v926
    %v1905 = vunpack.c.h.b16 %v926
    %v1906 = vunpack.c.l.b16 %v927
    %v1907 = vunpack.c.h.b16 %v927
    %v1908 = vunpack.c.l.b16 %v928
    %v1909 = vunpack.c.h.b16 %v928
    %v1910 = vunpack.c.l.b16 %v929
    %v1911 = vunpack.c.h.b16 %v929
    %v1912 = vunpack.c.l.b16 %v930
    %v1913 = vunpack.c.h.b16 %v930
    %v1914 = vunpack.c.l.b16 %v931
    %v1915 = vunpack.c.h.b16 %v931
    %v1916 = vunpack.c.l.b16 %v932
    %v1917 = vunpack.c.h.b16 %v932
    %v1918 = vunpack.c.l.b16 %v933
    %v1919 = vunpack.c.h.b16 %v933
    %v1920 = vunpack.c.l.b16 %v934
    %v1921 = vunpack.c.h.b16 %v934
    %v1922 = vunpack.c.l.b16 %v935
    %v1923 = vunpack.c.h.b16 %v935
    %v1924 = vunpack.c.l.b16 %v936
    %v1925 = vunpack.c.h.b16 %v936
    %v1926 = vunpack.c.l.b16 %v937
    %v1927 = vunpack.c.h.b16 %v937
    %v1928 = vunpack.c.l.b16 %v938
    %v1929 = vunpack.c.h.b16 %v938
    %v1930 = vunpack.c.l.b16 %v939
    %v1931 = vunpack.c.h.b16 %v939
    %v1932 = vunpack.c.l.b16 %v940
    %v1933 = vunpack.c.h.b16 %v940
    %v1934 = vunpack.c.l.b16 %v941
    %v1935 = vunpack.c.h.b16 %v941
    %v1936 = vunpack.c.l.b16 %v942
    %v1937 = vunpack.c.h.b16 %v942
    %v1938 = vunpack.c.l.b16 %v943
    %v1939 = vunpack.c.h.b16 %v943
    %v1940 = vunpack.c.l.b16 %v944
    %v1941 = vunpack.c.h.b16 %v944
    %v1942 = vunpack.c.l.b16 %v945
    %v1943 = vunpack.c.h.b16 %v945
    %v1944 = vunpack.c.l.b16 %v946
    %v1945 = vunpack.c.h.b16 %v946
    %v1946 = vunpack.c.l.b16 %v947
    %v1947 = vunpack.c.h.b16 %v947
    %v1948 = vunpack.c.l.b16 %v948
    %v1949 = vunpack.c.h.b16 %v948
    %v1950 = vunpack.c.l.b16 %v949
    %v1951 = vunpack.c.h.b16 %v949
    %v1952 = vunpack.c.l.b16 %v950
    %v1953 = vunpack.c.h.b16 %v950
    %v1954 = vunpack.c.l.b16 %v951
    %v1955 = vunpack.c.h.b16 %v951
    %v1956 = vunpack.c.l.b16 %v952
    %v1957 = vunpack.c.h.b16 %v952
    %v1958 = vunpack.c.l.b16 %v953
    %v1959 = vunpack.c.h.b16 %v953
    %v1960 = vunpack.c.l.b16 %v954
    %v1961 = vunpack.c.h.b16 %v954
    %v1962 = vunpack.c.l.b16 %v955
    %v1963 = vunpack.c.h.b16 %v955
    %v1964 = vunpack.c.l.b16 %v956
    %v1965 = vunpack.c.h.b16 %v956
    %v1966 = vunpack.c.l.b16 %v957
    %v1967 = vunpack.c.h.b16 %v957
    %v1968 = vunpack.c.l.b16 %v958
    %v1969 = vunpack.c.h.b16 %v958
    %v1970 = vunpack.c.l.b16 %v959
    %v1971 = vunpack.c.h.b16 %v959
    %v1972 = vunpack.c.l.b16 %v960
    %v1973 = vunpack.c.h.b16 %v960
    %v1974 = vunpack.c.l.b16 %v961
    %v1975 = vunpack.c.h.b16 %v961
    %v1976 = vunpack.c.l.b16 %v962
    %v1977 = vunpack.c.h.b16 %v962
    %v1978 = vunpack.c.l.b16 %v963
    %v1979 = vunpack.c.h.b16 %v963
    %v1980 = vunpack.c.l.b16 %v964
    %v1981 = vunpack.c.h.b16 %v964
    %v1982 = vunpack.c.l.b16 %v965
    %v1983 = vunpack.c.h.b16 %v965
    %v1984 = vunpack.c.l.b16 %v966
    %v1985 = vunpack.c.h.b16 %v966
    %v1986 = vunpack.c.l.b16 %v967
    %v1987 = vunpack.c.h.b16 %v967
    %v1988 = vunpack.c.l.b16 %v968
    %v1989 = vunpack.c.h.b16 %v968
    %v1990 = vunpack.c.l.b16 %v969
    %v1991 = vunpack.c.h.b16 %v969
    %v1992 = vunpack.c.l.b16 %v970
    %v1993 = vunpack.c.h.b16 %v970
    %v1994 = vunpack.c.l.b16 %v971
    %v1995 = vunpack.c.h.b16 %v971
    %v1996 = vunpack.c.l.b16 %v972
    %v1997 = vunpack.c.h.b16 %v972
    %v1998 = vunpack.c.l.b16 %v973
    %v1999 = vunpack.c.h.b16 %v973
    %v2000 = vunpack.c.l.b16 %v974
    %v2001 = vunpack.c.h.b16 %v974
    %v2002 = vunpack.c.l.b16 %v975
    %v2003 = vunpack.c.h.b16 %v975
    %v2004 = vunpack.c.l.b16 %v976
    %v2005 = vunpack.c.h.b16 %v976
    %v2006 = vunpack.c.l.b16 %v977
    %v2007 = vunpack.c.h.b16 %v977
    %v2008 = vunpack.c.l.b16 %v978
    %v2009 = vunpack.c.h.b16 %v978
    %v2010 = vunpack.c.l.b16 %v979
    %v2011 = vunpack.c.h.b16 %v979
    %v2012 = vunpack.c.l.b16 %v980
    %v2013 = vunpack.c.h.b16 %v980
    %v2014 = vunpack.c.l.b16 %v981
    %v2015 = vunpack.c.h.b16 %v981
    %v2016 = vunpack.c.l.b16 %v982
    %v2017 = vunpack.c.h.b16 %v982
    %v2018 = vunpack.c.l.b16 %v983
    %v2019 = vunpack.c.h.b16 %v983
    %v2020 = vunpack.c.l.b16 %v984
    %v2021 = vunpack.c.h.b16 %v984
    %v2022 = vunpack.c.l.b16 %v985
    %v2023 = vunpack.c.h.b16 %v985
    %v2024 = vunpack.c.l.b16 %v986
    %v2025 = vunpack.c.h.b16 %v986
    %v2026 = vunpack.c.l.b16 %v987
    %v2027 = vunpack.c.h.b16 %v987
    %v2028 = vunpack.c.l.b16 %v988
    %v2029 = vunpack.c.h.b16 %v988
    %v2030 = vunpack.c.l.b16 %v989
    %v2031 = vunpack.c.h.b16 %v989
    %v2032 = vunpack.c.l.b16 %v990
    %v2033 = vunpack.c.h.b16 %v990
    %v2034 = vunpack.c.l.b16 %v991
    %v2035 = vunpack.c.h.b16 %v991
    %v2036 = vunpack.c.l.b16 %v992
    %v2037 = vunpack.c.h.b16 %v992
    %v2038 = vunpack.c.l.b16 %v993
    %v2039 = vunpack.c.h.b16 %v993
    %v2040 = vunpack.c.l.b16 %v994
    %v2041 = vunpack.c.h.b16 %v994
    %v2042 = vunpack.c.l.b16 %v995
    %v2043 = vunpack.c.h.b16 %v995
    %v2044 = vunpack.c.l.b16 %v996
    %v2045 = vunpack.c.h.b16 %v996
    %v2046 = vunpack.c.l.b16 %v997
    %v2047 = vunpack.c.h.b16 %v997
    %v2048 = vunpack.c.l.b16 %v998
    %v2049 = vunpack.c.h.b16 %v998
    %v2050 = vunpack.c.l.b16 %v999
    %v2051 = vunpack.c.h.b16 %v999
    %v2052 = vunpack.c.l.b16 %v1000
    %v2053 = vunpack.c.h.b16 %v1000
    %v2054 = vunpack.c.l.b16 %v1001
    %v2055 = vunpack.c.h.b16 %v1001
    %v2056 = vunpack.c.l.b16 %v1002
    %v2057 = vunpack.c.h.b16 %v1002
    %v2058 = vunpack.c.l.b16 %v1003
    %v2059 = vunpack.c.h.b16 %v1003
    %v2060 = vunpack.c.l.b16 %v1004
    %v2061 = vunpack.c.h.b16 %v1004
    %v2062 = vunpack.c.l.b16 %v1005
    %v2063 = vunpack.c.h.b16 %v1005
    %v2064 = vunpack.c.l.b16 %v1006
    %v2065 = vunpack.c.h.b16 %v1006
    %v2066 = vunpack.c.l.b16 %v1007
    %v2067 = vunpack.c.h.b16 %v1007
    %v2068 = vunpack.c.l.b16 %v1008
    %v2069 = vunpack.c.h.b16 %v1008
    %v2070 = vunpack.c.l.b16 %v1009
    %v2071 = vunpack.c.h.b16 %v1009
    %v2072 = vunpack.c.l.b16 %v1010
    %v2073 = vunpack.c.h.b16 %v1010
    %v2074 = vunpack.c.l.b16 %v1011
    %v2075 = vunpack.c.h.b16 %v1011
    %v2076 = vunpack.c.l.b16 %v1012
    %v2077 = vunpack.c.h.b16 %v1012
    %v2078 = vunpack.c.l.b16 %v1013
    %v2079 = vunpack.c.h.b16 %v1013
    %v2080 = vunpack.c.l.b16 %v1014
    %v2081 = vunpack.c.h.b16 %v1014
    %v2082 = vunpack.c.l.b16 %v1015
    %v2083 = vunpack.c.h.b16 %v1015
    %v2084 = vunpack.c.l.b16 %v1016
    %v2085 = vunpack.c.h.b16 %v1016
    %v2086 = vunpack.c.l.b16 %v1017
    %v2087 = vunpack.c.h.b16 %v1017
    %v2088 = vunpack.c.l.b16 %v1018
    %v2089 = vunpack.c.h.b16 %v1018
    %v2090 = vunpack.c.l.b16 %v1019
    %v2091 = vunpack.c.h.b16 %v1019
    %v2092 = vunpack.c.l.b16 %v1020
    %v2093 = vunpack.c.h.b16 %v1020
    %v2094 = vunpack.c.l.b16 %v1021
    %v2095 = vunpack.c.h.b16 %v1021
    %v2096 = vunpack.c.l.b16 %v1022
    %v2097 = vunpack.c.h.b16 %v1022
    %v2098 = vunpack.c.l.b16 %v1023
    %v2099 = vunpack.c.h.b16 %v1023
    %v2100 = vunpack.c.l.b16 %v1024
    %v2101 = vunpack.c.h.b16 %v1024
    %v2102 = vpack.c.b16 %v1532, %v1526
    %v2103 = vpack.c.b16 %v1533, %v1527
    %v2104 = vpack.c.b16 %v1534, %v1528
    %v2105 = vpack.c.b16 %v1535, %v1529
    %v2106 = vpack.c.b16 %v1536, %v1530
    %v2107 = vpack.c.b16 %v1537, %v1531
    %v2108 = vpack.c.b16 %v1544, %v1538
    %v2109 = vpack.c.b16 %v1545, %v1539
    %v2110 = vpack.c.b16 %v1546, %v1540
    %v2111 = vpack.c.b16 %v1547, %v1541
    %v2112 = vpack.c.b16 %v1548, %v1542
    %v2113 = vpack.c.b16 %v1549, %v1543
    %v2114 = vpack.c.b16 %v1556, %v1550
    %v2115 = vpack.c.b16 %v1557, %v1551
    %v2116 = vpack.c.b16 %v1558, %v1552
    %v2117 = vpack.c.b16 %v1559, %v1553
    %v2118 = vpack.c.b16 %v1560, %v1554
    %v2119 = vpack.c.b16 %v1561, %v1555
    %v2120 = vpack.c.b16 %v1568, %v1562
    %v2121 = vpack.c.b16 %v1569, %v1563
    %v2122 = vpack.c.b16 %v1570, %v1564
    %v2123 = vpack.c.b16 %v1571, %v1565
    %v2124 = vpack.c.b16 %v1572, %v1566
    %v2125 = vpack.c.b16 %v1573, %v1567
    %v2126 = vpack.c.b16 %v1580, %v1574
    %v2127 = vpack.c.b16 %v1581, %v1575
    %v2128 = vpack.c.b16 %v1582, %v1576
    %v2129 = vpack.c.b16 %v1583, %v1577
    %v2130 = vpack.c.b16 %v1584, %v1578
    %v2131 = vpack.c.b16 %v1585, %v1579
    %v2132 = vpack.c.b16 %v1592, %v1586
    %v2133 = vpack.c.b16 %v1593, %v1587
    %v2134 = vpack.c.b16 %v1594, %v1588
    %v2135 = vpack.c.b16 %v1595, %v1589
    %v2136 = vpack.c.b16 %v1596, %v1590
    %v2137 = vpack.c.b16 %v1597, %v1591
    %v2138 = vpack.c.b16 %v1604, %v1598
    %v2139 = vpack.c.b16 %v1605, %v1599
    %v2140 = vpack.c.b16 %v1606, %v1600
    %v2141 = vpack.c.b16 %v1607, %v1601
    %v2142 = vpack.c.b16 %v1608, %v1602
    %v2143 = vpack.c.b16 %v1609, %v1603
    %v2144 = vpack.c.b16 %v1616, %v1610
    %v2145 = vpack.c.b16 %v1617, %v1611
    %v2146 = vpack.c.b16 %v1618, %v1612
    %v2147 = vpack.c.b16 %v1619, %v1613
    %v2148 = vpack.c.b16 %v1620, %v1614
    %v2149 = vpack.c.b16 %v1621, %v1615
    %v2150 = vpack.c.b16 %v1628, %v1622
    %v2151 = vpack.c.b16 %v1629, %v1623
    %v2152 = vpack.c.b16 %v1630, %v1624
    %v2153 = vpack.c.b16 %v1631, %v1625
    %v2154 = vpack.c.b16 %v1632, %v1626
    %v2155 = vpack.c.b16 %v1633, %v1627
    %v2156 = vpack.c.b16 %v1640, %v1634
    %v2157 = vpack.c.b16 %v1641, %v1635
    %v2158 = vpack.c.b16 %v1642, %v1636
    %v2159 = vpack.c.b16 %v1643, %v1637
    %v2160 = vpack.c.b16 %v1644, %v1638
    %v2161 = vpack.c.b16 %v1645, %v1639
    %v2162 = vpack.c.b16 %v1652, %v1646
    %v2163 = vpack.c.b16 %v1653, %v1647
    %v2164 = vpack.c.b16 %v1654, %v1648
    %v2165 = vpack.c.b16 %v1655, %v1649
    %v2166 = vpack.c.b16 %v1656, %v1650
    %v2167 = vpack.c.b16 %v1657, %v1651
    %v2168 = vpack.c.b16 %v1664, %v1658
    %v2169 = vpack.c.b16 %v1665, %v1659
    %v2170 = vpack.c.b16 %v1666, %v1660
    %v2171 = vpack.c.b16 %v1667, %v1661
    %v2172 = vpack.c.b16 %v1668, %v1662
    %v2173 = vpack.c.b16 %v1669, %v1663
    %v2174 = vpack.c.b16 %v1676, %v1670
    %v2175 = vpack.c.b16 %v1677, %v1671
    %v2176 = vpack.c.b16 %v1678, %v1672
    %v2177 = vpack.c.b16 %v1679, %v1673
    %v2178 = vpack.c.b16 %v1680, %v1674
    %v2179 = vpack.c.b16 %v1681, %v1675
    %v2180 = vpack.c.b16 %v1688, %v1682
    %v2181 = vpack.c.b16 %v1689, %v1683
    %v2182 = vpack.c.b16 %v1690, %v1684
    %v2183 = vpack.c.b16 %v1691, %v1685
    %v2184 = vpack.c.b16 %v1692, %v1686
    %v2185 = vpack.c.b16 %v1693, %v1687
    %v2186 = vpack.c.b16 %v1700, %v1694
    %v2187 = vpack.c.b16 %v1701, %v1695
    %v2188 = vpack.c.b16 %v1702, %v1696
    %v2189 = vpack.c.b16 %v1703, %v1697
    %v2190 = vpack.c.b16 %v1704, %v1698
    %v2191 = vpack.c.b16 %v1705, %v1699
    %v2192 = vpack.c.b16 %v1712, %v1706
    %v2193 = vpack.c.b16 %v1713, %v1707
    %v2194 = vpack.c.b16 %v1714, %v1708
    %v2195 = vpack.c.b16 %v1715, %v1709
    %v2196 = vpack.c.b16 %v1716, %v1710
    %v2197 = vpack.c.b16 %v1717, %v1711
    %v2198 = vpack.c.b16 %v1724, %v1718
    %v2199 = vpack.c.b16 %v1725, %v1719
    %v2200 = vpack.c.b16 %v1726, %v1720
    %v2201 = vpack.c.b16 %v1727, %v1721
    %v2202 = vpack.c.b16 %v1728, %v1722
    %v2203 = vpack.c.b16 %v1729, %v1723
    %v2204 = vpack.c.b16 %v1736, %v1730
    %v2205 = vpack.c.b16 %v1737, %v1731
    %v2206 = vpack.c.b16 %v1738, %v1732
    %v2207 = vpack.c.b16 %v1739, %v1733
    %v2208 = vpack.c.b16 %v1740, %v1734
    %v2209 = vpack.c.b16 %v1741, %v1735
    %v2210 = vpack.c.b16 %v1748, %v1742
    %v2211 = vpack.c.b16 %v1749, %v1743
    %v2212 = vpack.c.b16 %v1750, %v1744
    %v2213 = vpack.c.b16 %v1751, %v1745
    %v2214 = vpack.c.b16 %v1752, %v1746
    %v2215 = vpack.c.b16 %v1753, %v1747
    %v2216 = vpack.c.b16 %v1760, %v1754
    %v2217 = vpack.c.b16 %v1761, %v1755
    %v2218 = vpack.c.b16 %v1762, %v1756
    %v2219 = vpack.c.b16 %v1763, %v1757
    %v2220 = vpack.c.b16 %v1764, %v1758
    %v2221 = vpack.c.b16 %v1765, %v1759
    %v2222 = vpack.c.b16 %v1772, %v1766
    %v2223 = vpack.c.b16 %v1773, %v1767
    %v2224 = vpack.c.b16 %v1774, %v1768
    %v2225 = vpack.c.b16 %v1775, %v1769
    %v2226 = vpack.c.b16 %v1776, %v1770
    %v2227 = vpack.c.b16 %v1777, %v1771
    %v2228 = vpack.c.b16 %v1784, %v1778
    %v2229 = vpack.c.b16 %v1785, %v1779
    %v2230 = vpack.c.b16 %v1786, %v1780
    %v2231 = vpack.c.b16 %v1787, %v1781
    %v2232 = vpack.c.b16 %v1788, %v1782
    %v2233 = vpack.c.b16 %v1789, %v1783
    %v2234 = vpack.c.b16 %v1796, %v1790
    %v2235 = vpack.c.b16 %v1797, %v1791
    %v2236 = vpack.c.b16 %v1798, %v1792
    %v2237 = vpack.c.b16 %v1799, %v1793
    %v2238 = vpack.c.b16 %v1800, %v1794
    %v2239 = vpack.c.b16 %v1801, %v1795
    %v2240 = vpack.c.b16 %v1808, %v1802
    %v2241 = vpack.c.b16 %v1809, %v1803
    %v2242 = vpack.c.b16 %v1810, %v1804
    %v2243 = vpack.c.b16 %v1811, %v1805
    %v2244 = vpack.c.b16 %v1812, %v1806
    %v2245 = vpack.c.b16 %v1813, %v1807
    %v2246 = vpack.c.b16 %v1820, %v1814
    %v2247 = vpack.c.b16 %v1821, %v1815
    %v2248 = vpack.c.b16 %v1822, %v1816
    %v2249 = vpack.c.b16 %v1823, %v1817
    %v2250 = vpack.c.b16 %v1824, %v1818
    %v2251 = vpack.c.b16 %v1825, %v1819
    %v2252 = vpack.c.b16 %v1832, %v1826
    %v2253 = vpack.c.b16 %v1833, %v1827
    %v2254 = vpack.c.b16 %v1834, %v1828
    %v2255 = vpack.c.b16 %v1835, %v1829
    %v2256 = vpack.c.b16 %v1836, %v1830
    %v2257 = vpack.c.b16 %v1837, %v1831
    %v2258 = vpack.c.b16 %v1844, %v1838
    %v2259 = vpack.c.b16 %v1845, %v1839
    %v2260 = vpack.c.b16 %v1846, %v1840
    %v2261 = vpack.c.b16 %v1847, %v1841
    %v2262 = vpack.c.b16 %v1848, %v1842
    %v2263 = vpack.c.b16 %v1849, %v1843
    %v2264 = vpack.c.b16 %v1856, %v1850
    %v2265 = vpack.c.b16 %v1857, %v1851
    %v2266 = vpack.c.b16 %v1858, %v1852
    %v2267 = vpack.c.b16 %v1859, %v1853
    %v2268 = vpack.c.b16 %v1860, %v1854
    %v2269 = vpack.c.b16 %v1861, %v1855
    %v2270 = vpack.c.b16 %v1868, %v1862
    %v2271 = vpack.c.b16 %v1869, %v1863
    %v2272 = vpack.c.b16 %v1870, %v1864
    %v2273 = vpack.c.b16 %v1871, %v1865
    %v2274 = vpack.c.b16 %v1872, %v1866
    %v2275 = vpack.c.b16 %v1873, %v1867
    %v2276 = vpack.c.b16 %v1880, %v1874
    %v2277 = vpack.c.b16 %v1881, %v1875
    %v2278 = vpack.c.b16 %v1882, %v1876
    %v2279 = vpack.c.b16 %v1883, %v1877
    %v2280 = vpack.c.b16 %v1884, %v1878
    %v2281 = vpack.c.b16 %v1885, %v1879
    %v2282 = vpack.c.b16 %v1892, %v1886
    %v2283 = vpack.c.b16 %v1893, %v1887
    %v2284 = vpack.c.b16 %v1894, %v1888
    %v2285 = vpack.c.b16 %v1895, %v1889
    %v2286 = vpack.c.b16 %v1896, %v1890
    %v2287 = vpack.c.b16 %v1897, %v1891
    %v2288 = vpack.c.b16 %v1904, %v1898
    %v2289 = vpack.c.b16 %v1905, %v1899
    %v2290 = vpack.c.b16 %v1906, %v1900
    %v2291 = vpack.c.b16 %v1907, %v1901
    %v2292 = vpack.c.b16 %v1908, %v1902
    %v2293 = vpack.c.b16 %v1909, %v1903
    %v2294 = vpack.c.b16 %v1916, %v1910
    %v2295 = vpack.c.b16 %v1917, %v1911
    %v2296 = vpack.c.b16 %v1918, %v1912
    %v2297 = vpack.c.b16 %v1919, %v1913
    %v2298 = vpack.c.b16 %v1920, %v1914
    %v2299 = vpack.c.b16 %v1921, %v1915
    %v2300 = vpack.c.b16 %v1928, %v1922
    %v2301 = vpack.c.b16 %v1929, %v1923
    %v2302 = vpack.c.b16 %v1930, %v1924
    %v2303 = vpack.c.b16 %v1931, %v1925
    %v2304 = vpack.c.b16 %v1932, %v1926
    %v2305 = vpack.c.b16 %v1933, %v1927
    %v2306 = vpack.c.b16 %v1940, %v1934
    %v2307 = vpack.c.b16 %v1941, %v1935
    %v2308 = vpack.c.b16 %v1942, %v1936
    %v2309 = vpack.c.b16 %v1943, %v1937
    %v2310 = vpack.c.b16 %v1944, %v1938
    %v2311 = vpack.c.b16 %v1945, %v1939
    %v2312 = vpack.c.b16 %v1952, %v1946
    %v2313 = vpack.c.b16 %v1953, %v1947
    %v2314 = vpack.c.b16 %v1954, %v1948
    %v2315 = vpack.c.b16 %v1955, %v1949
    %v2316 = vpack.c.b16 %v1956, %v1950
    %v2317 = vpack.c.b16 %v1957, %v1951
    %v2318 = vpack.c.b16 %v1964, %v1958
    %v2319 = vpack.c.b16 %v1965, %v1959
    %v2320 = vpack.c.b16 %v1966, %v1960
    %v2321 = vpack.c.b16 %v1967, %v1961
    %v2322 = vpack.c.b16 %v1968, %v1962
    %v2323 = vpack.c.b16 %v1969, %v1963
    %v2324 = vpack.c.b16 %v1976, %v1970
    %v2325 = vpack.c.b16 %v1977, %v1971
    %v2326 = vpack.c.b16 %v1978, %v1972
    %v2327 = vpack.c.b16 %v1979, %v1973
    %v2328 = vpack.c.b16 %v1980, %v1974
    %v2329 = vpack.c.b16 %v1981, %v1975
    %v2330 = vpack.c.b16 %v1988, %v1982
    %v2331 = vpack.c.b16 %v1989, %v1983
    %v2332 = vpack.c.b16 %v1990, %v1984
    %v2333 = vpack.c.b16 %v1991, %v1985
    %v2334 = vpack.c.b16 %v1992, %v1986
    %v2335 = vpack.c.b16 %v1993, %v1987
    %v2336 = vpack.c.b16 %v2000, %v1994
    %v2337 = vpack.c.b16 %v2001, %v1995
    %v2338 = vpack.c.b16 %v2002, %v1996
    %v2339 = vpack.c.b16 %v2003, %v1997
    %v2340 = vpack.c.b16 %v2004, %v1998
    %v2341 = vpack.c.b16 %v2005, %v1999
    %v2342 = vpack.c.b16 %v2012, %v2006
    %v2343 = vpack.c.b16 %v2013, %v2007
    %v2344 = vpack.c.b16 %v2014, %v2008
    %v2345 = vpack.c.b16 %v2015, %v2009
    %v2346 = vpack.c.b16 %v2016, %v2010
    %v2347 = vpack.c.b16 %v2017, %v2011
    %v2348 = vpack.c.b16 %v2024, %v2018
    %v2349 = vpack.c.b16 %v2025, %v2019
    %v2350 = vpack.c.b16 %v2026, %v2020
    %v2351 = vpack.c.b16 %v2027, %v2021
    %v2352 = vpack.c.b16 %v2028, %v2022
    %v2353 = vpack.c.b16 %v2029, %v2023
    %v2354 = vpack.c.b16 %v2036, %v2030
    %v2355 = vpack.c.b16 %v2037, %v2031
    %v2356 = vpack.c.b16 %v2038, %v2032
    %v2357 = vpack.c.b16 %v2039, %v2033
    %v2358 = vpack.c.b16 %v2040, %v2034
    %v2359 = vpack.c.b16 %v2041, %v2035
    %v2360 = vpack.c.b16 %v2048, %v2042
    %v2361 = vpack.c.b16 %v2049, %v2043
    %v2362 = vpack.c.b16 %v2050, %v2044
    %v2363 = vpack.c.b16 %v2051, %v2045
    %v2364 = vpack.c.b16 %v2052, %v2046
    %v2365 = vpack.c.b16 %v2053, %v2047
    %v2366 = vpack.c.b16 %v2060, %v2054
    %v2367 = vpack.c.b16 %v2061, %v2055
    %v2368 = vpack.c.b16 %v2062, %v2056
    %v2369 = vpack.c.b16 %v2063, %v2057
    %v2370 = vpack.c.b16 %v2064, %v2058
    %v2371 = vpack.c.b16 %v2065, %v2059
    %v2372 = vpack.c.b16 %v2072, %v2066
    %v2373 = vpack.c.b16 %v2073, %v2067
    %v2374 = vpack.c.b16 %v2074, %v2068
    %v2375 = vpack.c.b16 %v2075, %v2069
    %v2376 = vpack.c.b16 %v2076, %v2070
    %v2377 = vpack.c.b16 %v2077, %v2071
    %v2378 = vpack.c.b16 %v2084, %v2078
    %v2379 = vpack.c.b16 %v2085, %v2079
    %v2380 = vpack.c.b16 %v2086, %v2080
    %v2381 = vpack.c.b16 %v2087, %v2081
    %v2382 = vpack.c.b16 %v2088, %v2082
    %v2383 = vpack.c.b16 %v2089, %v2083
    %v2384 = vpack.c.b16 %v2096, %v2090
    %v2385 = vpack.c.b16 %v2097, %v2091
    %v2386 = vpack.c.b16 %v2098, %v2092
    %v2387 = vpack.c.b16 %v2099, %v2093
    %v2388 = vpack.c.b16 %v2100, %v2094
    %v2389 = vpack.c.b16 %v2101, %v2095
    %2678 = vmatpush.bf16.msra.mxu0 %v2144
    %2679 = vmatpush.bf16.msra.mxu0 %v2138
    %2680 = vmatpush.bf16.msra.mxu0 %v2132
    %2681 = vmatpush.bf16.msra.mxu0 %v2126
    %2682 = vmatpush.bf16.msra.mxu0 %v2120
    %2683 = vmatpush.bf16.msra.mxu0 %v2114
    %2684 = vmatpush.bf16.msra.mxu0 %v2108
    %2685 = vmatpush.bf16.msra.mxu0 %v2102
    %2686 = vmatmul.bf16.gmra.mxu0 %v1226
    %v2687 = vpop.f32.mrf.mxu0
    %v2688 = vadd.f32 %v1027, %v2687
    %v2689 = vpop.f32.mrf.mxu0
    %2690 = vdwg.mxu0
    %2691 = vmatpush.bf16.msra.mxu0 %v2192
    %2692 = vmatpush.bf16.msra.mxu0 %v2186
    %2693 = vmatpush.bf16.msra.mxu0 %v2180
    %2694 = vmatpush.bf16.msra.mxu0 %v2174
    %2695 = vmatpush.bf16.msra.mxu0 %v2168
    %2696 = vmatpush.bf16.msra.mxu0 %v2162
    %2697 = vmatpush.bf16.msra.mxu0 %v2156
    %2698 = vmatpush.bf16.msra.mxu0 %v2150
    %2699 = vmatmul.bf16.gmra.mxu0 %v1227
    %v2700 = vpop.f32.mrf.mxu0
    %v2701 = vadd.f32 %v2688, %v2700
    %v2702 = vpop.f32.mrf.mxu0
    %2703 = vdwg.mxu0
    %2704 = vmatpush.bf16.msra.mxu0 %v2240
    %2705 = vmatpush.bf16.msra.mxu0 %v2234
    %2706 = vmatpush.bf16.msra.mxu0 %v2228
    %2707 = vmatpush.bf16.msra.mxu0 %v2222
    %2708 = vmatpush.bf16.msra.mxu0 %v2216
    %2709 = vmatpush.bf16.msra.mxu0 %v2210
    %2710 = vmatpush.bf16.msra.mxu0 %v2204
    %2711 = vmatpush.bf16.msra.mxu0 %v2198
    %2712 = vmatmul.bf16.gmra.mxu0 %v1228
    %v2713 = vpop.f32.mrf.mxu0
    %v2714 = vadd.f32 %v2701, %v2713
    %v2715 = vpop.f32.mrf.mxu0
    %2716 = vdwg.mxu0
    %2717 = vmatpush.bf16.msra.mxu0 %v2288
    %2718 = vmatpush.bf16.msra.mxu0 %v2282
    %2719 = vmatpush.bf16.msra.mxu0 %v2276
    %2720 = vmatpush.bf16.msra.mxu0 %v2270
    %2721 = vmatpush.bf16.msra.mxu0 %v2264
    %2722 = vmatpush.bf16.msra.mxu0 %v2258
    %2723 = vmatpush.bf16.msra.mxu0 %v2252
    %2724 = vmatpush.bf16.msra.mxu0 %v2246
    %2725 = vmatmul.bf16.gmra.mxu0 %v1229
    %v2726 = vpop.f32.mrf.mxu0
    %v2727 = vadd.f32 %v2714, %v2726
    %v2728 = vpop.f32.mrf.mxu0
    %2729 = vdwg.mxu0
    %2730 = vmatpush.bf16.msra.mxu0 %v2336
    %2731 = vmatpush.bf16.msra.mxu0 %v2330
    %2732 = vmatpush.bf16.msra.mxu0 %v2324
    %2733 = vmatpush.bf16.msra.mxu0 %v2318
    %2734 = vmatpush.bf16.msra.mxu0 %v2312
    %2735 = vmatpush.bf16.msra.mxu0 %v2306
    %2736 = vmatpush.bf16.msra.mxu0 %v2300
    %2737 = vmatpush.bf16.msra.mxu0 %v2294
    %2738 = vmatmul.bf16.gmra.mxu0 %v1230
    %v2739 = vpop.f32.mrf.mxu0
    %v2740 = vadd.f32 %v2727, %v2739
    %v2741 = vpop.f32.mrf.mxu0
    %2742 = vdwg.mxu0
    %2743 = vmatpush.bf16.msra.mxu0 %v2384
    %2744 = vmatpush.bf16.msra.mxu0 %v2378
    %2745 = vmatpush.bf16.msra.mxu0 %v2372
    %2746 = vmatpush.bf16.msra.mxu0 %v2366
    %2747 = vmatpush.bf16.msra.mxu0 %v2360
    %2748 = vmatpush.bf16.msra.mxu0 %v2354
    %2749 = vmatpush.bf16.msra.mxu0 %v2348
    %2750 = vmatpush.bf16.msra.mxu0 %v2342
    %2751 = vmatmul.bf16.gmra.mxu0 %v1231
    %v2752 = vpop.f32.mrf.mxu0
    %v2753 = vadd.f32 %v2740, %v2752
    %v2754 = vpop.f32.mrf.mxu0
    %2755 = vdwg.mxu0
    %2756 = vmatpush.bf16.msra.mxu0 %v2145
    %2757 = vmatpush.bf16.msra.mxu0 %v2139
    %2758 = vmatpush.bf16.msra.mxu0 %v2133
    %2759 = vmatpush.bf16.msra.mxu0 %v2127
    %2760 = vmatpush.bf16.msra.mxu0 %v2121
    %2761 = vmatpush.bf16.msra.mxu0 %v2115
    %2762 = vmatpush.bf16.msra.mxu0 %v2109
    %2763 = vmatpush.bf16.msra.mxu0 %v2103
    %2764 = vmatmul.bf16.gmra.mxu0 %v1226
    %v2765 = vpop.f32.mrf.mxu0
    %v2766 = vadd.f32 %v1028, %v2765
    %v2767 = vpop.f32.mrf.mxu0
    %2768 = vdwg.mxu0
    %2769 = vmatpush.bf16.msra.mxu0 %v2193
    %2770 = vmatpush.bf16.msra.mxu0 %v2187
    %2771 = vmatpush.bf16.msra.mxu0 %v2181
    %2772 = vmatpush.bf16.msra.mxu0 %v2175
    %2773 = vmatpush.bf16.msra.mxu0 %v2169
    %2774 = vmatpush.bf16.msra.mxu0 %v2163
    %2775 = vmatpush.bf16.msra.mxu0 %v2157
    %2776 = vmatpush.bf16.msra.mxu0 %v2151
    %2777 = vmatmul.bf16.gmra.mxu0 %v1227
    %v2778 = vpop.f32.mrf.mxu0
    %v2779 = vadd.f32 %v2766, %v2778
    %v2780 = vpop.f32.mrf.mxu0
    %2781 = vdwg.mxu0
    %2782 = vmatpush.bf16.msra.mxu0 %v2241
    %2783 = vmatpush.bf16.msra.mxu0 %v2235
    %2784 = vmatpush.bf16.msra.mxu0 %v2229
    %2785 = vmatpush.bf16.msra.mxu0 %v2223
    %2786 = vmatpush.bf16.msra.mxu0 %v2217
    %2787 = vmatpush.bf16.msra.mxu0 %v2211
    %2788 = vmatpush.bf16.msra.mxu0 %v2205
    %2789 = vmatpush.bf16.msra.mxu0 %v2199
    %2790 = vmatmul.bf16.gmra.mxu0 %v1228
    %v2791 = vpop.f32.mrf.mxu0
    %v2792 = vadd.f32 %v2779, %v2791
    %v2793 = vpop.f32.mrf.mxu0
    %2794 = vdwg.mxu0
    %2795 = vmatpush.bf16.msra.mxu0 %v2289
    %2796 = vmatpush.bf16.msra.mxu0 %v2283
    %2797 = vmatpush.bf16.msra.mxu0 %v2277
    %2798 = vmatpush.bf16.msra.mxu0 %v2271
    %2799 = vmatpush.bf16.msra.mxu0 %v2265
    %2800 = vmatpush.bf16.msra.mxu0 %v2259
    %2801 = vmatpush.bf16.msra.mxu0 %v2253
    %2802 = vmatpush.bf16.msra.mxu0 %v2247
    %2803 = vmatmul.bf16.gmra.mxu0 %v1229
    %v2804 = vpop.f32.mrf.mxu0
    %v2805 = vadd.f32 %v2792, %v2804
    %v2806 = vpop.f32.mrf.mxu0
    %2807 = vdwg.mxu0
    %2808 = vmatpush.bf16.msra.mxu0 %v2337
    %2809 = vmatpush.bf16.msra.mxu0 %v2331
    %2810 = vmatpush.bf16.msra.mxu0 %v2325
    %2811 = vmatpush.bf16.msra.mxu0 %v2319
    %2812 = vmatpush.bf16.msra.mxu0 %v2313
    %2813 = vmatpush.bf16.msra.mxu0 %v2307
    %2814 = vmatpush.bf16.msra.mxu0 %v2301
    %2815 = vmatpush.bf16.msra.mxu0 %v2295
    %2816 = vmatmul.bf16.gmra.mxu0 %v1230
    %v2817 = vpop.f32.mrf.mxu0
    %v2818 = vadd.f32 %v2805, %v2817
    %v2819 = vpop.f32.mrf.mxu0
    %2820 = vdwg.mxu0
    %2821 = vmatpush.bf16.msra.mxu0 %v2385
    %2822 = vmatpush.bf16.msra.mxu0 %v2379
    %2823 = vmatpush.bf16.msra.mxu0 %v2373
    %2824 = vmatpush.bf16.msra.mxu0 %v2367
    %2825 = vmatpush.bf16.msra.mxu0 %v2361
    %2826 = vmatpush.bf16.msra.mxu0 %v2355
    %2827 = vmatpush.bf16.msra.mxu0 %v2349
    %2828 = vmatpush.bf16.msra.mxu0 %v2343
    %2829 = vmatmul.bf16.gmra.mxu0 %v1231
    %v2830 = vpop.f32.mrf.mxu0
    %v2831 = vadd.f32 %v2818, %v2830
    %v2832 = vpop.f32.mrf.mxu0
    %2833 = vdwg.mxu0
    %2834 = vmatpush.bf16.msra.mxu0 %v2146
    %2835 = vmatpush.bf16.msra.mxu0 %v2140
    %2836 = vmatpush.bf16.msra.mxu0 %v2134
    %2837 = vmatpush.bf16.msra.mxu0 %v2128
    %2838 = vmatpush.bf16.msra.mxu0 %v2122
    %2839 = vmatpush.bf16.msra.mxu0 %v2116
    %2840 = vmatpush.bf16.msra.mxu0 %v2110
    %2841 = vmatpush.bf16.msra.mxu0 %v2104
    %2842 = vmatmul.bf16.gmra.mxu0 %v1226
    %v2843 = vpop.f32.mrf.mxu0
    %v2844 = vadd.f32 %v1029, %v2843
    %v2845 = vpop.f32.mrf.mxu0
    %2846 = vdwg.mxu0
    %2847 = vmatpush.bf16.msra.mxu0 %v2194
    %2848 = vmatpush.bf16.msra.mxu0 %v2188
    %2849 = vmatpush.bf16.msra.mxu0 %v2182
    %2850 = vmatpush.bf16.msra.mxu0 %v2176
    %2851 = vmatpush.bf16.msra.mxu0 %v2170
    %2852 = vmatpush.bf16.msra.mxu0 %v2164
    %2853 = vmatpush.bf16.msra.mxu0 %v2158
    %2854 = vmatpush.bf16.msra.mxu0 %v2152
    %2855 = vmatmul.bf16.gmra.mxu0 %v1227
    %v2856 = vpop.f32.mrf.mxu0
    %v2857 = vadd.f32 %v2844, %v2856
    %v2858 = vpop.f32.mrf.mxu0
    %2859 = vdwg.mxu0
    %2860 = vmatpush.bf16.msra.mxu0 %v2242
    %2861 = vmatpush.bf16.msra.mxu0 %v2236
    %2862 = vmatpush.bf16.msra.mxu0 %v2230
    %2863 = vmatpush.bf16.msra.mxu0 %v2224
    %2864 = vmatpush.bf16.msra.mxu0 %v2218
    %2865 = vmatpush.bf16.msra.mxu0 %v2212
    %2866 = vmatpush.bf16.msra.mxu0 %v2206
    %2867 = vmatpush.bf16.msra.mxu0 %v2200
    %2868 = vmatmul.bf16.gmra.mxu0 %v1228
    %v2869 = vpop.f32.mrf.mxu0
    %v2870 = vadd.f32 %v2857, %v2869
    %v2871 = vpop.f32.mrf.mxu0
    %2872 = vdwg.mxu0
    %2873 = vmatpush.bf16.msra.mxu0 %v2290
    %2874 = vmatpush.bf16.msra.mxu0 %v2284
    %2875 = vmatpush.bf16.msra.mxu0 %v2278
    %2876 = vmatpush.bf16.msra.mxu0 %v2272
    %2877 = vmatpush.bf16.msra.mxu0 %v2266
    %2878 = vmatpush.bf16.msra.mxu0 %v2260
    %2879 = vmatpush.bf16.msra.mxu0 %v2254
    %2880 = vmatpush.bf16.msra.mxu0 %v2248
    %2881 = vmatmul.bf16.gmra.mxu0 %v1229
    %v2882 = vpop.f32.mrf.mxu0
    %v2883 = vadd.f32 %v2870, %v2882
    %v2884 = vpop.f32.mrf.mxu0
    %2885 = vdwg.mxu0
    %2886 = vmatpush.bf16.msra.mxu0 %v2338
    %2887 = vmatpush.bf16.msra.mxu0 %v2332
    %2888 = vmatpush.bf16.msra.mxu0 %v2326
    %2889 = vmatpush.bf16.msra.mxu0 %v2320
    %2890 = vmatpush.bf16.msra.mxu0 %v2314
    %2891 = vmatpush.bf16.msra.mxu0 %v2308
    %2892 = vmatpush.bf16.msra.mxu0 %v2302
    %2893 = vmatpush.bf16.msra.mxu0 %v2296
    %2894 = vmatmul.bf16.gmra.mxu0 %v1230
    %v2895 = vpop.f32.mrf.mxu0
    %v2896 = vadd.f32 %v2883, %v2895
    %v2897 = vpop.f32.mrf.mxu0
    %2898 = vdwg.mxu0
    %2899 = vmatpush.bf16.msra.mxu0 %v2386
    %2900 = vmatpush.bf16.msra.mxu0 %v2380
    %2901 = vmatpush.bf16.msra.mxu0 %v2374
    %2902 = vmatpush.bf16.msra.mxu0 %v2368
    %2903 = vmatpush.bf16.msra.mxu0 %v2362
    %2904 = vmatpush.bf16.msra.mxu0 %v2356
    %2905 = vmatpush.bf16.msra.mxu0 %v2350
    %2906 = vmatpush.bf16.msra.mxu0 %v2344
    %2907 = vmatmul.bf16.gmra.mxu0 %v1231
    %v2908 = vpop.f32.mrf.mxu0
    %v2909 = vadd.f32 %v2896, %v2908
    %v2910 = vpop.f32.mrf.mxu0
    %2911 = vdwg.mxu0
    %2912 = vmatpush.bf16.msra.mxu0 %v2147
    %2913 = vmatpush.bf16.msra.mxu0 %v2141
    %2914 = vmatpush.bf16.msra.mxu0 %v2135
    %2915 = vmatpush.bf16.msra.mxu0 %v2129
    %2916 = vmatpush.bf16.msra.mxu0 %v2123
    %2917 = vmatpush.bf16.msra.mxu0 %v2117
    %2918 = vmatpush.bf16.msra.mxu0 %v2111
    %2919 = vmatpush.bf16.msra.mxu0 %v2105
    %2920 = vmatmul.bf16.gmra.mxu0 %v1226
    %v2921 = vpop.f32.mrf.mxu0
    %v2922 = vadd.f32 %v1030, %v2921
    %v2923 = vpop.f32.mrf.mxu0
    %2924 = vdwg.mxu0
    %2925 = vmatpush.bf16.msra.mxu0 %v2195
    %2926 = vmatpush.bf16.msra.mxu0 %v2189
    %2927 = vmatpush.bf16.msra.mxu0 %v2183
    %2928 = vmatpush.bf16.msra.mxu0 %v2177
    %2929 = vmatpush.bf16.msra.mxu0 %v2171
    %2930 = vmatpush.bf16.msra.mxu0 %v2165
    %2931 = vmatpush.bf16.msra.mxu0 %v2159
    %2932 = vmatpush.bf16.msra.mxu0 %v2153
    %2933 = vmatmul.bf16.gmra.mxu0 %v1227
    %v2934 = vpop.f32.mrf.mxu0
    %v2935 = vadd.f32 %v2922, %v2934
    %v2936 = vpop.f32.mrf.mxu0
    %2937 = vdwg.mxu0
    %2938 = vmatpush.bf16.msra.mxu0 %v2243
    %2939 = vmatpush.bf16.msra.mxu0 %v2237
    %2940 = vmatpush.bf16.msra.mxu0 %v2231
    %2941 = vmatpush.bf16.msra.mxu0 %v2225
    %2942 = vmatpush.bf16.msra.mxu0 %v2219
    %2943 = vmatpush.bf16.msra.mxu0 %v2213
    %2944 = vmatpush.bf16.msra.mxu0 %v2207
    %2945 = vmatpush.bf16.msra.mxu0 %v2201
    %2946 = vmatmul.bf16.gmra.mxu0 %v1228
    %v2947 = vpop.f32.mrf.mxu0
    %v2948 = vadd.f32 %v2935, %v2947
    %v2949 = vpop.f32.mrf.mxu0
    %2950 = vdwg.mxu0
    %2951 = vmatpush.bf16.msra.mxu0 %v2291
    %2952 = vmatpush.bf16.msra.mxu0 %v2285
    %2953 = vmatpush.bf16.msra.mxu0 %v2279
    %2954 = vmatpush.bf16.msra.mxu0 %v2273
    %2955 = vmatpush.bf16.msra.mxu0 %v2267
    %2956 = vmatpush.bf16.msra.mxu0 %v2261
    %2957 = vmatpush.bf16.msra.mxu0 %v2255
    %2958 = vmatpush.bf16.msra.mxu0 %v2249
    %2959 = vmatmul.bf16.gmra.mxu0 %v1229
    %v2960 = vpop.f32.mrf.mxu0
    %v2961 = vadd.f32 %v2948, %v2960
    %v2962 = vpop.f32.mrf.mxu0
    %2963 = vdwg.mxu0
    %2964 = vmatpush.bf16.msra.mxu0 %v2339
    %2965 = vmatpush.bf16.msra.mxu0 %v2333
    %2966 = vmatpush.bf16.msra.mxu0 %v2327
    %2967 = vmatpush.bf16.msra.mxu0 %v2321
    %2968 = vmatpush.bf16.msra.mxu0 %v2315
    %2969 = vmatpush.bf16.msra.mxu0 %v2309
    %2970 = vmatpush.bf16.msra.mxu0 %v2303
    %2971 = vmatpush.bf16.msra.mxu0 %v2297
    %2972 = vmatmul.bf16.gmra.mxu0 %v1230
    %v2973 = vpop.f32.mrf.mxu0
    %v2974 = vadd.f32 %v2961, %v2973
    %v2975 = vpop.f32.mrf.mxu0
    %2976 = vdwg.mxu0
    %2977 = vmatpush.bf16.msra.mxu0 %v2387
    %2978 = vmatpush.bf16.msra.mxu0 %v2381
    %2979 = vmatpush.bf16.msra.mxu0 %v2375
    %2980 = vmatpush.bf16.msra.mxu0 %v2369
    %2981 = vmatpush.bf16.msra.mxu0 %v2363
    %2982 = vmatpush.bf16.msra.mxu0 %v2357
    %2983 = vmatpush.bf16.msra.mxu0 %v2351
    %2984 = vmatpush.bf16.msra.mxu0 %v2345
    %2985 = vmatmul.bf16.gmra.mxu0 %v1231
    %v2986 = vpop.f32.mrf.mxu0
    %v2987 = vadd.f32 %v2974, %v2986
    %v2988 = vpop.f32.mrf.mxu0
    %2989 = vdwg.mxu0
    %2990 = vmatpush.bf16.msra.mxu0 %v2148
    %2991 = vmatpush.bf16.msra.mxu0 %v2142
    %2992 = vmatpush.bf16.msra.mxu0 %v2136
    %2993 = vmatpush.bf16.msra.mxu0 %v2130
    %2994 = vmatpush.bf16.msra.mxu0 %v2124
    %2995 = vmatpush.bf16.msra.mxu0 %v2118
    %2996 = vmatpush.bf16.msra.mxu0 %v2112
    %2997 = vmatpush.bf16.msra.mxu0 %v2106
    %2998 = vmatmul.bf16.gmra.mxu0 %v1226
    %v2999 = vpop.f32.mrf.mxu0
    %v3000 = vadd.f32 %v1031, %v2999
    %v3001 = vpop.f32.mrf.mxu0
    %3002 = vdwg.mxu0
    %3003 = vmatpush.bf16.msra.mxu0 %v2196
    %3004 = vmatpush.bf16.msra.mxu0 %v2190
    %3005 = vmatpush.bf16.msra.mxu0 %v2184
    %3006 = vmatpush.bf16.msra.mxu0 %v2178
    %3007 = vmatpush.bf16.msra.mxu0 %v2172
    %3008 = vmatpush.bf16.msra.mxu0 %v2166
    %3009 = vmatpush.bf16.msra.mxu0 %v2160
    %3010 = vmatpush.bf16.msra.mxu0 %v2154
    %3011 = vmatmul.bf16.gmra.mxu0 %v1227
    %v3012 = vpop.f32.mrf.mxu0
    %v3013 = vadd.f32 %v3000, %v3012
    %v3014 = vpop.f32.mrf.mxu0
    %3015 = vdwg.mxu0
    %3016 = vmatpush.bf16.msra.mxu0 %v2244
    %3017 = vmatpush.bf16.msra.mxu0 %v2238
    %3018 = vmatpush.bf16.msra.mxu0 %v2232
    %3019 = vmatpush.bf16.msra.mxu0 %v2226
    %3020 = vmatpush.bf16.msra.mxu0 %v2220
    %3021 = vmatpush.bf16.msra.mxu0 %v2214
    %3022 = vmatpush.bf16.msra.mxu0 %v2208
    %3023 = vmatpush.bf16.msra.mxu0 %v2202
    %3024 = vmatmul.bf16.gmra.mxu0 %v1228
    %v3025 = vpop.f32.mrf.mxu0
    %v3026 = vadd.f32 %v3013, %v3025
    %v3027 = vpop.f32.mrf.mxu0
    %3028 = vdwg.mxu0
    %3029 = vmatpush.bf16.msra.mxu0 %v2292
    %3030 = vmatpush.bf16.msra.mxu0 %v2286
    %3031 = vmatpush.bf16.msra.mxu0 %v2280
    %3032 = vmatpush.bf16.msra.mxu0 %v2274
    %3033 = vmatpush.bf16.msra.mxu0 %v2268
    %3034 = vmatpush.bf16.msra.mxu0 %v2262
    %3035 = vmatpush.bf16.msra.mxu0 %v2256
    %3036 = vmatpush.bf16.msra.mxu0 %v2250
    %3037 = vmatmul.bf16.gmra.mxu0 %v1229
    %v3038 = vpop.f32.mrf.mxu0
    %v3039 = vadd.f32 %v3026, %v3038
    %v3040 = vpop.f32.mrf.mxu0
    %3041 = vdwg.mxu0
    %3042 = vmatpush.bf16.msra.mxu0 %v2340
    %3043 = vmatpush.bf16.msra.mxu0 %v2334
    %3044 = vmatpush.bf16.msra.mxu0 %v2328
    %3045 = vmatpush.bf16.msra.mxu0 %v2322
    %3046 = vmatpush.bf16.msra.mxu0 %v2316
    %3047 = vmatpush.bf16.msra.mxu0 %v2310
    %3048 = vmatpush.bf16.msra.mxu0 %v2304
    %3049 = vmatpush.bf16.msra.mxu0 %v2298
    %3050 = vmatmul.bf16.gmra.mxu0 %v1230
    %v3051 = vpop.f32.mrf.mxu0
    %v3052 = vadd.f32 %v3039, %v3051
    %v3053 = vpop.f32.mrf.mxu0
    %3054 = vdwg.mxu0
    %3055 = vmatpush.bf16.msra.mxu0 %v2388
    %3056 = vmatpush.bf16.msra.mxu0 %v2382
    %3057 = vmatpush.bf16.msra.mxu0 %v2376
    %3058 = vmatpush.bf16.msra.mxu0 %v2370
    %3059 = vmatpush.bf16.msra.mxu0 %v2364
    %3060 = vmatpush.bf16.msra.mxu0 %v2358
    %3061 = vmatpush.bf16.msra.mxu0 %v2352
    %3062 = vmatpush.bf16.msra.mxu0 %v2346
    %3063 = vmatmul.bf16.gmra.mxu0 %v1231
    %v3064 = vpop.f32.mrf.mxu0
    %v3065 = vadd.f32 %v3052, %v3064
    %v3066 = vpop.f32.mrf.mxu0
    %3067 = vdwg.mxu0
    %3068 = vmatpush.bf16.msra.mxu0 %v2149
    %3069 = vmatpush.bf16.msra.mxu0 %v2143
    %3070 = vmatpush.bf16.msra.mxu0 %v2137
    %3071 = vmatpush.bf16.msra.mxu0 %v2131
    %3072 = vmatpush.bf16.msra.mxu0 %v2125
    %3073 = vmatpush.bf16.msra.mxu0 %v2119
    %3074 = vmatpush.bf16.msra.mxu0 %v2113
    %3075 = vmatpush.bf16.msra.mxu0 %v2107
    %3076 = vmatmul.bf16.gmra.mxu0 %v1226
    %v3077 = vpop.f32.mrf.mxu0
    %v3078 = vadd.f32 %v1032, %v3077
    %v3079 = vpop.f32.mrf.mxu0
    %3080 = vdwg.mxu0
    %3081 = vmatpush.bf16.msra.mxu0 %v2197
    %3082 = vmatpush.bf16.msra.mxu0 %v2191
    %3083 = vmatpush.bf16.msra.mxu0 %v2185
    %3084 = vmatpush.bf16.msra.mxu0 %v2179
    %3085 = vmatpush.bf16.msra.mxu0 %v2173
    %3086 = vmatpush.bf16.msra.mxu0 %v2167
    %3087 = vmatpush.bf16.msra.mxu0 %v2161
    %3088 = vmatpush.bf16.msra.mxu0 %v2155
    %3089 = vmatmul.bf16.gmra.mxu0 %v1227
    %v3090 = vpop.f32.mrf.mxu0
    %v3091 = vadd.f32 %v3078, %v3090
    %v3092 = vpop.f32.mrf.mxu0
    %3093 = vdwg.mxu0
    %3094 = vmatpush.bf16.msra.mxu0 %v2245
    %3095 = vmatpush.bf16.msra.mxu0 %v2239
    %3096 = vmatpush.bf16.msra.mxu0 %v2233
    %3097 = vmatpush.bf16.msra.mxu0 %v2227
    %3098 = vmatpush.bf16.msra.mxu0 %v2221
    %3099 = vmatpush.bf16.msra.mxu0 %v2215
    %3100 = vmatpush.bf16.msra.mxu0 %v2209
    %3101 = vmatpush.bf16.msra.mxu0 %v2203
    %3102 = vmatmul.bf16.gmra.mxu0 %v1228
    %v3103 = vpop.f32.mrf.mxu0
    %v3104 = vadd.f32 %v3091, %v3103
    %v3105 = vpop.f32.mrf.mxu0
    %3106 = vdwg.mxu0
    %3107 = vmatpush.bf16.msra.mxu0 %v2293
    %3108 = vmatpush.bf16.msra.mxu0 %v2287
    %3109 = vmatpush.bf16.msra.mxu0 %v2281
    %3110 = vmatpush.bf16.msra.mxu0 %v2275
    %3111 = vmatpush.bf16.msra.mxu0 %v2269
    %3112 = vmatpush.bf16.msra.mxu0 %v2263
    %3113 = vmatpush.bf16.msra.mxu0 %v2257
    %3114 = vmatpush.bf16.msra.mxu0 %v2251
    %3115 = vmatmul.bf16.gmra.mxu0 %v1229
    %v3116 = vpop.f32.mrf.mxu0
    %v3117 = vadd.f32 %v3104, %v3116
    %v3118 = vpop.f32.mrf.mxu0
    %3119 = vdwg.mxu0
    %3120 = vmatpush.bf16.msra.mxu0 %v2341
    %3121 = vmatpush.bf16.msra.mxu0 %v2335
    %3122 = vmatpush.bf16.msra.mxu0 %v2329
    %3123 = vmatpush.bf16.msra.mxu0 %v2323
    %3124 = vmatpush.bf16.msra.mxu0 %v2317
    %3125 = vmatpush.bf16.msra.mxu0 %v2311
    %3126 = vmatpush.bf16.msra.mxu0 %v2305
    %3127 = vmatpush.bf16.msra.mxu0 %v2299
    %3128 = vmatmul.bf16.gmra.mxu0 %v1230
    %v3129 = vpop.f32.mrf.mxu0
    %v3130 = vadd.f32 %v3117, %v3129
    %v3131 = vpop.f32.mrf.mxu0
    %3132 = vdwg.mxu0
    %3133 = vmatpush.bf16.msra.mxu0 %v2389
    %3134 = vmatpush.bf16.msra.mxu0 %v2383
    %3135 = vmatpush.bf16.msra.mxu0 %v2377
    %3136 = vmatpush.bf16.msra.mxu0 %v2371
    %3137 = vmatpush.bf16.msra.mxu0 %v2365
    %3138 = vmatpush.bf16.msra.mxu0 %v2359
    %3139 = vmatpush.bf16.msra.mxu0 %v2353
    %3140 = vmatpush.bf16.msra.mxu0 %v2347
    %3141 = vmatmul.bf16.gmra.mxu0 %v1231
    %v3142 = vpop.f32.mrf.mxu0
    %v3143 = vadd.f32 %v3130, %v3142
    %v3144 = vpop.f32.mrf.mxu0
    %3145 = vdwg.mxu0
    %v3146 = vtanh.pop %v2753
    %v3147 = vtanh.pop %v2831
    %v3148 = vtanh.pop %v2909
    %v3149 = vtanh.pop %v2987
    %v3150 = vtanh.pop %v3065
    %v3151 = vtanh.pop %v3143
    %v3152 = vpack.c.bf16 %v3146, %v3146
    %v3153 = vpack.c.bf16 %v3147, %v3147
    %v3154 = vpack.c.bf16 %v3148, %v3148
    %v3155 = vpack.c.bf16 %v3149, %v3149
    %v3156 = vpack.c.bf16 %v3150, %v3150
    %v3157 = vpack.c.bf16 %v3151, %v3151
    %v3158 = vld [vmem:[#allocation10] sm:$0xff]
    %v3159 = vld [vmem:[#allocation10 + $0x8] sm:$0xff]
    %v3160 = vld [vmem:[#allocation10 + $0x10] sm:$0xff]
    %v3161 = vld [vmem:[#allocation10 + $0x18] sm:$0xff]
    %v3162 = vld [vmem:[#allocation10 + $0x20] sm:$0xff]
    %v3163 = vld [vmem:[#allocation10 + $0x28] sm:$0xff]
    %v3164 = vld [vmem:[#allocation10 + $0x30] sm:$0xff]
    %v3165 = vld [vmem:[#allocation10 + $0x38] sm:$0xff]
    %v3166 = vld [vmem:[#allocation10 + $0x40] sm:$0xff]
    %v3167 = vld [vmem:[#allocation10 + $0x48] sm:$0xff]
    %v3168 = vld [vmem:[#allocation10 + $0x50] sm:$0xff]
    %v3169 = vld [vmem:[#allocation10 + $0x58] sm:$0xff]
    %v3170 = vld [vmem:[#allocation10 + $0x60] sm:$0xff]
    %v3171 = vld [vmem:[#allocation10 + $0x68] sm:$0xff]
    %v3172 = vld [vmem:[#allocation10 + $0x70] sm:$0xff]
    %v3173 = vld [vmem:[#allocation10 + $0x78] sm:$0xff]
    %v3174 = vld [vmem:[#allocation10 + $0x80] sm:$0xff]
    %v3175 = vld [vmem:[#allocation10 + $0x88] sm:$0xff]
    %v3176 = vld [vmem:[#allocation10 + $0x90] sm:$0xff]
    %v3177 = vld [vmem:[#allocation10 + $0x98] sm:$0xff]
    %v3178 = vld [vmem:[#allocation10 + $0xa0] sm:$0xff]
    %v3179 = vld [vmem:[#allocation10 + $0xa8] sm:$0xff]
    %v3180 = vld [vmem:[#allocation10 + $0xb0] sm:$0xff]
    %v3181 = vld [vmem:[#allocation10 + $0xb8] sm:$0xff]
    %v3182 = vld [vmem:[#allocation10 + $0xc0] sm:$0xff]
    %v3183 = vld [vmem:[#allocation10 + $0xc8] sm:$0xff]
    %v3184 = vld [vmem:[#allocation10 + $0xd0] sm:$0xff]
    %v3185 = vld [vmem:[#allocation10 + $0xd8] sm:$0xff]
    %v3186 = vld [vmem:[#allocation10 + $0xe0] sm:$0xff]
    %v3187 = vld [vmem:[#allocation10 + $0xe8] sm:$0xff]
    %v3188 = vld [vmem:[#allocation10 + $0xf0] sm:$0xff]
    %v3189 = vld [vmem:[#allocation10 + $0xf8] sm:$0xff]
    %v3190 = vld [vmem:[#allocation10 + $0x100] sm:$0xff]
    %v3191 = vld [vmem:[#allocation10 + $0x108] sm:$0xff]
    %v3192 = vld [vmem:[#allocation10 + $0x110] sm:$0xff]
    %v3193 = vld [vmem:[#allocation10 + $0x118] sm:$0xff]
    %v3194 = vld [vmem:[#allocation10 + $0x120] sm:$0xff]
    %v3195 = vld [vmem:[#allocation10 + $0x128] sm:$0xff]
    %v3196 = vld [vmem:[#allocation10 + $0x130] sm:$0xff]
    %v3197 = vld [vmem:[#allocation10 + $0x138] sm:$0xff]
    %v3198 = vld [vmem:[#allocation10 + $0x140] sm:$0xff]
    %v3199 = vld [vmem:[#allocation10 + $0x148] sm:$0xff]
    %v3200 = vld [vmem:[#allocation10 + $0x150] sm:$0xff]
    %v3201 = vld [vmem:[#allocation10 + $0x158] sm:$0xff]
    %v3202 = vld [vmem:[#allocation10 + $0x160] sm:$0xff]
    %v3203 = vld [vmem:[#allocation10 + $0x168] sm:$0xff]
    %v3204 = vld [vmem:[#allocation10 + $0x170] sm:$0xff]
    %v3205 = vld [vmem:[#allocation10 + $0x178] sm:$0xff]
    %v3206 = vld [vmem:[#allocation10 + $0x180] sm:$0xff]
    %v3207 = vld [vmem:[#allocation10 + $0x188] sm:$0xff]
    %v3208 = vld [vmem:[#allocation10 + $0x190] sm:$0xff]
    %v3209 = vld [vmem:[#allocation10 + $0x198] sm:$0xff]
    %v3210 = vld [vmem:[#allocation10 + $0x1a0] sm:$0xff]
    %v3211 = vld [vmem:[#allocation10 + $0x1a8] sm:$0xff]
    %v3212 = vld [vmem:[#allocation10 + $0x1b0] sm:$0xff]
    %v3213 = vld [vmem:[#allocation10 + $0x1b8] sm:$0xff]
    %v3214 = vld [vmem:[#allocation10 + $0x1c0] sm:$0xff]
    %v3215 = vld [vmem:[#allocation10 + $0x1c8] sm:$0xff]
    %v3216 = vld [vmem:[#allocation10 + $0x1d0] sm:$0xff]
    %v3217 = vld [vmem:[#allocation10 + $0x1d8] sm:$0xff]
    %v3218 = vld [vmem:[#allocation10 + $0x1e0] sm:$0xff]
    %v3219 = vld [vmem:[#allocation10 + $0x1e8] sm:$0xff]
    %v3220 = vld [vmem:[#allocation10 + $0x1f0] sm:$0xff]
    %v3221 = vld [vmem:[#allocation10 + $0x1f8] sm:$0xff]
    %v3222 = vld [vmem:[#allocation10 + $0x200] sm:$0xff]
    %v3223 = vld [vmem:[#allocation10 + $0x208] sm:$0xff]
    %v3224 = vld [vmem:[#allocation10 + $0x210] sm:$0xff]
    %v3225 = vld [vmem:[#allocation10 + $0x218] sm:$0xff]
    %v3226 = vld [vmem:[#allocation10 + $0x220] sm:$0xff]
    %v3227 = vld [vmem:[#allocation10 + $0x228] sm:$0xff]
    %v3228 = vld [vmem:[#allocation10 + $0x230] sm:$0xff]
    %v3229 = vld [vmem:[#allocation10 + $0x238] sm:$0xff]
    %v3230 = vld [vmem:[#allocation10 + $0x240] sm:$0xff]
    %v3231 = vld [vmem:[#allocation10 + $0x248] sm:$0xff]
    %v3232 = vld [vmem:[#allocation10 + $0x250] sm:$0xff]
    %v3233 = vld [vmem:[#allocation10 + $0x258] sm:$0xff]
    %v3234 = vld [vmem:[#allocation10 + $0x260] sm:$0xff]
    %v3235 = vld [vmem:[#allocation10 + $0x268] sm:$0xff]
    %v3236 = vld [vmem:[#allocation10 + $0x270] sm:$0xff]
    %v3237 = vld [vmem:[#allocation10 + $0x278] sm:$0xff]
    %v3238 = vld [vmem:[#allocation10 + $0x280] sm:$0xff]
    %v3239 = vld [vmem:[#allocation10 + $0x288] sm:$0xff]
    %v3240 = vld [vmem:[#allocation10 + $0x290] sm:$0xff]
    %v3241 = vld [vmem:[#allocation10 + $0x298] sm:$0xff]
    %v3242 = vld [vmem:[#allocation10 + $0x2a0] sm:$0xff]
    %v3243 = vld [vmem:[#allocation10 + $0x2a8] sm:$0xff]
    %v3244 = vld [vmem:[#allocation10 + $0x2b0] sm:$0xff]
    %v3245 = vld [vmem:[#allocation10 + $0x2b8] sm:$0xff]
    %v3246 = vld [vmem:[#allocation10 + $0x2c0] sm:$0xff]
    %v3247 = vld [vmem:[#allocation10 + $0x2c8] sm:$0xff]
    %v3248 = vld [vmem:[#allocation10 + $0x2d0] sm:$0xff]
    %v3249 = vld [vmem:[#allocation10 + $0x2d8] sm:$0xff]
    %v3250 = vld [vmem:[#allocation10 + $0x2e0] sm:$0xff]
    %v3251 = vld [vmem:[#allocation10 + $0x2e8] sm:$0xff]
    %v3252 = vld [vmem:[#allocation10 + $0x2f0] sm:$0xff]
    %v3253 = vld [vmem:[#allocation10 + $0x2f8] sm:$0xff]
    %v3254 = vld [vmem:[#allocation10 + $0x300] sm:$0xff]
    %v3255 = vld [vmem:[#allocation10 + $0x308] sm:$0xff]
    %v3256 = vld [vmem:[#allocation10 + $0x310] sm:$0xff]
    %v3257 = vld [vmem:[#allocation10 + $0x318] sm:$0xff]
    %v3258 = vld [vmem:[#allocation10 + $0x320] sm:$0xff]
    %v3259 = vld [vmem:[#allocation10 + $0x328] sm:$0xff]
    %v3260 = vld [vmem:[#allocation10 + $0x330] sm:$0xff]
    %v3261 = vld [vmem:[#allocation10 + $0x338] sm:$0xff]
    %v3262 = vld [vmem:[#allocation10 + $0x340] sm:$0xff]
    %v3263 = vld [vmem:[#allocation10 + $0x348] sm:$0xff]
    %v3264 = vld [vmem:[#allocation10 + $0x350] sm:$0xff]
    %v3265 = vld [vmem:[#allocation10 + $0x358] sm:$0xff]
    %v3266 = vld [vmem:[#allocation10 + $0x360] sm:$0xff]
    %v3267 = vld [vmem:[#allocation10 + $0x368] sm:$0xff]
    %v3268 = vld [vmem:[#allocation10 + $0x370] sm:$0xff]
    %v3269 = vld [vmem:[#allocation10 + $0x378] sm:$0xff]
    %v3270 = vld [vmem:[#allocation10 + $0x380] sm:$0xff]
    %v3271 = vld [vmem:[#allocation10 + $0x388] sm:$0xff]
    %v3272 = vld [vmem:[#allocation10 + $0x390] sm:$0xff]
    %v3273 = vld [vmem:[#allocation10 + $0x398] sm:$0xff]
    %v3274 = vld [vmem:[#allocation10 + $0x3a0] sm:$0xff]
    %v3275 = vld [vmem:[#allocation10 + $0x3a8] sm:$0xff]
    %v3276 = vld [vmem:[#allocation10 + $0x3b0] sm:$0xff]
    %v3277 = vld [vmem:[#allocation10 + $0x3b8] sm:$0xff]
    %v3278 = vld [vmem:[#allocation10 + $0x3c0] sm:$0xff]
    %v3279 = vld [vmem:[#allocation10 + $0x3c8] sm:$0xff]
    %v3280 = vld [vmem:[#allocation10 + $0x3d0] sm:$0xff]
    %v3281 = vld [vmem:[#allocation10 + $0x3d8] sm:$0xff]
    %v3282 = vld [vmem:[#allocation10 + $0x3e0] sm:$0xff]
    %v3283 = vld [vmem:[#allocation10 + $0x3e8] sm:$0xff]
    %v3284 = vld [vmem:[#allocation10 + $0x3f0] sm:$0xff]
    %v3285 = vld [vmem:[#allocation10 + $0x3f8] sm:$0xff]
    %v3286 = vld [vmem:[#allocation10 + $0x400] sm:$0xff]
    %v3287 = vld [vmem:[#allocation10 + $0x408] sm:$0xff]
    %v3288 = vld [vmem:[#allocation10 + $0x410] sm:$0xff]
    %v3289 = vld [vmem:[#allocation10 + $0x418] sm:$0xff]
    %v3290 = vld [vmem:[#allocation10 + $0x420] sm:$0xff]
    %v3291 = vld [vmem:[#allocation10 + $0x428] sm:$0xff]
    %v3292 = vld [vmem:[#allocation10 + $0x430] sm:$0xff]
    %v3293 = vld [vmem:[#allocation10 + $0x438] sm:$0xff]
    %v3294 = vld [vmem:[#allocation10 + $0x440] sm:$0xff]
    %v3295 = vld [vmem:[#allocation10 + $0x448] sm:$0xff]
    %v3296 = vld [vmem:[#allocation10 + $0x450] sm:$0xff]
    %v3297 = vld [vmem:[#allocation10 + $0x458] sm:$0xff]
    %v3298 = vld [vmem:[#allocation10 + $0x460] sm:$0xff]
    %v3299 = vld [vmem:[#allocation10 + $0x468] sm:$0xff]
    %v3300 = vld [vmem:[#allocation10 + $0x470] sm:$0xff]
    %v3301 = vld [vmem:[#allocation10 + $0x478] sm:$0xff]
    %v3302 = vld [vmem:[#allocation10 + $0x480] sm:$0xff]
    %v3303 = vld [vmem:[#allocation10 + $0x488] sm:$0xff]
    %v3304 = vld [vmem:[#allocation10 + $0x490] sm:$0xff]
    %v3305 = vld [vmem:[#allocation10 + $0x498] sm:$0xff]
    %v3306 = vld [vmem:[#allocation10 + $0x4a0] sm:$0xff]
    %v3307 = vld [vmem:[#allocation10 + $0x4a8] sm:$0xff]
    %v3308 = vld [vmem:[#allocation10 + $0x4b0] sm:$0xff]
    %v3309 = vld [vmem:[#allocation10 + $0x4b8] sm:$0xff]
    %v3310 = vld [vmem:[#allocation10 + $0x4c0] sm:$0xff]
    %v3311 = vld [vmem:[#allocation10 + $0x4c8] sm:$0xff]
    %v3312 = vld [vmem:[#allocation10 + $0x4d0] sm:$0xff]
    %v3313 = vld [vmem:[#allocation10 + $0x4d8] sm:$0xff]
    %v3314 = vld [vmem:[#allocation10 + $0x4e0] sm:$0xff]
    %v3315 = vld [vmem:[#allocation10 + $0x4e8] sm:$0xff]
    %v3316 = vld [vmem:[#allocation10 + $0x4f0] sm:$0xff]
    %v3317 = vld [vmem:[#allocation10 + $0x4f8] sm:$0xff]
    %v3318 = vld [vmem:[#allocation10 + $0x500] sm:$0xff]
    %v3319 = vld [vmem:[#allocation10 + $0x508] sm:$0xff]
    %v3320 = vld [vmem:[#allocation10 + $0x510] sm:$0xff]
    %v3321 = vld [vmem:[#allocation10 + $0x518] sm:$0xff]
    %v3322 = vld [vmem:[#allocation10 + $0x520] sm:$0xff]
    %v3323 = vld [vmem:[#allocation10 + $0x528] sm:$0xff]
    %v3324 = vld [vmem:[#allocation10 + $0x530] sm:$0xff]
    %v3325 = vld [vmem:[#allocation10 + $0x538] sm:$0xff]
    %v3326 = vld [vmem:[#allocation10 + $0x540] sm:$0xff]
    %v3327 = vld [vmem:[#allocation10 + $0x548] sm:$0xff]
    %v3328 = vld [vmem:[#allocation10 + $0x550] sm:$0xff]
    %v3329 = vld [vmem:[#allocation10 + $0x558] sm:$0xff]
    %v3330 = vld [vmem:[#allocation10 + $0x560] sm:$0xff]
    %v3331 = vld [vmem:[#allocation10 + $0x568] sm:$0xff]
    %v3332 = vld [vmem:[#allocation10 + $0x570] sm:$0xff]
    %v3333 = vld [vmem:[#allocation10 + $0x578] sm:$0xff]
    %v3334 = vld [vmem:[#allocation10 + $0x580] sm:$0xff]
    %v3335 = vld [vmem:[#allocation10 + $0x588] sm:$0xff]
    %v3336 = vld [vmem:[#allocation10 + $0x590] sm:$0xff]
    %v3337 = vld [vmem:[#allocation10 + $0x598] sm:$0xff]
    %v3338 = vld [vmem:[#allocation10 + $0x5a0] sm:$0xff]
    %v3339 = vld [vmem:[#allocation10 + $0x5a8] sm:$0xff]
    %v3340 = vld [vmem:[#allocation10 + $0x5b0] sm:$0xff]
    %v3341 = vld [vmem:[#allocation10 + $0x5b8] sm:$0xff]
    %v3342 = vld [vmem:[#allocation10 + $0x5c0] sm:$0xff]
    %v3343 = vld [vmem:[#allocation10 + $0x5c8] sm:$0xff]
    %v3344 = vld [vmem:[#allocation10 + $0x5d0] sm:$0xff]
    %v3345 = vld [vmem:[#allocation10 + $0x5d8] sm:$0xff]
    %v3346 = vld [vmem:[#allocation10 + $0x5e0] sm:$0xff]
    %v3347 = vld [vmem:[#allocation10 + $0x5e8] sm:$0xff]
    %v3348 = vld [vmem:[#allocation10 + $0x5f0] sm:$0xff]
    %v3349 = vld [vmem:[#allocation10 + $0x5f8] sm:$0xff]
    %v3350 = vld [vmem:[#allocation10 + $0x600] sm:$0xff]
    %v3351 = vld [vmem:[#allocation10 + $0x608] sm:$0xff]
    %v3352 = vld [vmem:[#allocation10 + $0x610] sm:$0xff]
    %v3353 = vld [vmem:[#allocation10 + $0x618] sm:$0xff]
    %v3354 = vld [vmem:[#allocation10 + $0x620] sm:$0xff]
    %v3355 = vld [vmem:[#allocation10 + $0x628] sm:$0xff]
    %v3356 = vld [vmem:[#allocation10 + $0x630] sm:$0xff]
    %v3357 = vld [vmem:[#allocation10 + $0x638] sm:$0xff]
    %v3358 = vld [vmem:[#allocation10 + $0x640] sm:$0xff]
    %v3359 = vld [vmem:[#allocation10 + $0x648] sm:$0xff]
    %v3360 = vld [vmem:[#allocation10 + $0x650] sm:$0xff]
    %v3361 = vld [vmem:[#allocation10 + $0x658] sm:$0xff]
    %v3362 = vld [vmem:[#allocation10 + $0x660] sm:$0xff]
    %v3363 = vld [vmem:[#allocation10 + $0x668] sm:$0xff]
    %v3364 = vld [vmem:[#allocation10 + $0x670] sm:$0xff]
    %v3365 = vld [vmem:[#allocation10 + $0x678] sm:$0xff]
    %v3366 = vld [vmem:[#allocation10 + $0x680] sm:$0xff]
    %v3367 = vld [vmem:[#allocation10 + $0x688] sm:$0xff]
    %v3368 = vld [vmem:[#allocation10 + $0x690] sm:$0xff]
    %v3369 = vld [vmem:[#allocation10 + $0x698] sm:$0xff]
    %v3370 = vld [vmem:[#allocation10 + $0x6a0] sm:$0xff]
    %v3371 = vld [vmem:[#allocation10 + $0x6a8] sm:$0xff]
    %v3372 = vld [vmem:[#allocation10 + $0x6b0] sm:$0xff]
    %v3373 = vld [vmem:[#allocation10 + $0x6b8] sm:$0xff]
    %v3374 = vld [vmem:[#allocation10 + $0x6c0] sm:$0xff]
    %v3375 = vld [vmem:[#allocation10 + $0x6c8] sm:$0xff]
    %v3376 = vld [vmem:[#allocation10 + $0x6d0] sm:$0xff]
    %v3377 = vld [vmem:[#allocation10 + $0x6d8] sm:$0xff]
    %v3378 = vld [vmem:[#allocation10 + $0x6e0] sm:$0xff]
    %v3379 = vld [vmem:[#allocation10 + $0x6e8] sm:$0xff]
    %v3380 = vld [vmem:[#allocation10 + $0x6f0] sm:$0xff]
    %v3381 = vld [vmem:[#allocation10 + $0x6f8] sm:$0xff]
    %v3382 = vld [vmem:[#allocation10 + $0x700] sm:$0xff]
    %v3383 = vld [vmem:[#allocation10 + $0x708] sm:$0xff]
    %v3384 = vld [vmem:[#allocation10 + $0x710] sm:$0xff]
    %v3385 = vld [vmem:[#allocation10 + $0x718] sm:$0xff]
    %v3386 = vld [vmem:[#allocation10 + $0x720] sm:$0xff]
    %v3387 = vld [vmem:[#allocation10 + $0x728] sm:$0xff]
    %v3388 = vld [vmem:[#allocation10 + $0x730] sm:$0xff]
    %v3389 = vld [vmem:[#allocation10 + $0x738] sm:$0xff]
    %v3390 = vld [vmem:[#allocation10 + $0x740] sm:$0xff]
    %v3391 = vld [vmem:[#allocation10 + $0x748] sm:$0xff]
    %v3392 = vld [vmem:[#allocation10 + $0x750] sm:$0xff]
    %v3393 = vld [vmem:[#allocation10 + $0x758] sm:$0xff]
    %v3394 = vld [vmem:[#allocation10 + $0x760] sm:$0xff]
    %v3395 = vld [vmem:[#allocation10 + $0x768] sm:$0xff]
    %v3396 = vld [vmem:[#allocation10 + $0x770] sm:$0xff]
    %v3397 = vld [vmem:[#allocation10 + $0x778] sm:$0xff]
    %v3398 = vld [vmem:[#allocation10 + $0x780] sm:$0xff]
    %v3399 = vld [vmem:[#allocation10 + $0x788] sm:$0xff]
    %v3400 = vld [vmem:[#allocation10 + $0x790] sm:$0xff]
    %v3401 = vld [vmem:[#allocation10 + $0x798] sm:$0xff]
    %v3402 = vld [vmem:[#allocation10 + $0x7a0] sm:$0xff]
    %v3403 = vld [vmem:[#allocation10 + $0x7a8] sm:$0xff]
    %v3404 = vld [vmem:[#allocation10 + $0x7b0] sm:$0xff]
    %v3405 = vld [vmem:[#allocation10 + $0x7b8] sm:$0xff]
    %v3406 = vld [vmem:[#allocation10 + $0x7c0] sm:$0xff]
    %v3407 = vld [vmem:[#allocation10 + $0x7c8] sm:$0xff]
    %v3408 = vld [vmem:[#allocation10 + $0x7d0] sm:$0xff]
    %v3409 = vld [vmem:[#allocation10 + $0x7d8] sm:$0xff]
    %v3410 = vld [vmem:[#allocation10 + $0x7e0] sm:$0xff]
    %v3411 = vld [vmem:[#allocation10 + $0x7e8] sm:$0xff]
    %v3412 = vld [vmem:[#allocation10 + $0x7f0] sm:$0xff]
    %v3413 = vld [vmem:[#allocation10 + $0x7f8] sm:$0xff]
    %v3414 = vld [vmem:[#allocation10 + $0x800] sm:$0xff]
    %v3415 = vld [vmem:[#allocation10 + $0x808] sm:$0xff]
    %v3416 = vld [vmem:[#allocation10 + $0x810] sm:$0xff]
    %v3417 = vld [vmem:[#allocation10 + $0x818] sm:$0xff]
    %v3418 = vld [vmem:[#allocation10 + $0x820] sm:$0xff]
    %v3419 = vld [vmem:[#allocation10 + $0x828] sm:$0xff]
    %v3420 = vld [vmem:[#allocation10 + $0x830] sm:$0xff]
    %v3421 = vld [vmem:[#allocation10 + $0x838] sm:$0xff]
    %v3422 = vld [vmem:[#allocation10 + $0x840] sm:$0xff]
    %v3423 = vld [vmem:[#allocation10 + $0x848] sm:$0xff]
    %v3424 = vld [vmem:[#allocation10 + $0x850] sm:$0xff]
    %v3425 = vld [vmem:[#allocation10 + $0x858] sm:$0xff]
    %v3426 = vld [vmem:[#allocation10 + $0x860] sm:$0xff]
    %v3427 = vld [vmem:[#allocation10 + $0x868] sm:$0xff]
    %v3428 = vld [vmem:[#allocation10 + $0x870] sm:$0xff]
    %v3429 = vld [vmem:[#allocation10 + $0x878] sm:$0xff]
    %v3430 = vld [vmem:[#allocation10 + $0x880] sm:$0xff]
    %v3431 = vld [vmem:[#allocation10 + $0x888] sm:$0xff]
    %v3432 = vld [vmem:[#allocation10 + $0x890] sm:$0xff]
    %v3433 = vld [vmem:[#allocation10 + $0x898] sm:$0xff]
    %v3434 = vld [vmem:[#allocation10 + $0x8a0] sm:$0xff]
    %v3435 = vld [vmem:[#allocation10 + $0x8a8] sm:$0xff]
    %v3436 = vld [vmem:[#allocation10 + $0x8b0] sm:$0xff]
    %v3437 = vld [vmem:[#allocation10 + $0x8b8] sm:$0xff]
    %v3438 = vld [vmem:[#allocation10 + $0x8c0] sm:$0xff]
    %v3439 = vld [vmem:[#allocation10 + $0x8c8] sm:$0xff]
    %v3440 = vld [vmem:[#allocation10 + $0x8d0] sm:$0xff]
    %v3441 = vld [vmem:[#allocation10 + $0x8d8] sm:$0xff]
    %v3442 = vld [vmem:[#allocation10 + $0x8e0] sm:$0xff]
    %v3443 = vld [vmem:[#allocation10 + $0x8e8] sm:$0xff]
    %v3444 = vld [vmem:[#allocation10 + $0x8f0] sm:$0xff]
    %v3445 = vld [vmem:[#allocation10 + $0x8f8] sm:$0xff]
    %v3446 = vld [vmem:[#allocation11] sm:$0x3f]
    %v3448 = vperm.slane %v3446, 0
    %v3449 = vperm.slane %v3446, 1
    %v3450 = vperm.slane %v3446, 2
    %v3451 = vperm.slane %v3446, 3
    %v3452 = vperm.slane %v3446, 4
    %v3453 = vperm.slane %v3446, 5
    %v3748 = vunpack.c.l.b16 %v3158
    %v3749 = vunpack.c.h.b16 %v3158
    %v3750 = vunpack.c.l.b16 %v3159
    %v3751 = vunpack.c.h.b16 %v3159
    %v3752 = vunpack.c.l.b16 %v3160
    %v3753 = vunpack.c.h.b16 %v3160
    %v3754 = vunpack.c.l.b16 %v3161
    %v3755 = vunpack.c.h.b16 %v3161
    %v3756 = vunpack.c.l.b16 %v3162
    %v3757 = vunpack.c.h.b16 %v3162
    %v3758 = vunpack.c.l.b16 %v3163
    %v3759 = vunpack.c.h.b16 %v3163
    %v3760 = vunpack.c.l.b16 %v3164
    %v3761 = vunpack.c.h.b16 %v3164
    %v3762 = vunpack.c.l.b16 %v3165
    %v3763 = vunpack.c.h.b16 %v3165
    %v3764 = vunpack.c.l.b16 %v3166
    %v3765 = vunpack.c.h.b16 %v3166
    %v3766 = vunpack.c.l.b16 %v3167
    %v3767 = vunpack.c.h.b16 %v3167
    %v3768 = vunpack.c.l.b16 %v3168
    %v3769 = vunpack.c.h.b16 %v3168
    %v3770 = vunpack.c.l.b16 %v3169
    %v3771 = vunpack.c.h.b16 %v3169
    %v3772 = vunpack.c.l.b16 %v3170
    %v3773 = vunpack.c.h.b16 %v3170
    %v3774 = vunpack.c.l.b16 %v3171
    %v3775 = vunpack.c.h.b16 %v3171
    %v3776 = vunpack.c.l.b16 %v3172
    %v3777 = vunpack.c.h.b16 %v3172
    %v3778 = vunpack.c.l.b16 %v3173
    %v3779 = vunpack.c.h.b16 %v3173
    %v3780 = vunpack.c.l.b16 %v3174
    %v3781 = vunpack.c.h.b16 %v3174
    %v3782 = vunpack.c.l.b16 %v3175
    %v3783 = vunpack.c.h.b16 %v3175
    %v3784 = vunpack.c.l.b16 %v3176
    %v3785 = vunpack.c.h.b16 %v3176
    %v3786 = vunpack.c.l.b16 %v3177
    %v3787 = vunpack.c.h.b16 %v3177
    %v3788 = vunpack.c.l.b16 %v3178
    %v3789 = vunpack.c.h.b16 %v3178
    %v3790 = vunpack.c.l.b16 %v3179
    %v3791 = vunpack.c.h.b16 %v3179
    %v3792 = vunpack.c.l.b16 %v3180
    %v3793 = vunpack.c.h.b16 %v3180
    %v3794 = vunpack.c.l.b16 %v3181
    %v3795 = vunpack.c.h.b16 %v3181
    %v3796 = vunpack.c.l.b16 %v3182
    %v3797 = vunpack.c.h.b16 %v3182
    %v3798 = vunpack.c.l.b16 %v3183
    %v3799 = vunpack.c.h.b16 %v3183
    %v3800 = vunpack.c.l.b16 %v3184
    %v3801 = vunpack.c.h.b16 %v3184
    %v3802 = vunpack.c.l.b16 %v3185
    %v3803 = vunpack.c.h.b16 %v3185
    %v3804 = vunpack.c.l.b16 %v3186
    %v3805 = vunpack.c.h.b16 %v3186
    %v3806 = vunpack.c.l.b16 %v3187
    %v3807 = vunpack.c.h.b16 %v3187
    %v3808 = vunpack.c.l.b16 %v3188
    %v3809 = vunpack.c.h.b16 %v3188
    %v3810 = vunpack.c.l.b16 %v3189
    %v3811 = vunpack.c.h.b16 %v3189
    %v3812 = vunpack.c.l.b16 %v3190
    %v3813 = vunpack.c.h.b16 %v3190
    %v3814 = vunpack.c.l.b16 %v3191
    %v3815 = vunpack.c.h.b16 %v3191
    %v3816 = vunpack.c.l.b16 %v3192
    %v3817 = vunpack.c.h.b16 %v3192
    %v3818 = vunpack.c.l.b16 %v3193
    %v3819 = vunpack.c.h.b16 %v3193
    %v3820 = vunpack.c.l.b16 %v3194
    %v3821 = vunpack.c.h.b16 %v3194
    %v3822 = vunpack.c.l.b16 %v3195
    %v3823 = vunpack.c.h.b16 %v3195
    %v3824 = vunpack.c.l.b16 %v3196
    %v3825 = vunpack.c.h.b16 %v3196
    %v3826 = vunpack.c.l.b16 %v3197
    %v3827 = vunpack.c.h.b16 %v3197
    %v3828 = vunpack.c.l.b16 %v3198
    %v3829 = vunpack.c.h.b16 %v3198
    %v3830 = vunpack.c.l.b16 %v3199
    %v3831 = vunpack.c.h.b16 %v3199
    %v3832 = vunpack.c.l.b16 %v3200
    %v3833 = vunpack.c.h.b16 %v3200
    %v3834 = vunpack.c.l.b16 %v3201
    %v3835 = vunpack.c.h.b16 %v3201
    %v3836 = vunpack.c.l.b16 %v3202
    %v3837 = vunpack.c.h.b16 %v3202
    %v3838 = vunpack.c.l.b16 %v3203
    %v3839 = vunpack.c.h.b16 %v3203
    %v3840 = vunpack.c.l.b16 %v3204
    %v3841 = vunpack.c.h.b16 %v3204
    %v3842 = vunpack.c.l.b16 %v3205
    %v3843 = vunpack.c.h.b16 %v3205
    %v3844 = vunpack.c.l.b16 %v3206
    %v3845 = vunpack.c.h.b16 %v3206
    %v3846 = vunpack.c.l.b16 %v3207
    %v3847 = vunpack.c.h.b16 %v3207
    %v3848 = vunpack.c.l.b16 %v3208
    %v3849 = vunpack.c.h.b16 %v3208
    %v3850 = vunpack.c.l.b16 %v3209
    %v3851 = vunpack.c.h.b16 %v3209
    %v3852 = vunpack.c.l.b16 %v3210
    %v3853 = vunpack.c.h.b16 %v3210
    %v3854 = vunpack.c.l.b16 %v3211
    %v3855 = vunpack.c.h.b16 %v3211
    %v3856 = vunpack.c.l.b16 %v3212
    %v3857 = vunpack.c.h.b16 %v3212
    %v3858 = vunpack.c.l.b16 %v3213
    %v3859 = vunpack.c.h.b16 %v3213
    %v3860 = vunpack.c.l.b16 %v3214
    %v3861 = vunpack.c.h.b16 %v3214
    %v3862 = vunpack.c.l.b16 %v3215
    %v3863 = vunpack.c.h.b16 %v3215
    %v3864 = vunpack.c.l.b16 %v3216
    %v3865 = vunpack.c.h.b16 %v3216
    %v3866 = vunpack.c.l.b16 %v3217
    %v3867 = vunpack.c.h.b16 %v3217
    %v3868 = vunpack.c.l.b16 %v3218
    %v3869 = vunpack.c.h.b16 %v3218
    %v3870 = vunpack.c.l.b16 %v3219
    %v3871 = vunpack.c.h.b16 %v3219
    %v3872 = vunpack.c.l.b16 %v3220
    %v3873 = vunpack.c.h.b16 %v3220
    %v3874 = vunpack.c.l.b16 %v3221
    %v3875 = vunpack.c.h.b16 %v3221
    %v3876 = vunpack.c.l.b16 %v3222
    %v3877 = vunpack.c.h.b16 %v3222
    %v3878 = vunpack.c.l.b16 %v3223
    %v3879 = vunpack.c.h.b16 %v3223
    %v3880 = vunpack.c.l.b16 %v3224
    %v3881 = vunpack.c.h.b16 %v3224
    %v3882 = vunpack.c.l.b16 %v3225
    %v3883 = vunpack.c.h.b16 %v3225
    %v3884 = vunpack.c.l.b16 %v3226
    %v3885 = vunpack.c.h.b16 %v3226
    %v3886 = vunpack.c.l.b16 %v3227
    %v3887 = vunpack.c.h.b16 %v3227
    %v3888 = vunpack.c.l.b16 %v3228
    %v3889 = vunpack.c.h.b16 %v3228
    %v3890 = vunpack.c.l.b16 %v3229
    %v3891 = vunpack.c.h.b16 %v3229
    %v3892 = vunpack.c.l.b16 %v3230
    %v3893 = vunpack.c.h.b16 %v3230
    %v3894 = vunpack.c.l.b16 %v3231
    %v3895 = vunpack.c.h.b16 %v3231
    %v3896 = vunpack.c.l.b16 %v3232
    %v3897 = vunpack.c.h.b16 %v3232
    %v3898 = vunpack.c.l.b16 %v3233
    %v3899 = vunpack.c.h.b16 %v3233
    %v3900 = vunpack.c.l.b16 %v3234
    %v3901 = vunpack.c.h.b16 %v3234
    %v3902 = vunpack.c.l.b16 %v3235
    %v3903 = vunpack.c.h.b16 %v3235
    %v3904 = vunpack.c.l.b16 %v3236
    %v3905 = vunpack.c.h.b16 %v3236
    %v3906 = vunpack.c.l.b16 %v3237
    %v3907 = vunpack.c.h.b16 %v3237
    %v3908 = vunpack.c.l.b16 %v3238
    %v3909 = vunpack.c.h.b16 %v3238
    %v3910 = vunpack.c.l.b16 %v3239
    %v3911 = vunpack.c.h.b16 %v3239
    %v3912 = vunpack.c.l.b16 %v3240
    %v3913 = vunpack.c.h.b16 %v3240
    %v3914 = vunpack.c.l.b16 %v3241
    %v3915 = vunpack.c.h.b16 %v3241
    %v3916 = vunpack.c.l.b16 %v3242
    %v3917 = vunpack.c.h.b16 %v3242
    %v3918 = vunpack.c.l.b16 %v3243
    %v3919 = vunpack.c.h.b16 %v3243
    %v3920 = vunpack.c.l.b16 %v3244
    %v3921 = vunpack.c.h.b16 %v3244
    %v3922 = vunpack.c.l.b16 %v3245
    %v3923 = vunpack.c.h.b16 %v3245
    %v3924 = vunpack.c.l.b16 %v3246
    %v3925 = vunpack.c.h.b16 %v3246
    %v3926 = vunpack.c.l.b16 %v3247
    %v3927 = vunpack.c.h.b16 %v3247
    %v3928 = vunpack.c.l.b16 %v3248
    %v3929 = vunpack.c.h.b16 %v3248
    %v3930 = vunpack.c.l.b16 %v3249
    %v3931 = vunpack.c.h.b16 %v3249
    %v3932 = vunpack.c.l.b16 %v3250
    %v3933 = vunpack.c.h.b16 %v3250
    %v3934 = vunpack.c.l.b16 %v3251
    %v3935 = vunpack.c.h.b16 %v3251
    %v3936 = vunpack.c.l.b16 %v3252
    %v3937 = vunpack.c.h.b16 %v3252
    %v3938 = vunpack.c.l.b16 %v3253
    %v3939 = vunpack.c.h.b16 %v3253
    %v3940 = vunpack.c.l.b16 %v3254
    %v3941 = vunpack.c.h.b16 %v3254
    %v3942 = vunpack.c.l.b16 %v3255
    %v3943 = vunpack.c.h.b16 %v3255
    %v3944 = vunpack.c.l.b16 %v3256
    %v3945 = vunpack.c.h.b16 %v3256
    %v3946 = vunpack.c.l.b16 %v3257
    %v3947 = vunpack.c.h.b16 %v3257
    %v3948 = vunpack.c.l.b16 %v3258
    %v3949 = vunpack.c.h.b16 %v3258
    %v3950 = vunpack.c.l.b16 %v3259
    %v3951 = vunpack.c.h.b16 %v3259
    %v3952 = vunpack.c.l.b16 %v3260
    %v3953 = vunpack.c.h.b16 %v3260
    %v3954 = vunpack.c.l.b16 %v3261
    %v3955 = vunpack.c.h.b16 %v3261
    %v3956 = vunpack.c.l.b16 %v3262
    %v3957 = vunpack.c.h.b16 %v3262
    %v3958 = vunpack.c.l.b16 %v3263
    %v3959 = vunpack.c.h.b16 %v3263
    %v3960 = vunpack.c.l.b16 %v3264
    %v3961 = vunpack.c.h.b16 %v3264
    %v3962 = vunpack.c.l.b16 %v3265
    %v3963 = vunpack.c.h.b16 %v3265
    %v3964 = vunpack.c.l.b16 %v3266
    %v3965 = vunpack.c.h.b16 %v3266
    %v3966 = vunpack.c.l.b16 %v3267
    %v3967 = vunpack.c.h.b16 %v3267
    %v3968 = vunpack.c.l.b16 %v3268
    %v3969 = vunpack.c.h.b16 %v3268
    %v3970 = vunpack.c.l.b16 %v3269
    %v3971 = vunpack.c.h.b16 %v3269
    %v3972 = vunpack.c.l.b16 %v3270
    %v3973 = vunpack.c.h.b16 %v3270
    %v3974 = vunpack.c.l.b16 %v3271
    %v3975 = vunpack.c.h.b16 %v3271
    %v3976 = vunpack.c.l.b16 %v3272
    %v3977 = vunpack.c.h.b16 %v3272
    %v3978 = vunpack.c.l.b16 %v3273
    %v3979 = vunpack.c.h.b16 %v3273
    %v3980 = vunpack.c.l.b16 %v3274
    %v3981 = vunpack.c.h.b16 %v3274
    %v3982 = vunpack.c.l.b16 %v3275
    %v3983 = vunpack.c.h.b16 %v3275
    %v3984 = vunpack.c.l.b16 %v3276
    %v3985 = vunpack.c.h.b16 %v3276
    %v3986 = vunpack.c.l.b16 %v3277
    %v3987 = vunpack.c.h.b16 %v3277
    %v3988 = vunpack.c.l.b16 %v3278
    %v3989 = vunpack.c.h.b16 %v3278
    %v3990 = vunpack.c.l.b16 %v3279
    %v3991 = vunpack.c.h.b16 %v3279
    %v3992 = vunpack.c.l.b16 %v3280
    %v3993 = vunpack.c.h.b16 %v3280
    %v3994 = vunpack.c.l.b16 %v3281
    %v3995 = vunpack.c.h.b16 %v3281
    %v3996 = vunpack.c.l.b16 %v3282
    %v3997 = vunpack.c.h.b16 %v3282
    %v3998 = vunpack.c.l.b16 %v3283
    %v3999 = vunpack.c.h.b16 %v3283
    %v4000 = vunpack.c.l.b16 %v3284
    %v4001 = vunpack.c.h.b16 %v3284
    %v4002 = vunpack.c.l.b16 %v3285
    %v4003 = vunpack.c.h.b16 %v3285
    %v4004 = vunpack.c.l.b16 %v3286
    %v4005 = vunpack.c.h.b16 %v3286
    %v4006 = vunpack.c.l.b16 %v3287
    %v4007 = vunpack.c.h.b16 %v3287
    %v4008 = vunpack.c.l.b16 %v3288
    %v4009 = vunpack.c.h.b16 %v3288
    %v4010 = vunpack.c.l.b16 %v3289
    %v4011 = vunpack.c.h.b16 %v3289
    %v4012 = vunpack.c.l.b16 %v3290
    %v4013 = vunpack.c.h.b16 %v3290
    %v4014 = vunpack.c.l.b16 %v3291
    %v4015 = vunpack.c.h.b16 %v3291
    %v4016 = vunpack.c.l.b16 %v3292
    %v4017 = vunpack.c.h.b16 %v3292
    %v4018 = vunpack.c.l.b16 %v3293
    %v4019 = vunpack.c.h.b16 %v3293
    %v4020 = vunpack.c.l.b16 %v3294
    %v4021 = vunpack.c.h.b16 %v3294
    %v4022 = vunpack.c.l.b16 %v3295
    %v4023 = vunpack.c.h.b16 %v3295
    %v4024 = vunpack.c.l.b16 %v3296
    %v4025 = vunpack.c.h.b16 %v3296
    %v4026 = vunpack.c.l.b16 %v3297
    %v4027 = vunpack.c.h.b16 %v3297
    %v4028 = vunpack.c.l.b16 %v3298
    %v4029 = vunpack.c.h.b16 %v3298
    %v4030 = vunpack.c.l.b16 %v3299
    %v4031 = vunpack.c.h.b16 %v3299
    %v4032 = vunpack.c.l.b16 %v3300
    %v4033 = vunpack.c.h.b16 %v3300
    %v4034 = vunpack.c.l.b16 %v3301
    %v4035 = vunpack.c.h.b16 %v3301
    %v4036 = vunpack.c.l.b16 %v3302
    %v4037 = vunpack.c.h.b16 %v3302
    %v4038 = vunpack.c.l.b16 %v3303
    %v4039 = vunpack.c.h.b16 %v3303
    %v4040 = vunpack.c.l.b16 %v3304
    %v4041 = vunpack.c.h.b16 %v3304
    %v4042 = vunpack.c.l.b16 %v3305
    %v4043 = vunpack.c.h.b16 %v3305
    %v4044 = vunpack.c.l.b16 %v3306
    %v4045 = vunpack.c.h.b16 %v3306
    %v4046 = vunpack.c.l.b16 %v3307
    %v4047 = vunpack.c.h.b16 %v3307
    %v4048 = vunpack.c.l.b16 %v3308
    %v4049 = vunpack.c.h.b16 %v3308
    %v4050 = vunpack.c.l.b16 %v3309
    %v4051 = vunpack.c.h.b16 %v3309
    %v4052 = vunpack.c.l.b16 %v3310
    %v4053 = vunpack.c.h.b16 %v3310
    %v4054 = vunpack.c.l.b16 %v3311
    %v4055 = vunpack.c.h.b16 %v3311
    %v4056 = vunpack.c.l.b16 %v3312
    %v4057 = vunpack.c.h.b16 %v3312
    %v4058 = vunpack.c.l.b16 %v3313
    %v4059 = vunpack.c.h.b16 %v3313
    %v4060 = vunpack.c.l.b16 %v3314
    %v4061 = vunpack.c.h.b16 %v3314
    %v4062 = vunpack.c.l.b16 %v3315
    %v4063 = vunpack.c.h.b16 %v3315
    %v4064 = vunpack.c.l.b16 %v3316
    %v4065 = vunpack.c.h.b16 %v3316
    %v4066 = vunpack.c.l.b16 %v3317
    %v4067 = vunpack.c.h.b16 %v3317
    %v4068 = vunpack.c.l.b16 %v3318
    %v4069 = vunpack.c.h.b16 %v3318
    %v4070 = vunpack.c.l.b16 %v3319
    %v4071 = vunpack.c.h.b16 %v3319
    %v4072 = vunpack.c.l.b16 %v3320
    %v4073 = vunpack.c.h.b16 %v3320
    %v4074 = vunpack.c.l.b16 %v3321
    %v4075 = vunpack.c.h.b16 %v3321
    %v4076 = vunpack.c.l.b16 %v3322
    %v4077 = vunpack.c.h.b16 %v3322
    %v4078 = vunpack.c.l.b16 %v3323
    %v4079 = vunpack.c.h.b16 %v3323
    %v4080 = vunpack.c.l.b16 %v3324
    %v4081 = vunpack.c.h.b16 %v3324
    %v4082 = vunpack.c.l.b16 %v3325
    %v4083 = vunpack.c.h.b16 %v3325
    %v4084 = vunpack.c.l.b16 %v3326
    %v4085 = vunpack.c.h.b16 %v3326
    %v4086 = vunpack.c.l.b16 %v3327
    %v4087 = vunpack.c.h.b16 %v3327
    %v4088 = vunpack.c.l.b16 %v3328
    %v4089 = vunpack.c.h.b16 %v3328
    %v4090 = vunpack.c.l.b16 %v3329
    %v4091 = vunpack.c.h.b16 %v3329
    %v4092 = vunpack.c.l.b16 %v3330
    %v4093 = vunpack.c.h.b16 %v3330
    %v4094 = vunpack.c.l.b16 %v3331
    %v4095 = vunpack.c.h.b16 %v3331
    %v4096 = vunpack.c.l.b16 %v3332
    %v4097 = vunpack.c.h.b16 %v3332
    %v4098 = vunpack.c.l.b16 %v3333
    %v4099 = vunpack.c.h.b16 %v3333
    %v4100 = vunpack.c.l.b16 %v3334
    %v4101 = vunpack.c.h.b16 %v3334
    %v4102 = vunpack.c.l.b16 %v3335
    %v4103 = vunpack.c.h.b16 %v3335
    %v4104 = vunpack.c.l.b16 %v3336
    %v4105 = vunpack.c.h.b16 %v3336
    %v4106 = vunpack.c.l.b16 %v3337
    %v4107 = vunpack.c.h.b16 %v3337
    %v4108 = vunpack.c.l.b16 %v3338
    %v4109 = vunpack.c.h.b16 %v3338
    %v4110 = vunpack.c.l.b16 %v3339
    %v4111 = vunpack.c.h.b16 %v3339
    %v4112 = vunpack.c.l.b16 %v3340
    %v4113 = vunpack.c.h.b16 %v3340
    %v4114 = vunpack.c.l.b16 %v3341
    %v4115 = vunpack.c.h.b16 %v3341
    %v4116 = vunpack.c.l.b16 %v3342
    %v4117 = vunpack.c.h.b16 %v3342
    %v4118 = vunpack.c.l.b16 %v3343
    %v4119 = vunpack.c.h.b16 %v3343
    %v4120 = vunpack.c.l.b16 %v3344
    %v4121 = vunpack.c.h.b16 %v3344
    %v4122 = vunpack.c.l.b16 %v3345
    %v4123 = vunpack.c.h.b16 %v3345
    %v4124 = vunpack.c.l.b16 %v3346
    %v4125 = vunpack.c.h.b16 %v3346
    %v4126 = vunpack.c.l.b16 %v3347
    %v4127 = vunpack.c.h.b16 %v3347
    %v4128 = vunpack.c.l.b16 %v3348
    %v4129 = vunpack.c.h.b16 %v3348
    %v4130 = vunpack.c.l.b16 %v3349
    %v4131 = vunpack.c.h.b16 %v3349
    %v4132 = vunpack.c.l.b16 %v3350
    %v4133 = vunpack.c.h.b16 %v3350
    %v4134 = vunpack.c.l.b16 %v3351
    %v4135 = vunpack.c.h.b16 %v3351
    %v4136 = vunpack.c.l.b16 %v3352
    %v4137 = vunpack.c.h.b16 %v3352
    %v4138 = vunpack.c.l.b16 %v3353
    %v4139 = vunpack.c.h.b16 %v3353
    %v4140 = vunpack.c.l.b16 %v3354
    %v4141 = vunpack.c.h.b16 %v3354
    %v4142 = vunpack.c.l.b16 %v3355
    %v4143 = vunpack.c.h.b16 %v3355
    %v4144 = vunpack.c.l.b16 %v3356
    %v4145 = vunpack.c.h.b16 %v3356
    %v4146 = vunpack.c.l.b16 %v3357
    %v4147 = vunpack.c.h.b16 %v3357
    %v4148 = vunpack.c.l.b16 %v3358
    %v4149 = vunpack.c.h.b16 %v3358
    %v4150 = vunpack.c.l.b16 %v3359
    %v4151 = vunpack.c.h.b16 %v3359
    %v4152 = vunpack.c.l.b16 %v3360
    %v4153 = vunpack.c.h.b16 %v3360
    %v4154 = vunpack.c.l.b16 %v3361
    %v4155 = vunpack.c.h.b16 %v3361
    %v4156 = vunpack.c.l.b16 %v3362
    %v4157 = vunpack.c.h.b16 %v3362
    %v4158 = vunpack.c.l.b16 %v3363
    %v4159 = vunpack.c.h.b16 %v3363
    %v4160 = vunpack.c.l.b16 %v3364
    %v4161 = vunpack.c.h.b16 %v3364
    %v4162 = vunpack.c.l.b16 %v3365
    %v4163 = vunpack.c.h.b16 %v3365
    %v4164 = vunpack.c.l.b16 %v3366
    %v4165 = vunpack.c.h.b16 %v3366
    %v4166 = vunpack.c.l.b16 %v3367
    %v4167 = vunpack.c.h.b16 %v3367
    %v4168 = vunpack.c.l.b16 %v3368
    %v4169 = vunpack.c.h.b16 %v3368
    %v4170 = vunpack.c.l.b16 %v3369
    %v4171 = vunpack.c.h.b16 %v3369
    %v4172 = vunpack.c.l.b16 %v3370
    %v4173 = vunpack.c.h.b16 %v3370
    %v4174 = vunpack.c.l.b16 %v3371
    %v4175 = vunpack.c.h.b16 %v3371
    %v4176 = vunpack.c.l.b16 %v3372
    %v4177 = vunpack.c.h.b16 %v3372
    %v4178 = vunpack.c.l.b16 %v3373
    %v4179 = vunpack.c.h.b16 %v3373
    %v4180 = vunpack.c.l.b16 %v3374
    %v4181 = vunpack.c.h.b16 %v3374
    %v4182 = vunpack.c.l.b16 %v3375
    %v4183 = vunpack.c.h.b16 %v3375
    %v4184 = vunpack.c.l.b16 %v3376
    %v4185 = vunpack.c.h.b16 %v3376
    %v4186 = vunpack.c.l.b16 %v3377
    %v4187 = vunpack.c.h.b16 %v3377
    %v4188 = vunpack.c.l.b16 %v3378
    %v4189 = vunpack.c.h.b16 %v3378
    %v4190 = vunpack.c.l.b16 %v3379
    %v4191 = vunpack.c.h.b16 %v3379
    %v4192 = vunpack.c.l.b16 %v3380
    %v4193 = vunpack.c.h.b16 %v3380
    %v4194 = vunpack.c.l.b16 %v3381
    %v4195 = vunpack.c.h.b16 %v3381
    %v4196 = vunpack.c.l.b16 %v3382
    %v4197 = vunpack.c.h.b16 %v3382
    %v4198 = vunpack.c.l.b16 %v3383
    %v4199 = vunpack.c.h.b16 %v3383
    %v4200 = vunpack.c.l.b16 %v3384
    %v4201 = vunpack.c.h.b16 %v3384
    %v4202 = vunpack.c.l.b16 %v3385
    %v4203 = vunpack.c.h.b16 %v3385
    %v4204 = vunpack.c.l.b16 %v3386
    %v4205 = vunpack.c.h.b16 %v3386
    %v4206 = vunpack.c.l.b16 %v3387
    %v4207 = vunpack.c.h.b16 %v3387
    %v4208 = vunpack.c.l.b16 %v3388
    %v4209 = vunpack.c.h.b16 %v3388
    %v4210 = vunpack.c.l.b16 %v3389
    %v4211 = vunpack.c.h.b16 %v3389
    %v4212 = vunpack.c.l.b16 %v3390
    %v4213 = vunpack.c.h.b16 %v3390
    %v4214 = vunpack.c.l.b16 %v3391
    %v4215 = vunpack.c.h.b16 %v3391
    %v4216 = vunpack.c.l.b16 %v3392
    %v4217 = vunpack.c.h.b16 %v3392
    %v4218 = vunpack.c.l.b16 %v3393
    %v4219 = vunpack.c.h.b16 %v3393
    %v4220 = vunpack.c.l.b16 %v3394
    %v4221 = vunpack.c.h.b16 %v3394
    %v4222 = vunpack.c.l.b16 %v3395
    %v4223 = vunpack.c.h.b16 %v3395
    %v4224 = vunpack.c.l.b16 %v3396
    %v4225 = vunpack.c.h.b16 %v3396
    %v4226 = vunpack.c.l.b16 %v3397
    %v4227 = vunpack.c.h.b16 %v3397
    %v4228 = vunpack.c.l.b16 %v3398
    %v4229 = vunpack.c.h.b16 %v3398
    %v4230 = vunpack.c.l.b16 %v3399
    %v4231 = vunpack.c.h.b16 %v3399
    %v4232 = vunpack.c.l.b16 %v3400
    %v4233 = vunpack.c.h.b16 %v3400
    %v4234 = vunpack.c.l.b16 %v3401
    %v4235 = vunpack.c.h.b16 %v3401
    %v4236 = vunpack.c.l.b16 %v3402
    %v4237 = vunpack.c.h.b16 %v3402
    %v4238 = vunpack.c.l.b16 %v3403
    %v4239 = vunpack.c.h.b16 %v3403
    %v4240 = vunpack.c.l.b16 %v3404
    %v4241 = vunpack.c.h.b16 %v3404
    %v4242 = vunpack.c.l.b16 %v3405
    %v4243 = vunpack.c.h.b16 %v3405
    %v4244 = vunpack.c.l.b16 %v3406
    %v4245 = vunpack.c.h.b16 %v3406
    %v4246 = vunpack.c.l.b16 %v3407
    %v4247 = vunpack.c.h.b16 %v3407
    %v4248 = vunpack.c.l.b16 %v3408
    %v4249 = vunpack.c.h.b16 %v3408
    %v4250 = vunpack.c.l.b16 %v3409
    %v4251 = vunpack.c.h.b16 %v3409
    %v4252 = vunpack.c.l.b16 %v3410
    %v4253 = vunpack.c.h.b16 %v3410
    %v4254 = vunpack.c.l.b16 %v3411
    %v4255 = vunpack.c.h.b16 %v3411
    %v4256 = vunpack.c.l.b16 %v3412
    %v4257 = vunpack.c.h.b16 %v3412
    %v4258 = vunpack.c.l.b16 %v3413
    %v4259 = vunpack.c.h.b16 %v3413
    %v4260 = vunpack.c.l.b16 %v3414
    %v4261 = vunpack.c.h.b16 %v3414
    %v4262 = vunpack.c.l.b16 %v3415
    %v4263 = vunpack.c.h.b16 %v3415
    %v4264 = vunpack.c.l.b16 %v3416
    %v4265 = vunpack.c.h.b16 %v3416
    %v4266 = vunpack.c.l.b16 %v3417
    %v4267 = vunpack.c.h.b16 %v3417
    %v4268 = vunpack.c.l.b16 %v3418
    %v4269 = vunpack.c.h.b16 %v3418
    %v4270 = vunpack.c.l.b16 %v3419
    %v4271 = vunpack.c.h.b16 %v3419
    %v4272 = vunpack.c.l.b16 %v3420
    %v4273 = vunpack.c.h.b16 %v3420
    %v4274 = vunpack.c.l.b16 %v3421
    %v4275 = vunpack.c.h.b16 %v3421
    %v4276 = vunpack.c.l.b16 %v3422
    %v4277 = vunpack.c.h.b16 %v3422
    %v4278 = vunpack.c.l.b16 %v3423
    %v4279 = vunpack.c.h.b16 %v3423
    %v4280 = vunpack.c.l.b16 %v3424
    %v4281 = vunpack.c.h.b16 %v3424
    %v4282 = vunpack.c.l.b16 %v3425
    %v4283 = vunpack.c.h.b16 %v3425
    %v4284 = vunpack.c.l.b16 %v3426
    %v4285 = vunpack.c.h.b16 %v3426
    %v4286 = vunpack.c.l.b16 %v3427
    %v4287 = vunpack.c.h.b16 %v3427
    %v4288 = vunpack.c.l.b16 %v3428
    %v4289 = vunpack.c.h.b16 %v3428
    %v4290 = vunpack.c.l.b16 %v3429
    %v4291 = vunpack.c.h.b16 %v3429
    %v4292 = vunpack.c.l.b16 %v3430
    %v4293 = vunpack.c.h.b16 %v3430
    %v4294 = vunpack.c.l.b16 %v3431
    %v4295 = vunpack.c.h.b16 %v3431
    %v4296 = vunpack.c.l.b16 %v3432
    %v4297 = vunpack.c.h.b16 %v3432
    %v4298 = vunpack.c.l.b16 %v3433
    %v4299 = vunpack.c.h.b16 %v3433
    %v4300 = vunpack.c.l.b16 %v3434
    %v4301 = vunpack.c.h.b16 %v3434
    %v4302 = vunpack.c.l.b16 %v3435
    %v4303 = vunpack.c.h.b16 %v3435
    %v4304 = vunpack.c.l.b16 %v3436
    %v4305 = vunpack.c.h.b16 %v3436
    %v4306 = vunpack.c.l.b16 %v3437
    %v4307 = vunpack.c.h.b16 %v3437
    %v4308 = vunpack.c.l.b16 %v3438
    %v4309 = vunpack.c.h.b16 %v3438
    %v4310 = vunpack.c.l.b16 %v3439
    %v4311 = vunpack.c.h.b16 %v3439
    %v4312 = vunpack.c.l.b16 %v3440
    %v4313 = vunpack.c.h.b16 %v3440
    %v4314 = vunpack.c.l.b16 %v3441
    %v4315 = vunpack.c.h.b16 %v3441
    %v4316 = vunpack.c.l.b16 %v3442
    %v4317 = vunpack.c.h.b16 %v3442
    %v4318 = vunpack.c.l.b16 %v3443
    %v4319 = vunpack.c.h.b16 %v3443
    %v4320 = vunpack.c.l.b16 %v3444
    %v4321 = vunpack.c.h.b16 %v3444
    %v4322 = vunpack.c.l.b16 %v3445
    %v4323 = vunpack.c.h.b16 %v3445
    %v4324 = vpack.c.b16 %v3754, %v3748
    %v4325 = vpack.c.b16 %v3755, %v3749
    %v4326 = vpack.c.b16 %v3756, %v3750
    %v4327 = vpack.c.b16 %v3757, %v3751
    %v4328 = vpack.c.b16 %v3758, %v3752
    %v4329 = vpack.c.b16 %v3759, %v3753
    %v4330 = vpack.c.b16 %v3766, %v3760
    %v4331 = vpack.c.b16 %v3767, %v3761
    %v4332 = vpack.c.b16 %v3768, %v3762
    %v4333 = vpack.c.b16 %v3769, %v3763
    %v4334 = vpack.c.b16 %v3770, %v3764
    %v4335 = vpack.c.b16 %v3771, %v3765
    %v4336 = vpack.c.b16 %v3778, %v3772
    %v4337 = vpack.c.b16 %v3779, %v3773
    %v4338 = vpack.c.b16 %v3780, %v3774
    %v4339 = vpack.c.b16 %v3781, %v3775
    %v4340 = vpack.c.b16 %v3782, %v3776
    %v4341 = vpack.c.b16 %v3783, %v3777
    %v4342 = vpack.c.b16 %v3790, %v3784
    %v4343 = vpack.c.b16 %v3791, %v3785
    %v4344 = vpack.c.b16 %v3792, %v3786
    %v4345 = vpack.c.b16 %v3793, %v3787
    %v4346 = vpack.c.b16 %v3794, %v3788
    %v4347 = vpack.c.b16 %v3795, %v3789
    %v4348 = vpack.c.b16 %v3802, %v3796
    %v4349 = vpack.c.b16 %v3803, %v3797
    %v4350 = vpack.c.b16 %v3804, %v3798
    %v4351 = vpack.c.b16 %v3805, %v3799
    %v4352 = vpack.c.b16 %v3806, %v3800
    %v4353 = vpack.c.b16 %v3807, %v3801
    %v4354 = vpack.c.b16 %v3814, %v3808
    %v4355 = vpack.c.b16 %v3815, %v3809
    %v4356 = vpack.c.b16 %v3816, %v3810
    %v4357 = vpack.c.b16 %v3817, %v3811
    %v4358 = vpack.c.b16 %v3818, %v3812
    %v4359 = vpack.c.b16 %v3819, %v3813
    %v4360 = vpack.c.b16 %v3826, %v3820
    %v4361 = vpack.c.b16 %v3827, %v3821
    %v4362 = vpack.c.b16 %v3828, %v3822
    %v4363 = vpack.c.b16 %v3829, %v3823
    %v4364 = vpack.c.b16 %v3830, %v3824
    %v4365 = vpack.c.b16 %v3831, %v3825
    %v4366 = vpack.c.b16 %v3838, %v3832
    %v4367 = vpack.c.b16 %v3839, %v3833
    %v4368 = vpack.c.b16 %v3840, %v3834
    %v4369 = vpack.c.b16 %v3841, %v3835
    %v4370 = vpack.c.b16 %v3842, %v3836
    %v4371 = vpack.c.b16 %v3843, %v3837
    %v4372 = vpack.c.b16 %v3850, %v3844
    %v4373 = vpack.c.b16 %v3851, %v3845
    %v4374 = vpack.c.b16 %v3852, %v3846
    %v4375 = vpack.c.b16 %v3853, %v3847
    %v4376 = vpack.c.b16 %v3854, %v3848
    %v4377 = vpack.c.b16 %v3855, %v3849
    %v4378 = vpack.c.b16 %v3862, %v3856
    %v4379 = vpack.c.b16 %v3863, %v3857
    %v4380 = vpack.c.b16 %v3864, %v3858
    %v4381 = vpack.c.b16 %v3865, %v3859
    %v4382 = vpack.c.b16 %v3866, %v3860
    %v4383 = vpack.c.b16 %v3867, %v3861
    %v4384 = vpack.c.b16 %v3874, %v3868
    %v4385 = vpack.c.b16 %v3875, %v3869
    %v4386 = vpack.c.b16 %v3876, %v3870
    %v4387 = vpack.c.b16 %v3877, %v3871
    %v4388 = vpack.c.b16 %v3878, %v3872
    %v4389 = vpack.c.b16 %v3879, %v3873
    %v4390 = vpack.c.b16 %v3886, %v3880
    %v4391 = vpack.c.b16 %v3887, %v3881
    %v4392 = vpack.c.b16 %v3888, %v3882
    %v4393 = vpack.c.b16 %v3889, %v3883
    %v4394 = vpack.c.b16 %v3890, %v3884
    %v4395 = vpack.c.b16 %v3891, %v3885
    %v4396 = vpack.c.b16 %v3898, %v3892
    %v4397 = vpack.c.b16 %v3899, %v3893
    %v4398 = vpack.c.b16 %v3900, %v3894
    %v4399 = vpack.c.b16 %v3901, %v3895
    %v4400 = vpack.c.b16 %v3902, %v3896
    %v4401 = vpack.c.b16 %v3903, %v3897
    %v4402 = vpack.c.b16 %v3910, %v3904
    %v4403 = vpack.c.b16 %v3911, %v3905
    %v4404 = vpack.c.b16 %v3912, %v3906
    %v4405 = vpack.c.b16 %v3913, %v3907
    %v4406 = vpack.c.b16 %v3914, %v3908
    %v4407 = vpack.c.b16 %v3915, %v3909
    %v4408 = vpack.c.b16 %v3922, %v3916
    %v4409 = vpack.c.b16 %v3923, %v3917
    %v4410 = vpack.c.b16 %v3924, %v3918
    %v4411 = vpack.c.b16 %v3925, %v3919
    %v4412 = vpack.c.b16 %v3926, %v3920
    %v4413 = vpack.c.b16 %v3927, %v3921
    %v4414 = vpack.c.b16 %v3934, %v3928
    %v4415 = vpack.c.b16 %v3935, %v3929
    %v4416 = vpack.c.b16 %v3936, %v3930
    %v4417 = vpack.c.b16 %v3937, %v3931
    %v4418 = vpack.c.b16 %v3938, %v3932
    %v4419 = vpack.c.b16 %v3939, %v3933
    %v4420 = vpack.c.b16 %v3946, %v3940
    %v4421 = vpack.c.b16 %v3947, %v3941
    %v4422 = vpack.c.b16 %v3948, %v3942
    %v4423 = vpack.c.b16 %v3949, %v3943
    %v4424 = vpack.c.b16 %v3950, %v3944
    %v4425 = vpack.c.b16 %v3951, %v3945
    %v4426 = vpack.c.b16 %v3958, %v3952
    %v4427 = vpack.c.b16 %v3959, %v3953
    %v4428 = vpack.c.b16 %v3960, %v3954
    %v4429 = vpack.c.b16 %v3961, %v3955
    %v4430 = vpack.c.b16 %v3962, %v3956
    %v4431 = vpack.c.b16 %v3963, %v3957
    %v4432 = vpack.c.b16 %v3970, %v3964
    %v4433 = vpack.c.b16 %v3971, %v3965
    %v4434 = vpack.c.b16 %v3972, %v3966
    %v4435 = vpack.c.b16 %v3973, %v3967
    %v4436 = vpack.c.b16 %v3974, %v3968
    %v4437 = vpack.c.b16 %v3975, %v3969
    %v4438 = vpack.c.b16 %v3982, %v3976
    %v4439 = vpack.c.b16 %v3983, %v3977
    %v4440 = vpack.c.b16 %v3984, %v3978
    %v4441 = vpack.c.b16 %v3985, %v3979
    %v4442 = vpack.c.b16 %v3986, %v3980
    %v4443 = vpack.c.b16 %v3987, %v3981
    %v4444 = vpack.c.b16 %v3994, %v3988
    %v4445 = vpack.c.b16 %v3995, %v3989
    %v4446 = vpack.c.b16 %v3996, %v3990
    %v4447 = vpack.c.b16 %v3997, %v3991
    %v4448 = vpack.c.b16 %v3998, %v3992
    %v4449 = vpack.c.b16 %v3999, %v3993
    %v4450 = vpack.c.b16 %v4006, %v4000
    %v4451 = vpack.c.b16 %v4007, %v4001
    %v4452 = vpack.c.b16 %v4008, %v4002
    %v4453 = vpack.c.b16 %v4009, %v4003
    %v4454 = vpack.c.b16 %v4010, %v4004
    %v4455 = vpack.c.b16 %v4011, %v4005
    %v4456 = vpack.c.b16 %v4018, %v4012
    %v4457 = vpack.c.b16 %v4019, %v4013
    %v4458 = vpack.c.b16 %v4020, %v4014
    %v4459 = vpack.c.b16 %v4021, %v4015
    %v4460 = vpack.c.b16 %v4022, %v4016
    %v4461 = vpack.c.b16 %v4023, %v4017
    %v4462 = vpack.c.b16 %v4030, %v4024
    %v4463 = vpack.c.b16 %v4031, %v4025
    %v4464 = vpack.c.b16 %v4032, %v4026
    %v4465 = vpack.c.b16 %v4033, %v4027
    %v4466 = vpack.c.b16 %v4034, %v4028
    %v4467 = vpack.c.b16 %v4035, %v4029
    %v4468 = vpack.c.b16 %v4042, %v4036
    %v4469 = vpack.c.b16 %v4043, %v4037
    %v4470 = vpack.c.b16 %v4044, %v4038
    %v4471 = vpack.c.b16 %v4045, %v4039
    %v4472 = vpack.c.b16 %v4046, %v4040
    %v4473 = vpack.c.b16 %v4047, %v4041
    %v4474 = vpack.c.b16 %v4054, %v4048
    %v4475 = vpack.c.b16 %v4055, %v4049
    %v4476 = vpack.c.b16 %v4056, %v4050
    %v4477 = vpack.c.b16 %v4057, %v4051
    %v4478 = vpack.c.b16 %v4058, %v4052
    %v4479 = vpack.c.b16 %v4059, %v4053
    %v4480 = vpack.c.b16 %v4066, %v4060
    %v4481 = vpack.c.b16 %v4067, %v4061
    %v4482 = vpack.c.b16 %v4068, %v4062
    %v4483 = vpack.c.b16 %v4069, %v4063
    %v4484 = vpack.c.b16 %v4070, %v4064
    %v4485 = vpack.c.b16 %v4071, %v4065
    %v4486 = vpack.c.b16 %v4078, %v4072
    %v4487 = vpack.c.b16 %v4079, %v4073
    %v4488 = vpack.c.b16 %v4080, %v4074
    %v4489 = vpack.c.b16 %v4081, %v4075
    %v4490 = vpack.c.b16 %v4082, %v4076
    %v4491 = vpack.c.b16 %v4083, %v4077
    %v4492 = vpack.c.b16 %v4090, %v4084
    %v4493 = vpack.c.b16 %v4091, %v4085
    %v4494 = vpack.c.b16 %v4092, %v4086
    %v4495 = vpack.c.b16 %v4093, %v4087
    %v4496 = vpack.c.b16 %v4094, %v4088
    %v4497 = vpack.c.b16 %v4095, %v4089
    %v4498 = vpack.c.b16 %v4102, %v4096
    %v4499 = vpack.c.b16 %v4103, %v4097
    %v4500 = vpack.c.b16 %v4104, %v4098
    %v4501 = vpack.c.b16 %v4105, %v4099
    %v4502 = vpack.c.b16 %v4106, %v4100
    %v4503 = vpack.c.b16 %v4107, %v4101
    %v4504 = vpack.c.b16 %v4114, %v4108
    %v4505 = vpack.c.b16 %v4115, %v4109
    %v4506 = vpack.c.b16 %v4116, %v4110
    %v4507 = vpack.c.b16 %v4117, %v4111
    %v4508 = vpack.c.b16 %v4118, %v4112
    %v4509 = vpack.c.b16 %v4119, %v4113
    %v4510 = vpack.c.b16 %v4126, %v4120
    %v4511 = vpack.c.b16 %v4127, %v4121
    %v4512 = vpack.c.b16 %v4128, %v4122
    %v4513 = vpack.c.b16 %v4129, %v4123
    %v4514 = vpack.c.b16 %v4130, %v4124
    %v4515 = vpack.c.b16 %v4131, %v4125
    %v4516 = vpack.c.b16 %v4138, %v4132
    %v4517 = vpack.c.b16 %v4139, %v4133
    %v4518 = vpack.c.b16 %v4140, %v4134
    %v4519 = vpack.c.b16 %v4141, %v4135
    %v4520 = vpack.c.b16 %v4142, %v4136
    %v4521 = vpack.c.b16 %v4143, %v4137
    %v4522 = vpack.c.b16 %v4150, %v4144
    %v4523 = vpack.c.b16 %v4151, %v4145
    %v4524 = vpack.c.b16 %v4152, %v4146
    %v4525 = vpack.c.b16 %v4153, %v4147
    %v4526 = vpack.c.b16 %v4154, %v4148
    %v4527 = vpack.c.b16 %v4155, %v4149
    %v4528 = vpack.c.b16 %v4162, %v4156
    %v4529 = vpack.c.b16 %v4163, %v4157
    %v4530 = vpack.c.b16 %v4164, %v4158
    %v4531 = vpack.c.b16 %v4165, %v4159
    %v4532 = vpack.c.b16 %v4166, %v4160
    %v4533 = vpack.c.b16 %v4167, %v4161
    %v4534 = vpack.c.b16 %v4174, %v4168
    %v4535 = vpack.c.b16 %v4175, %v4169
    %v4536 = vpack.c.b16 %v4176, %v4170
    %v4537 = vpack.c.b16 %v4177, %v4171
    %v4538 = vpack.c.b16 %v4178, %v4172
    %v4539 = vpack.c.b16 %v4179, %v4173
    %v4540 = vpack.c.b16 %v4186, %v4180
    %v4541 = vpack.c.b16 %v4187, %v4181
    %v4542 = vpack.c.b16 %v4188, %v4182
    %v4543 = vpack.c.b16 %v4189, %v4183
    %v4544 = vpack.c.b16 %v4190, %v4184
    %v4545 = vpack.c.b16 %v4191, %v4185
    %v4546 = vpack.c.b16 %v4198, %v4192
    %v4547 = vpack.c.b16 %v4199, %v4193
    %v4548 = vpack.c.b16 %v4200, %v4194
    %v4549 = vpack.c.b16 %v4201, %v4195
    %v4550 = vpack.c.b16 %v4202, %v4196
    %v4551 = vpack.c.b16 %v4203, %v4197
    %v4552 = vpack.c.b16 %v4210, %v4204
    %v4553 = vpack.c.b16 %v4211, %v4205
    %v4554 = vpack.c.b16 %v4212, %v4206
    %v4555 = vpack.c.b16 %v4213, %v4207
    %v4556 = vpack.c.b16 %v4214, %v4208
    %v4557 = vpack.c.b16 %v4215, %v4209
    %v4558 = vpack.c.b16 %v4222, %v4216
    %v4559 = vpack.c.b16 %v4223, %v4217
    %v4560 = vpack.c.b16 %v4224, %v4218
    %v4561 = vpack.c.b16 %v4225, %v4219
    %v4562 = vpack.c.b16 %v4226, %v4220
    %v4563 = vpack.c.b16 %v4227, %v4221
    %v4564 = vpack.c.b16 %v4234, %v4228
    %v4565 = vpack.c.b16 %v4235, %v4229
    %v4566 = vpack.c.b16 %v4236, %v4230
    %v4567 = vpack.c.b16 %v4237, %v4231
    %v4568 = vpack.c.b16 %v4238, %v4232
    %v4569 = vpack.c.b16 %v4239, %v4233
    %v4570 = vpack.c.b16 %v4246, %v4240
    %v4571 = vpack.c.b16 %v4247, %v4241
    %v4572 = vpack.c.b16 %v4248, %v4242
    %v4573 = vpack.c.b16 %v4249, %v4243
    %v4574 = vpack.c.b16 %v4250, %v4244
    %v4575 = vpack.c.b16 %v4251, %v4245
    %v4576 = vpack.c.b16 %v4258, %v4252
    %v4577 = vpack.c.b16 %v4259, %v4253
    %v4578 = vpack.c.b16 %v4260, %v4254
    %v4579 = vpack.c.b16 %v4261, %v4255
    %v4580 = vpack.c.b16 %v4262, %v4256
    %v4581 = vpack.c.b16 %v4263, %v4257
    %v4582 = vpack.c.b16 %v4270, %v4264
    %v4583 = vpack.c.b16 %v4271, %v4265
    %v4584 = vpack.c.b16 %v4272, %v4266
    %v4585 = vpack.c.b16 %v4273, %v4267
    %v4586 = vpack.c.b16 %v4274, %v4268
    %v4587 = vpack.c.b16 %v4275, %v4269
    %v4588 = vpack.c.b16 %v4282, %v4276
    %v4589 = vpack.c.b16 %v4283, %v4277
    %v4590 = vpack.c.b16 %v4284, %v4278
    %v4591 = vpack.c.b16 %v4285, %v4279
    %v4592 = vpack.c.b16 %v4286, %v4280
    %v4593 = vpack.c.b16 %v4287, %v4281
    %v4594 = vpack.c.b16 %v4294, %v4288
    %v4595 = vpack.c.b16 %v4295, %v4289
    %v4596 = vpack.c.b16 %v4296, %v4290
    %v4597 = vpack.c.b16 %v4297, %v4291
    %v4598 = vpack.c.b16 %v4298, %v4292
    %v4599 = vpack.c.b16 %v4299, %v4293
    %v4600 = vpack.c.b16 %v4306, %v4300
    %v4601 = vpack.c.b16 %v4307, %v4301
    %v4602 = vpack.c.b16 %v4308, %v4302
    %v4603 = vpack.c.b16 %v4309, %v4303
    %v4604 = vpack.c.b16 %v4310, %v4304
    %v4605 = vpack.c.b16 %v4311, %v4305
    %v4606 = vpack.c.b16 %v4318, %v4312
    %v4607 = vpack.c.b16 %v4319, %v4313
    %v4608 = vpack.c.b16 %v4320, %v4314
    %v4609 = vpack.c.b16 %v4321, %v4315
    %v4610 = vpack.c.b16 %v4322, %v4316
    %v4611 = vpack.c.b16 %v4323, %v4317
    %4900 = vmatpush.bf16.msra.mxu0 %v4366
    %4901 = vmatpush.bf16.msra.mxu0 %v4360
    %4902 = vmatpush.bf16.msra.mxu0 %v4354
    %4903 = vmatpush.bf16.msra.mxu0 %v4348
    %4904 = vmatpush.bf16.msra.mxu0 %v4342
    %4905 = vmatpush.bf16.msra.mxu0 %v4336
    %4906 = vmatpush.bf16.msra.mxu0 %v4330
    %4907 = vmatpush.bf16.msra.mxu0 %v4324
    %4908 = vmatmul.bf16.gmra.mxu0 %v3152
    %v4909 = vpop.f32.mrf.mxu0
    %v4910 = vadd.f32 %v3448, %v4909
    %v4911 = vpop.f32.mrf.mxu0
    %4912 = vdwg.mxu0
    %4913 = vmatpush.bf16.msra.mxu0 %v4414
    %4914 = vmatpush.bf16.msra.mxu0 %v4408
    %4915 = vmatpush.bf16.msra.mxu0 %v4402
    %4916 = vmatpush.bf16.msra.mxu0 %v4396
    %4917 = vmatpush.bf16.msra.mxu0 %v4390
    %4918 = vmatpush.bf16.msra.mxu0 %v4384
    %4919 = vmatpush.bf16.msra.mxu0 %v4378
    %4920 = vmatpush.bf16.msra.mxu0 %v4372
    %4921 = vmatmul.bf16.gmra.mxu0 %v3153
    %v4922 = vpop.f32.mrf.mxu0
    %v4923 = vadd.f32 %v4910, %v4922
    %v4924 = vpop.f32.mrf.mxu0
    %4925 = vdwg.mxu0
    %4926 = vmatpush.bf16.msra.mxu0 %v4462
    %4927 = vmatpush.bf16.msra.mxu0 %v4456
    %4928 = vmatpush.bf16.msra.mxu0 %v4450
    %4929 = vmatpush.bf16.msra.mxu0 %v4444
    %4930 = vmatpush.bf16.msra.mxu0 %v4438
    %4931 = vmatpush.bf16.msra.mxu0 %v4432
    %4932 = vmatpush.bf16.msra.mxu0 %v4426
    %4933 = vmatpush.bf16.msra.mxu0 %v4420
    %4934 = vmatmul.bf16.gmra.mxu0 %v3154
    %v4935 = vpop.f32.mrf.mxu0
    %v4936 = vadd.f32 %v4923, %v4935
    %v4937 = vpop.f32.mrf.mxu0
    %4938 = vdwg.mxu0
    %4939 = vmatpush.bf16.msra.mxu0 %v4510
    %4940 = vmatpush.bf16.msra.mxu0 %v4504
    %4941 = vmatpush.bf16.msra.mxu0 %v4498
    %4942 = vmatpush.bf16.msra.mxu0 %v4492
    %4943 = vmatpush.bf16.msra.mxu0 %v4486
    %4944 = vmatpush.bf16.msra.mxu0 %v4480
    %4945 = vmatpush.bf16.msra.mxu0 %v4474
    %4946 = vmatpush.bf16.msra.mxu0 %v4468
    %4947 = vmatmul.bf16.gmra.mxu0 %v3155
    %v4948 = vpop.f32.mrf.mxu0
    %v4949 = vadd.f32 %v4936, %v4948
    %v4950 = vpop.f32.mrf.mxu0
    %4951 = vdwg.mxu0
    %4952 = vmatpush.bf16.msra.mxu0 %v4558
    %4953 = vmatpush.bf16.msra.mxu0 %v4552
    %4954 = vmatpush.bf16.msra.mxu0 %v4546
    %4955 = vmatpush.bf16.msra.mxu0 %v4540
    %4956 = vmatpush.bf16.msra.mxu0 %v4534
    %4957 = vmatpush.bf16.msra.mxu0 %v4528
    %4958 = vmatpush.bf16.msra.mxu0 %v4522
    %4959 = vmatpush.bf16.msra.mxu0 %v4516
    %4960 = vmatmul.bf16.gmra.mxu0 %v3156
    %v4961 = vpop.f32.mrf.mxu0
    %v4962 = vadd.f32 %v4949, %v4961
    %v4963 = vpop.f32.mrf.mxu0
    %4964 = vdwg.mxu0
    %4965 = vmatpush.bf16.msra.mxu0 %v4606
    %4966 = vmatpush.bf16.msra.mxu0 %v4600
    %4967 = vmatpush.bf16.msra.mxu0 %v4594
    %4968 = vmatpush.bf16.msra.mxu0 %v4588
    %4969 = vmatpush.bf16.msra.mxu0 %v4582
    %4970 = vmatpush.bf16.msra.mxu0 %v4576
    %4971 = vmatpush.bf16.msra.mxu0 %v4570
    %4972 = vmatpush.bf16.msra.mxu0 %v4564
    %4973 = vmatmul.bf16.gmra.mxu0 %v3157
    %v4974 = vpop.f32.mrf.mxu0
    %v4975 = vadd.f32 %v4962, %v4974
    %v4976 = vpop.f32.mrf.mxu0
    %4977 = vdwg.mxu0
    %4978 = vmatpush.bf16.msra.mxu0 %v4367
    %4979 = vmatpush.bf16.msra.mxu0 %v4361
    %4980 = vmatpush.bf16.msra.mxu0 %v4355
    %4981 = vmatpush.bf16.msra.mxu0 %v4349
    %4982 = vmatpush.bf16.msra.mxu0 %v4343
    %4983 = vmatpush.bf16.msra.mxu0 %v4337
    %4984 = vmatpush.bf16.msra.mxu0 %v4331
    %4985 = vmatpush.bf16.msra.mxu0 %v4325
    %4986 = vmatmul.bf16.gmra.mxu0 %v3152
    %v4987 = vpop.f32.mrf.mxu0
    %v4988 = vadd.f32 %v3449, %v4987
    %v4989 = vpop.f32.mrf.mxu0
    %4990 = vdwg.mxu0
    %4991 = vmatpush.bf16.msra.mxu0 %v4415
    %4992 = vmatpush.bf16.msra.mxu0 %v4409
    %4993 = vmatpush.bf16.msra.mxu0 %v4403
    %4994 = vmatpush.bf16.msra.mxu0 %v4397
    %4995 = vmatpush.bf16.msra.mxu0 %v4391
    %4996 = vmatpush.bf16.msra.mxu0 %v4385
    %4997 = vmatpush.bf16.msra.mxu0 %v4379
    %4998 = vmatpush.bf16.msra.mxu0 %v4373
    %4999 = vmatmul.bf16.gmra.mxu0 %v3153
    %v5000 = vpop.f32.mrf.mxu0
    %v5001 = vadd.f32 %v4988, %v5000
    %v5002 = vpop.f32.mrf.mxu0
    %5003 = vdwg.mxu0
    %5004 = vmatpush.bf16.msra.mxu0 %v4463
    %5005 = vmatpush.bf16.msra.mxu0 %v4457
    %5006 = vmatpush.bf16.msra.mxu0 %v4451
    %5007 = vmatpush.bf16.msra.mxu0 %v4445
    %5008 = vmatpush.bf16.msra.mxu0 %v4439
    %5009 = vmatpush.bf16.msra.mxu0 %v4433
    %5010 = vmatpush.bf16.msra.mxu0 %v4427
    %5011 = vmatpush.bf16.msra.mxu0 %v4421
    %5012 = vmatmul.bf16.gmra.mxu0 %v3154
    %v5013 = vpop.f32.mrf.mxu0
    %v5014 = vadd.f32 %v5001, %v5013
    %v5015 = vpop.f32.mrf.mxu0
    %5016 = vdwg.mxu0
    %5017 = vmatpush.bf16.msra.mxu0 %v4511
    %5018 = vmatpush.bf16.msra.mxu0 %v4505
    %5019 = vmatpush.bf16.msra.mxu0 %v4499
    %5020 = vmatpush.bf16.msra.mxu0 %v4493
    %5021 = vmatpush.bf16.msra.mxu0 %v4487
    %5022 = vmatpush.bf16.msra.mxu0 %v4481
    %5023 = vmatpush.bf16.msra.mxu0 %v4475
    %5024 = vmatpush.bf16.msra.mxu0 %v4469
    %5025 = vmatmul.bf16.gmra.mxu0 %v3155
    %v5026 = vpop.f32.mrf.mxu0
    %v5027 = vadd.f32 %v5014, %v5026
    %v5028 = vpop.f32.mrf.mxu0
    %5029 = vdwg.mxu0
    %5030 = vmatpush.bf16.msra.mxu0 %v4559
    %5031 = vmatpush.bf16.msra.mxu0 %v4553
    %5032 = vmatpush.bf16.msra.mxu0 %v4547
    %5033 = vmatpush.bf16.msra.mxu0 %v4541
    %5034 = vmatpush.bf16.msra.mxu0 %v4535
    %5035 = vmatpush.bf16.msra.mxu0 %v4529
    %5036 = vmatpush.bf16.msra.mxu0 %v4523
    %5037 = vmatpush.bf16.msra.mxu0 %v4517
    %5038 = vmatmul.bf16.gmra.mxu0 %v3156
    %v5039 = vpop.f32.mrf.mxu0
    %v5040 = vadd.f32 %v5027, %v5039
    %v5041 = vpop.f32.mrf.mxu0
    %5042 = vdwg.mxu0
    %5043 = vmatpush.bf16.msra.mxu0 %v4607
    %5044 = vmatpush.bf16.msra.mxu0 %v4601
    %5045 = vmatpush.bf16.msra.mxu0 %v4595
    %5046 = vmatpush.bf16.msra.mxu0 %v4589
    %5047 = vmatpush.bf16.msra.mxu0 %v4583
    %5048 = vmatpush.bf16.msra.mxu0 %v4577
    %5049 = vmatpush.bf16.msra.mxu0 %v4571
    %5050 = vmatpush.bf16.msra.mxu0 %v4565
    %5051 = vmatmul.bf16.gmra.mxu0 %v3157
    %v5052 = vpop.f32.mrf.mxu0
    %v5053 = vadd.f32 %v5040, %v5052
    %v5054 = vpop.f32.mrf.mxu0
    %5055 = vdwg.mxu0
    %5056 = vmatpush.bf16.msra.mxu0 %v4368
    %5057 = vmatpush.bf16.msra.mxu0 %v4362
    %5058 = vmatpush.bf16.msra.mxu0 %v4356
    %5059 = vmatpush.bf16.msra.mxu0 %v4350
    %5060 = vmatpush.bf16.msra.mxu0 %v4344
    %5061 = vmatpush.bf16.msra.mxu0 %v4338
    %5062 = vmatpush.bf16.msra.mxu0 %v4332
    %5063 = vmatpush.bf16.msra.mxu0 %v4326
    %5064 = vmatmul.bf16.gmra.mxu0 %v3152
    %v5065 = vpop.f32.mrf.mxu0
    %v5066 = vadd.f32 %v3450, %v5065
    %v5067 = vpop.f32.mrf.mxu0
    %5068 = vdwg.mxu0
    %5069 = vmatpush.bf16.msra.mxu0 %v4416
    %5070 = vmatpush.bf16.msra.mxu0 %v4410
    %5071 = vmatpush.bf16.msra.mxu0 %v4404
    %5072 = vmatpush.bf16.msra.mxu0 %v4398
    %5073 = vmatpush.bf16.msra.mxu0 %v4392
    %5074 = vmatpush.bf16.msra.mxu0 %v4386
    %5075 = vmatpush.bf16.msra.mxu0 %v4380
    %5076 = vmatpush.bf16.msra.mxu0 %v4374
    %5077 = vmatmul.bf16.gmra.mxu0 %v3153
    %v5078 = vpop.f32.mrf.mxu0
    %v5079 = vadd.f32 %v5066, %v5078
    %v5080 = vpop.f32.mrf.mxu0
    %5081 = vdwg.mxu0
    %5082 = vmatpush.bf16.msra.mxu0 %v4464
    %5083 = vmatpush.bf16.msra.mxu0 %v4458
    %5084 = vmatpush.bf16.msra.mxu0 %v4452
    %5085 = vmatpush.bf16.msra.mxu0 %v4446
    %5086 = vmatpush.bf16.msra.mxu0 %v4440
    %5087 = vmatpush.bf16.msra.mxu0 %v4434
    %5088 = vmatpush.bf16.msra.mxu0 %v4428
    %5089 = vmatpush.bf16.msra.mxu0 %v4422
    %5090 = vmatmul.bf16.gmra.mxu0 %v3154
    %v5091 = vpop.f32.mrf.mxu0
    %v5092 = vadd.f32 %v5079, %v5091
    %v5093 = vpop.f32.mrf.mxu0
    %5094 = vdwg.mxu0
    %5095 = vmatpush.bf16.msra.mxu0 %v4512
    %5096 = vmatpush.bf16.msra.mxu0 %v4506
    %5097 = vmatpush.bf16.msra.mxu0 %v4500
    %5098 = vmatpush.bf16.msra.mxu0 %v4494
    %5099 = vmatpush.bf16.msra.mxu0 %v4488
    %5100 = vmatpush.bf16.msra.mxu0 %v4482
    %5101 = vmatpush.bf16.msra.mxu0 %v4476
    %5102 = vmatpush.bf16.msra.mxu0 %v4470
    %5103 = vmatmul.bf16.gmra.mxu0 %v3155
    %v5104 = vpop.f32.mrf.mxu0
    %v5105 = vadd.f32 %v5092, %v5104
    %v5106 = vpop.f32.mrf.mxu0
    %5107 = vdwg.mxu0
    %5108 = vmatpush.bf16.msra.mxu0 %v4560
    %5109 = vmatpush.bf16.msra.mxu0 %v4554
    %5110 = vmatpush.bf16.msra.mxu0 %v4548
    %5111 = vmatpush.bf16.msra.mxu0 %v4542
    %5112 = vmatpush.bf16.msra.mxu0 %v4536
    %5113 = vmatpush.bf16.msra.mxu0 %v4530
    %5114 = vmatpush.bf16.msra.mxu0 %v4524
    %5115 = vmatpush.bf16.msra.mxu0 %v4518
    %5116 = vmatmul.bf16.gmra.mxu0 %v3156
    %v5117 = vpop.f32.mrf.mxu0
    %v5118 = vadd.f32 %v5105, %v5117
    %v5119 = vpop.f32.mrf.mxu0
    %5120 = vdwg.mxu0
    %5121 = vmatpush.bf16.msra.mxu0 %v4608
    %5122 = vmatpush.bf16.msra.mxu0 %v4602
    %5123 = vmatpush.bf16.msra.mxu0 %v4596
    %5124 = vmatpush.bf16.msra.mxu0 %v4590
    %5125 = vmatpush.bf16.msra.mxu0 %v4584
    %5126 = vmatpush.bf16.msra.mxu0 %v4578
    %5127 = vmatpush.bf16.msra.mxu0 %v4572
    %5128 = vmatpush.bf16.msra.mxu0 %v4566
    %5129 = vmatmul.bf16.gmra.mxu0 %v3157
    %v5130 = vpop.f32.mrf.mxu0
    %v5131 = vadd.f32 %v5118, %v5130
    %v5132 = vpop.f32.mrf.mxu0
    %5133 = vdwg.mxu0
    %5134 = vmatpush.bf16.msra.mxu0 %v4369
    %5135 = vmatpush.bf16.msra.mxu0 %v4363
    %5136 = vmatpush.bf16.msra.mxu0 %v4357
    %5137 = vmatpush.bf16.msra.mxu0 %v4351
    %5138 = vmatpush.bf16.msra.mxu0 %v4345
    %5139 = vmatpush.bf16.msra.mxu0 %v4339
    %5140 = vmatpush.bf16.msra.mxu0 %v4333
    %5141 = vmatpush.bf16.msra.mxu0 %v4327
    %5142 = vmatmul.bf16.gmra.mxu0 %v3152
    %v5143 = vpop.f32.mrf.mxu0
    %v5144 = vadd.f32 %v3451, %v5143
    %v5145 = vpop.f32.mrf.mxu0
    %5146 = vdwg.mxu0
    %5147 = vmatpush.bf16.msra.mxu0 %v4417
    %5148 = vmatpush.bf16.msra.mxu0 %v4411
    %5149 = vmatpush.bf16.msra.mxu0 %v4405
    %5150 = vmatpush.bf16.msra.mxu0 %v4399
    %5151 = vmatpush.bf16.msra.mxu0 %v4393
    %5152 = vmatpush.bf16.msra.mxu0 %v4387
    %5153 = vmatpush.bf16.msra.mxu0 %v4381
    %5154 = vmatpush.bf16.msra.mxu0 %v4375
    %5155 = vmatmul.bf16.gmra.mxu0 %v3153
    %v5156 = vpop.f32.mrf.mxu0
    %v5157 = vadd.f32 %v5144, %v5156
    %v5158 = vpop.f32.mrf.mxu0
    %5159 = vdwg.mxu0
    %5160 = vmatpush.bf16.msra.mxu0 %v4465
    %5161 = vmatpush.bf16.msra.mxu0 %v4459
    %5162 = vmatpush.bf16.msra.mxu0 %v4453
    %5163 = vmatpush.bf16.msra.mxu0 %v4447
    %5164 = vmatpush.bf16.msra.mxu0 %v4441
    %5165 = vmatpush.bf16.msra.mxu0 %v4435
    %5166 = vmatpush.bf16.msra.mxu0 %v4429
    %5167 = vmatpush.bf16.msra.mxu0 %v4423
    %5168 = vmatmul.bf16.gmra.mxu0 %v3154
    %v5169 = vpop.f32.mrf.mxu0
    %v5170 = vadd.f32 %v5157, %v5169
    %v5171 = vpop.f32.mrf.mxu0
    %5172 = vdwg.mxu0
    %5173 = vmatpush.bf16.msra.mxu0 %v4513
    %5174 = vmatpush.bf16.msra.mxu0 %v4507
    %5175 = vmatpush.bf16.msra.mxu0 %v4501
    %5176 = vmatpush.bf16.msra.mxu0 %v4495
    %5177 = vmatpush.bf16.msra.mxu0 %v4489
    %5178 = vmatpush.bf16.msra.mxu0 %v4483
    %5179 = vmatpush.bf16.msra.mxu0 %v4477
    %5180 = vmatpush.bf16.msra.mxu0 %v4471
    %5181 = vmatmul.bf16.gmra.mxu0 %v3155
    %v5182 = vpop.f32.mrf.mxu0
    %v5183 = vadd.f32 %v5170, %v5182
    %v5184 = vpop.f32.mrf.mxu0
    %5185 = vdwg.mxu0
    %5186 = vmatpush.bf16.msra.mxu0 %v4561
    %5187 = vmatpush.bf16.msra.mxu0 %v4555
    %5188 = vmatpush.bf16.msra.mxu0 %v4549
    %5189 = vmatpush.bf16.msra.mxu0 %v4543
    %5190 = vmatpush.bf16.msra.mxu0 %v4537
    %5191 = vmatpush.bf16.msra.mxu0 %v4531
    %5192 = vmatpush.bf16.msra.mxu0 %v4525
    %5193 = vmatpush.bf16.msra.mxu0 %v4519
    %5194 = vmatmul.bf16.gmra.mxu0 %v3156
    %v5195 = vpop.f32.mrf.mxu0
    %v5196 = vadd.f32 %v5183, %v5195
    %v5197 = vpop.f32.mrf.mxu0
    %5198 = vdwg.mxu0
    %5199 = vmatpush.bf16.msra.mxu0 %v4609
    %5200 = vmatpush.bf16.msra.mxu0 %v4603
    %5201 = vmatpush.bf16.msra.mxu0 %v4597
    %5202 = vmatpush.bf16.msra.mxu0 %v4591
    %5203 = vmatpush.bf16.msra.mxu0 %v4585
    %5204 = vmatpush.bf16.msra.mxu0 %v4579
    %5205 = vmatpush.bf16.msra.mxu0 %v4573
    %5206 = vmatpush.bf16.msra.mxu0 %v4567
    %5207 = vmatmul.bf16.gmra.mxu0 %v3157
    %v5208 = vpop.f32.mrf.mxu0
    %v5209 = vadd.f32 %v5196, %v5208
    %v5210 = vpop.f32.mrf.mxu0
    %5211 = vdwg.mxu0
    %5212 = vmatpush.bf16.msra.mxu0 %v4370
    %5213 = vmatpush.bf16.msra.mxu0 %v4364
    %5214 = vmatpush.bf16.msra.mxu0 %v4358
    %5215 = vmatpush.bf16.msra.mxu0 %v4352
    %5216 = vmatpush.bf16.msra.mxu0 %v4346
    %5217 = vmatpush.bf16.msra.mxu0 %v4340
    %5218 = vmatpush.bf16.msra.mxu0 %v4334
    %5219 = vmatpush.bf16.msra.mxu0 %v4328
    %5220 = vmatmul.bf16.gmra.mxu0 %v3152
    %v5221 = vpop.f32.mrf.mxu0
    %v5222 = vadd.f32 %v3452, %v5221
    %v5223 = vpop.f32.mrf.mxu0
    %5224 = vdwg.mxu0
    %5225 = vmatpush.bf16.msra.mxu0 %v4418
    %5226 = vmatpush.bf16.msra.mxu0 %v4412
    %5227 = vmatpush.bf16.msra.mxu0 %v4406
    %5228 = vmatpush.bf16.msra.mxu0 %v4400
    %5229 = vmatpush.bf16.msra.mxu0 %v4394
    %5230 = vmatpush.bf16.msra.mxu0 %v4388
    %5231 = vmatpush.bf16.msra.mxu0 %v4382
    %5232 = vmatpush.bf16.msra.mxu0 %v4376
    %5233 = vmatmul.bf16.gmra.mxu0 %v3153
    %v5234 = vpop.f32.mrf.mxu0
    %v5235 = vadd.f32 %v5222, %v5234
    %v5236 = vpop.f32.mrf.mxu0
    %5237 = vdwg.mxu0
    %5238 = vmatpush.bf16.msra.mxu0 %v4466
    %5239 = vmatpush.bf16.msra.mxu0 %v4460
    %5240 = vmatpush.bf16.msra.mxu0 %v4454
    %5241 = vmatpush.bf16.msra.mxu0 %v4448
    %5242 = vmatpush.bf16.msra.mxu0 %v4442
    %5243 = vmatpush.bf16.msra.mxu0 %v4436
    %5244 = vmatpush.bf16.msra.mxu0 %v4430
    %5245 = vmatpush.bf16.msra.mxu0 %v4424
    %5246 = vmatmul.bf16.gmra.mxu0 %v3154
    %v5247 = vpop.f32.mrf.mxu0
    %v5248 = vadd.f32 %v5235, %v5247
    %v5249 = vpop.f32.mrf.mxu0
    %5250 = vdwg.mxu0
    %5251 = vmatpush.bf16.msra.mxu0 %v4514
    %5252 = vmatpush.bf16.msra.mxu0 %v4508
    %5253 = vmatpush.bf16.msra.mxu0 %v4502
    %5254 = vmatpush.bf16.msra.mxu0 %v4496
    %5255 = vmatpush.bf16.msra.mxu0 %v4490
    %5256 = vmatpush.bf16.msra.mxu0 %v4484
    %5257 = vmatpush.bf16.msra.mxu0 %v4478
    %5258 = vmatpush.bf16.msra.mxu0 %v4472
    %5259 = vmatmul.bf16.gmra.mxu0 %v3155
    %v5260 = vpop.f32.mrf.mxu0
    %v5261 = vadd.f32 %v5248, %v5260
    %v5262 = vpop.f32.mrf.mxu0
    %5263 = vdwg.mxu0
    %5264 = vmatpush.bf16.msra.mxu0 %v4562
    %5265 = vmatpush.bf16.msra.mxu0 %v4556
    %5266 = vmatpush.bf16.msra.mxu0 %v4550
    %5267 = vmatpush.bf16.msra.mxu0 %v4544
    %5268 = vmatpush.bf16.msra.mxu0 %v4538
    %5269 = vmatpush.bf16.msra.mxu0 %v4532
    %5270 = vmatpush.bf16.msra.mxu0 %v4526
    %5271 = vmatpush.bf16.msra.mxu0 %v4520
    %5272 = vmatmul.bf16.gmra.mxu0 %v3156
    %v5273 = vpop.f32.mrf.mxu0
    %v5274 = vadd.f32 %v5261, %v5273
    %v5275 = vpop.f32.mrf.mxu0
    %5276 = vdwg.mxu0
    %5277 = vmatpush.bf16.msra.mxu0 %v4610
    %5278 = vmatpush.bf16.msra.mxu0 %v4604
    %5279 = vmatpush.bf16.msra.mxu0 %v4598
    %5280 = vmatpush.bf16.msra.mxu0 %v4592
    %5281 = vmatpush.bf16.msra.mxu0 %v4586
    %5282 = vmatpush.bf16.msra.mxu0 %v4580
    %5283 = vmatpush.bf16.msra.mxu0 %v4574
    %5284 = vmatpush.bf16.msra.mxu0 %v4568
    %5285 = vmatmul.bf16.gmra.mxu0 %v3157
    %v5286 = vpop.f32.mrf.mxu0
    %v5287 = vadd.f32 %v5274, %v5286
    %v5288 = vpop.f32.mrf.mxu0
    %5289 = vdwg.mxu0
    %5290 = vmatpush.bf16.msra.mxu0 %v4371
    %5291 = vmatpush.bf16.msra.mxu0 %v4365
    %5292 = vmatpush.bf16.msra.mxu0 %v4359
    %5293 = vmatpush.bf16.msra.mxu0 %v4353
    %5294 = vmatpush.bf16.msra.mxu0 %v4347
    %5295 = vmatpush.bf16.msra.mxu0 %v4341
    %5296 = vmatpush.bf16.msra.mxu0 %v4335
    %5297 = vmatpush.bf16.msra.mxu0 %v4329
    %5298 = vmatmul.bf16.gmra.mxu0 %v3152
    %v5299 = vpop.f32.mrf.mxu0
    %v5300 = vadd.f32 %v3453, %v5299
    %v5301 = vpop.f32.mrf.mxu0
    %5302 = vdwg.mxu0
    %5303 = vmatpush.bf16.msra.mxu0 %v4419
    %5304 = vmatpush.bf16.msra.mxu0 %v4413
    %5305 = vmatpush.bf16.msra.mxu0 %v4407
    %5306 = vmatpush.bf16.msra.mxu0 %v4401
    %5307 = vmatpush.bf16.msra.mxu0 %v4395
    %5308 = vmatpush.bf16.msra.mxu0 %v4389
    %5309 = vmatpush.bf16.msra.mxu0 %v4383
    %5310 = vmatpush.bf16.msra.mxu0 %v4377
    %5311 = vmatmul.bf16.gmra.mxu0 %v3153
    %v5312 = vpop.f32.mrf.mxu0
    %v5313 = vadd.f32 %v5300, %v5312
    %v5314 = vpop.f32.mrf.mxu0
    %5315 = vdwg.mxu0
    %5316 = vmatpush.bf16.msra.mxu0 %v4467
    %5317 = vmatpush.bf16.msra.mxu0 %v4461
    %5318 = vmatpush.bf16.msra.mxu0 %v4455
    %5319 = vmatpush.bf16.msra.mxu0 %v4449
    %5320 = vmatpush.bf16.msra.mxu0 %v4443
    %5321 = vmatpush.bf16.msra.mxu0 %v4437
    %5322 = vmatpush.bf16.msra.mxu0 %v4431
    %5323 = vmatpush.bf16.msra.mxu0 %v4425
    %5324 = vmatmul.bf16.gmra.mxu0 %v3154
    %v5325 = vpop.f32.mrf.mxu0
    %v5326 = vadd.f32 %v5313, %v5325
    %v5327 = vpop.f32.mrf.mxu0
    %5328 = vdwg.mxu0
    %5329 = vmatpush.bf16.msra.mxu0 %v4515
    %5330 = vmatpush.bf16.msra.mxu0 %v4509
    %5331 = vmatpush.bf16.msra.mxu0 %v4503
    %5332 = vmatpush.bf16.msra.mxu0 %v4497
    %5333 = vmatpush.bf16.msra.mxu0 %v4491
    %5334 = vmatpush.bf16.msra.mxu0 %v4485
    %5335 = vmatpush.bf16.msra.mxu0 %v4479
    %5336 = vmatpush.bf16.msra.mxu0 %v4473
    %5337 = vmatmul.bf16.gmra.mxu0 %v3155
    %v5338 = vpop.f32.mrf.mxu0
    %v5339 = vadd.f32 %v5326, %v5338
    %v5340 = vpop.f32.mrf.mxu0
    %5341 = vdwg.mxu0
    %5342 = vmatpush.bf16.msra.mxu0 %v4563
    %5343 = vmatpush.bf16.msra.mxu0 %v4557
    %5344 = vmatpush.bf16.msra.mxu0 %v4551
    %5345 = vmatpush.bf16.msra.mxu0 %v4545
    %5346 = vmatpush.bf16.msra.mxu0 %v4539
    %5347 = vmatpush.bf16.msra.mxu0 %v4533
    %5348 = vmatpush.bf16.msra.mxu0 %v4527
    %5349 = vmatpush.bf16.msra.mxu0 %v4521
    %5350 = vmatmul.bf16.gmra.mxu0 %v3156
    %v5351 = vpop.f32.mrf.mxu0
    %v5352 = vadd.f32 %v5339, %v5351
    %v5353 = vpop.f32.mrf.mxu0
    %5354 = vdwg.mxu0
    %5355 = vmatpush.bf16.msra.mxu0 %v4611
    %5356 = vmatpush.bf16.msra.mxu0 %v4605
    %5357 = vmatpush.bf16.msra.mxu0 %v4599
    %5358 = vmatpush.bf16.msra.mxu0 %v4593
    %5359 = vmatpush.bf16.msra.mxu0 %v4587
    %5360 = vmatpush.bf16.msra.mxu0 %v4581
    %5361 = vmatpush.bf16.msra.mxu0 %v4575
    %5362 = vmatpush.bf16.msra.mxu0 %v4569
    %5363 = vmatmul.bf16.gmra.mxu0 %v3157
    %v5364 = vpop.f32.mrf.mxu0
    %v5365 = vadd.f32 %v5352, %v5364
    %v5366 = vpop.f32.mrf.mxu0
    %5367 = vdwg.mxu0
    %v5368 = vpack.c.bf16 %v5053, %v4975
    %v5369 = vpack.c.bf16 %v5209, %v5131
    %v5370 = vpack.c.bf16 %v5365, %v5287
    %v5371 = vld [vmem:[#allocation13] sm:$0xf]
    %v5372 = vld [vmem:[#allocation13 + $0x4] sm:$0xf]
    %v5373 = vld [vmem:[#allocation13 + $0x8] sm:$0xf]
    %v5374 = vld [vmem:[#allocation13 + $0xc] sm:$0xf]
    %v5375 = vld [vmem:[#allocation13 + $0x10] sm:$0xf]
    %v5376 = vld [vmem:[#allocation13 + $0x14] sm:$0xf]
    %v5377 = vld [vmem:[#allocation13 + $0x18] sm:$0xf]
    %v5378 = vld [vmem:[#allocation13 + $0x1c] sm:$0xf]
    %v5379 = vld [vmem:[#allocation13 + $0x20] sm:$0xf]
    %v5380 = vld [vmem:[#allocation13 + $0x24] sm:$0xf]
    %v5381 = vld [vmem:[#allocation13 + $0x28] sm:$0xf]
    %v5382 = vld [vmem:[#allocation13 + $0x2c] sm:$0xf]
    %v5383 = vld [vmem:[#allocation13 + $0x30] sm:$0xf]
    %v5384 = vld [vmem:[#allocation13 + $0x34] sm:$0xf]
    %v5385 = vld [vmem:[#allocation13 + $0x38] sm:$0xf]
    %v5386 = vld [vmem:[#allocation13 + $0x3c] sm:$0xf]
    %v5387 = vld [vmem:[#allocation13 + $0x40] sm:$0xf]
    %v5388 = vld [vmem:[#allocation13 + $0x44] sm:$0xf]
    %v5389 = vld [vmem:[#allocation13 + $0x48] sm:$0xf]
    %v5390 = vld [vmem:[#allocation13 + $0x4c] sm:$0xf]
    %v5391 = vld [vmem:[#allocation13 + $0x50] sm:$0xf]
    %v5392 = vld [vmem:[#allocation13 + $0x54] sm:$0xf]
    %v5393 = vld [vmem:[#allocation13 + $0x58] sm:$0xf]
    %v5394 = vld [vmem:[#allocation13 + $0x5c] sm:$0xf]
    %v5395 = vld [vmem:[#allocation13 + $0x60] sm:$0xf]
    %v5396 = vld [vmem:[#allocation13 + $0x64] sm:$0xf]
    %v5397 = vld [vmem:[#allocation13 + $0x68] sm:$0xf]
    %v5398 = vld [vmem:[#allocation13 + $0x6c] sm:$0xf]
    %v5399 = vld [vmem:[#allocation13 + $0x70] sm:$0xf]
    %v5400 = vld [vmem:[#allocation13 + $0x74] sm:$0xf]
    %v5401 = vld [vmem:[#allocation13 + $0x78] sm:$0xf]
    %v5402 = vld [vmem:[#allocation13 + $0x7c] sm:$0xf]
    %v5403 = vld [vmem:[#allocation13 + $0x80] sm:$0xf]
    %v5404 = vld [vmem:[#allocation13 + $0x84] sm:$0xf]
    %v5405 = vld [vmem:[#allocation13 + $0x88] sm:$0xf]
    %v5406 = vld [vmem:[#allocation13 + $0x8c] sm:$0xf]
    %v5407 = vld [vmem:[#allocation13 + $0x90] sm:$0xf]
    %v5408 = vld [vmem:[#allocation13 + $0x94] sm:$0xf]
    %v5409 = vld [vmem:[#allocation13 + $0x98] sm:$0xf]
    %v5410 = vld [vmem:[#allocation13 + $0x9c] sm:$0xf]
    %v5411 = vld [vmem:[#allocation13 + $0xa0] sm:$0xf]
    %v5412 = vld [vmem:[#allocation13 + $0xa4] sm:$0xf]
    %v5413 = vld [vmem:[#allocation13 + $0xa8] sm:$0xf]
    %v5414 = vld [vmem:[#allocation13 + $0xac] sm:$0xf]
    %v5415 = vld [vmem:[#allocation13 + $0xb0] sm:$0xf]
    %v5416 = vld [vmem:[#allocation13 + $0xb4] sm:$0xf]
    %v5417 = vld [vmem:[#allocation13 + $0xb8] sm:$0xf]
    %v5418 = vld [vmem:[#allocation13 + $0xbc] sm:$0xf]
    %v5419 = vld [vmem:[#allocation13 + $0xc0] sm:$0xf]
    %v5420 = vld [vmem:[#allocation13 + $0xc4] sm:$0xf]
    %v5421 = vld [vmem:[#allocation13 + $0xc8] sm:$0xf]
    %v5422 = vld [vmem:[#allocation13 + $0xcc] sm:$0xf]
    %v5423 = vld [vmem:[#allocation13 + $0xd0] sm:$0xf]
    %v5424 = vld [vmem:[#allocation13 + $0xd4] sm:$0xf]
    %v5425 = vld [vmem:[#allocation13 + $0xd8] sm:$0xf]
    %v5426 = vld [vmem:[#allocation13 + $0xdc] sm:$0xf]
    %v5427 = vld [vmem:[#allocation13 + $0xe0] sm:$0xf]
    %v5428 = vld [vmem:[#allocation13 + $0xe4] sm:$0xf]
    %v5429 = vld [vmem:[#allocation13 + $0xe8] sm:$0xf]
    %v5430 = vld [vmem:[#allocation13 + $0xec] sm:$0xf]
    %v5431 = vld [vmem:[#allocation13 + $0xf0] sm:$0xf]
    %v5432 = vld [vmem:[#allocation13 + $0xf4] sm:$0xf]
    %v5433 = vld [vmem:[#allocation13 + $0xf8] sm:$0xf]
    %v5434 = vld [vmem:[#allocation13 + $0xfc] sm:$0xf]
    %v5435 = vld [vmem:[#allocation13 + $0x100] sm:$0xf]
    %v5436 = vld [vmem:[#allocation13 + $0x104] sm:$0xf]
    %v5437 = vld [vmem:[#allocation13 + $0x108] sm:$0xf]
    %v5438 = vld [vmem:[#allocation13 + $0x10c] sm:$0xf]
    %v5439 = vld [vmem:[#allocation13 + $0x110] sm:$0xf]
    %v5440 = vld [vmem:[#allocation13 + $0x114] sm:$0xf]
    %v5441 = vld [vmem:[#allocation13 + $0x118] sm:$0xf]
    %v5442 = vld [vmem:[#allocation13 + $0x11c] sm:$0xf]
    %v5443 = vld [vmem:[#allocation13 + $0x120] sm:$0xf]
    %v5444 = vld [vmem:[#allocation13 + $0x124] sm:$0xf]
    %v5445 = vld [vmem:[#allocation13 + $0x128] sm:$0xf]
    %v5446 = vld [vmem:[#allocation13 + $0x12c] sm:$0xf]
    %v5447 = vld [vmem:[#allocation13 + $0x130] sm:$0xf]
    %v5448 = vld [vmem:[#allocation13 + $0x134] sm:$0xf]
    %v5449 = vld [vmem:[#allocation13 + $0x138] sm:$0xf]
    %v5450 = vld [vmem:[#allocation13 + $0x13c] sm:$0xf]
    %v5451 = vld [vmem:[#allocation13 + $0x140] sm:$0xf]
    %v5452 = vld [vmem:[#allocation13 + $0x144] sm:$0xf]
    %v5453 = vld [vmem:[#allocation13 + $0x148] sm:$0xf]
    %v5454 = vld [vmem:[#allocation13 + $0x14c] sm:$0xf]
    %v5455 = vld [vmem:[#allocation13 + $0x150] sm:$0xf]
    %v5456 = vld [vmem:[#allocation13 + $0x154] sm:$0xf]
    %v5457 = vld [vmem:[#allocation13 + $0x158] sm:$0xf]
    %v5458 = vld [vmem:[#allocation13 + $0x15c] sm:$0xf]
    %v5459 = vld [vmem:[#allocation13 + $0x160] sm:$0xf]
    %v5460 = vld [vmem:[#allocation13 + $0x164] sm:$0xf]
    %v5461 = vld [vmem:[#allocation13 + $0x168] sm:$0xf]
    %v5462 = vld [vmem:[#allocation13 + $0x16c] sm:$0xf]
    %v5463 = vld [vmem:[#allocation13 + $0x170] sm:$0xf]
    %v5464 = vld [vmem:[#allocation13 + $0x174] sm:$0xf]
    %v5465 = vld [vmem:[#allocation13 + $0x178] sm:$0xf]
    %v5466 = vld [vmem:[#allocation13 + $0x17c] sm:$0xf]
    %v5467 = vld [vmem:[#allocation14] sm:$0x1]
    %v5469 = vperm.slane %v5467, 0
    %v5474 = vunpack.c.l.b16 %v5368
    %v5475 = vunpack.c.h.b16 %v5368
    %v5476 = vunpack.c.l.b16 %v5369
    %v5477 = vunpack.c.h.b16 %v5369
    %v5478 = vunpack.c.l.b16 %v5370
    %v5479 = vunpack.c.h.b16 %v5370
    %v5480 = vpack.c.b16 %v5474, %v5474
    %v5481 = vpack.c.b16 %v5475, %v5475
    %v5482 = vpack.c.b16 %v5476, %v5476
    %v5483 = vpack.c.b16 %v5477, %v5477
    %v5484 = vpack.c.b16 %v5478, %v5478
    %v5485 = vpack.c.b16 %v5479, %v5479
    %v5588 = vunpack.c.l.b16 %v5371
    %v5589 = vunpack.c.l.b16 %v5372
    %v5590 = vunpack.c.l.b16 %v5373
    %v5591 = vunpack.c.l.b16 %v5374
    %v5592 = vunpack.c.l.b16 %v5375
    %v5593 = vunpack.c.l.b16 %v5376
    %v5594 = vunpack.c.l.b16 %v5377
    %v5595 = vunpack.c.l.b16 %v5378
    %v5596 = vunpack.c.l.b16 %v5379
    %v5597 = vunpack.c.l.b16 %v5380
    %v5598 = vunpack.c.l.b16 %v5381
    %v5599 = vunpack.c.l.b16 %v5382
    %v5600 = vunpack.c.l.b16 %v5383
    %v5601 = vunpack.c.l.b16 %v5384
    %v5602 = vunpack.c.l.b16 %v5385
    %v5603 = vunpack.c.l.b16 %v5386
    %v5604 = vunpack.c.l.b16 %v5387
    %v5605 = vunpack.c.l.b16 %v5388
    %v5606 = vunpack.c.l.b16 %v5389
    %v5607 = vunpack.c.l.b16 %v5390
    %v5608 = vunpack.c.l.b16 %v5391
    %v5609 = vunpack.c.l.b16 %v5392
    %v5610 = vunpack.c.l.b16 %v5393
    %v5611 = vunpack.c.l.b16 %v5394
    %v5612 = vunpack.c.l.b16 %v5395
    %v5613 = vunpack.c.l.b16 %v5396
    %v5614 = vunpack.c.l.b16 %v5397
    %v5615 = vunpack.c.l.b16 %v5398
    %v5616 = vunpack.c.l.b16 %v5399
    %v5617 = vunpack.c.l.b16 %v5400
    %v5618 = vunpack.c.l.b16 %v5401
    %v5619 = vunpack.c.l.b16 %v5402
    %v5620 = vunpack.c.l.b16 %v5403
    %v5621 = vunpack.c.l.b16 %v5404
    %v5622 = vunpack.c.l.b16 %v5405
    %v5623 = vunpack.c.l.b16 %v5406
    %v5624 = vunpack.c.l.b16 %v5407
    %v5625 = vunpack.c.l.b16 %v5408
    %v5626 = vunpack.c.l.b16 %v5409
    %v5627 = vunpack.c.l.b16 %v5410
    %v5628 = vunpack.c.l.b16 %v5411
    %v5629 = vunpack.c.l.b16 %v5412
    %v5630 = vunpack.c.l.b16 %v5413
    %v5631 = vunpack.c.l.b16 %v5414
    %v5632 = vunpack.c.l.b16 %v5415
    %v5633 = vunpack.c.l.b16 %v5416
    %v5634 = vunpack.c.l.b16 %v5417
    %v5635 = vunpack.c.l.b16 %v5418
    %v5636 = vunpack.c.l.b16 %v5419
    %v5637 = vunpack.c.l.b16 %v5420
    %v5638 = vunpack.c.l.b16 %v5421
    %v5639 = vunpack.c.l.b16 %v5422
    %v5640 = vunpack.c.l.b16 %v5423
    %v5641 = vunpack.c.l.b16 %v5424
    %v5642 = vunpack.c.l.b16 %v5425
    %v5643 = vunpack.c.l.b16 %v5426
    %v5644 = vunpack.c.l.b16 %v5427
    %v5645 = vunpack.c.l.b16 %v5428
    %v5646 = vunpack.c.l.b16 %v5429
    %v5647 = vunpack.c.l.b16 %v5430
    %v5648 = vunpack.c.l.b16 %v5431
    %v5649 = vunpack.c.l.b16 %v5432
    %v5650 = vunpack.c.l.b16 %v5433
    %v5651 = vunpack.c.l.b16 %v5434
    %v5652 = vunpack.c.l.b16 %v5435
    %v5653 = vunpack.c.l.b16 %v5436
    %v5654 = vunpack.c.l.b16 %v5437
    %v5655 = vunpack.c.l.b16 %v5438
    %v5656 = vunpack.c.l.b16 %v5439
    %v5657 = vunpack.c.l.b16 %v5440
    %v5658 = vunpack.c.l.b16 %v5441
    %v5659 = vunpack.c.l.b16 %v5442
    %v5660 = vunpack.c.l.b16 %v5443
    %v5661 = vunpack.c.l.b16 %v5444
    %v5662 = vunpack.c.l.b16 %v5445
    %v5663 = vunpack.c.l.b16 %v5446
    %v5664 = vunpack.c.l.b16 %v5447
    %v5665 = vunpack.c.l.b16 %v5448
    %v5666 = vunpack.c.l.b16 %v5449
    %v5667 = vunpack.c.l.b16 %v5450
    %v5668 = vunpack.c.l.b16 %v5451
    %v5669 = vunpack.c.l.b16 %v5452
    %v5670 = vunpack.c.l.b16 %v5453
    %v5671 = vunpack.c.l.b16 %v5454
    %v5672 = vunpack.c.l.b16 %v5455
    %v5673 = vunpack.c.l.b16 %v5456
    %v5674 = vunpack.c.l.b16 %v5457
    %v5675 = vunpack.c.l.b16 %v5458
    %v5676 = vunpack.c.l.b16 %v5459
    %v5677 = vunpack.c.l.b16 %v5460
    %v5678 = vunpack.c.l.b16 %v5461
    %v5679 = vunpack.c.l.b16 %v5462
    %v5680 = vunpack.c.l.b16 %v5463
    %v5681 = vunpack.c.l.b16 %v5464
    %v5682 = vunpack.c.l.b16 %v5465
    %v5683 = vunpack.c.l.b16 %v5466
    %v5684 = vpack.c.b16 %v5589, %v5588
    %v5685 = vpack.c.b16 %v5591, %v5590
    %v5686 = vpack.c.b16 %v5593, %v5592
    %v5687 = vpack.c.b16 %v5595, %v5594
    %v5688 = vpack.c.b16 %v5597, %v5596
    %v5689 = vpack.c.b16 %v5599, %v5598
    %v5690 = vpack.c.b16 %v5601, %v5600
    %v5691 = vpack.c.b16 %v5603, %v5602
    %v5692 = vpack.c.b16 %v5605, %v5604
    %v5693 = vpack.c.b16 %v5607, %v5606
    %v5694 = vpack.c.b16 %v5609, %v5608
    %v5695 = vpack.c.b16 %v5611, %v5610
    %v5696 = vpack.c.b16 %v5613, %v5612
    %v5697 = vpack.c.b16 %v5615, %v5614
    %v5698 = vpack.c.b16 %v5617, %v5616
    %v5699 = vpack.c.b16 %v5619, %v5618
    %v5700 = vpack.c.b16 %v5621, %v5620
    %v5701 = vpack.c.b16 %v5623, %v5622
    %v5702 = vpack.c.b16 %v5625, %v5624
    %v5703 = vpack.c.b16 %v5627, %v5626
    %v5704 = vpack.c.b16 %v5629, %v5628
    %v5705 = vpack.c.b16 %v5631, %v5630
    %v5706 = vpack.c.b16 %v5633, %v5632
    %v5707 = vpack.c.b16 %v5635, %v5634
    %v5708 = vpack.c.b16 %v5637, %v5636
    %v5709 = vpack.c.b16 %v5639, %v5638
    %v5710 = vpack.c.b16 %v5641, %v5640
    %v5711 = vpack.c.b16 %v5643, %v5642
    %v5712 = vpack.c.b16 %v5645, %v5644
    %v5713 = vpack.c.b16 %v5647, %v5646
    %v5714 = vpack.c.b16 %v5649, %v5648
    %v5715 = vpack.c.b16 %v5651, %v5650
    %v5716 = vpack.c.b16 %v5653, %v5652
    %v5717 = vpack.c.b16 %v5655, %v5654
    %v5718 = vpack.c.b16 %v5657, %v5656
    %v5719 = vpack.c.b16 %v5659, %v5658
    %v5720 = vpack.c.b16 %v5661, %v5660
    %v5721 = vpack.c.b16 %v5663, %v5662
    %v5722 = vpack.c.b16 %v5665, %v5664
    %v5723 = vpack.c.b16 %v5667, %v5666
    %v5724 = vpack.c.b16 %v5669, %v5668
    %v5725 = vpack.c.b16 %v5671, %v5670
    %v5726 = vpack.c.b16 %v5673, %v5672
    %v5727 = vpack.c.b16 %v5675, %v5674
    %v5728 = vpack.c.b16 %v5677, %v5676
    %v5729 = vpack.c.b16 %v5679, %v5678
    %v5730 = vpack.c.b16 %v5681, %v5680
    %v5731 = vpack.c.b16 %v5683, %v5682
    %5780 = vmatpush.bf16.msra.mxu0 %v5691
    %5781 = vmatpush.bf16.msra.mxu0 %v5690
    %5782 = vmatpush.bf16.msra.mxu0 %v5689
    %5783 = vmatpush.bf16.msra.mxu0 %v5688
    %5784 = vmatpush.bf16.msra.mxu0 %v5687
    %5785 = vmatpush.bf16.msra.mxu0 %v5686
    %5786 = vmatpush.bf16.msra.mxu0 %v5685
    %5787 = vmatpush.bf16.msra.mxu0 %v5684
    %5788 = vmatmul.bf16.gmra.mxu0 %v5480
    %v5789 = vpop.f32.mrf.mxu0
    %v5790 = vadd.f32 %v5469, %v5789
    %v5791 = vpop.f32.mrf.mxu0
    %5792 = vdwg.mxu0
    %5793 = vmatpush.bf16.msra.mxu0 %v5699
    %5794 = vmatpush.bf16.msra.mxu0 %v5698
    %5795 = vmatpush.bf16.msra.mxu0 %v5697
    %5796 = vmatpush.bf16.msra.mxu0 %v5696
    %5797 = vmatpush.bf16.msra.mxu0 %v5695
    %5798 = vmatpush.bf16.msra.mxu0 %v5694
    %5799 = vmatpush.bf16.msra.mxu0 %v5693
    %5800 = vmatpush.bf16.msra.mxu0 %v5692
    %5801 = vmatmul.bf16.gmra.mxu0 %v5481
    %v5802 = vpop.f32.mrf.mxu0
    %v5803 = vadd.f32 %v5790, %v5802
    %v5804 = vpop.f32.mrf.mxu0
    %5805 = vdwg.mxu0
    %5806 = vmatpush.bf16.msra.mxu0 %v5707
    %5807 = vmatpush.bf16.msra.mxu0 %v5706
    %5808 = vmatpush.bf16.msra.mxu0 %v5705
    %5809 = vmatpush.bf16.msra.mxu0 %v5704
    %5810 = vmatpush.bf16.msra.mxu0 %v5703
    %5811 = vmatpush.bf16.msra.mxu0 %v5702
    %5812 = vmatpush.bf16.msra.mxu0 %v5701
    %5813 = vmatpush.bf16.msra.mxu0 %v5700
    %5814 = vmatmul.bf16.gmra.mxu0 %v5482
    %v5815 = vpop.f32.mrf.mxu0
    %v5816 = vadd.f32 %v5803, %v5815
    %v5817 = vpop.f32.mrf.mxu0
    %5818 = vdwg.mxu0
    %5819 = vmatpush.bf16.msra.mxu0 %v5715
    %5820 = vmatpush.bf16.msra.mxu0 %v5714
    %5821 = vmatpush.bf16.msra.mxu0 %v5713
    %5822 = vmatpush.bf16.msra.mxu0 %v5712
    %5823 = vmatpush.bf16.msra.mxu0 %v5711
    %5824 = vmatpush.bf16.msra.mxu0 %v5710
    %5825 = vmatpush.bf16.msra.mxu0 %v5709
    %5826 = vmatpush.bf16.msra.mxu0 %v5708
    %5827 = vmatmul.bf16.gmra.mxu0 %v5483
    %v5828 = vpop.f32.mrf.mxu0
    %v5829 = vadd.f32 %v5816, %v5828
    %v5830 = vpop.f32.mrf.mxu0
    %5831 = vdwg.mxu0
    %5832 = vmatpush.bf16.msra.mxu0 %v5723
    %5833 = vmatpush.bf16.msra.mxu0 %v5722
    %5834 = vmatpush.bf16.msra.mxu0 %v5721
    %5835 = vmatpush.bf16.msra.mxu0 %v5720
    %5836 = vmatpush.bf16.msra.mxu0 %v5719
    %5837 = vmatpush.bf16.msra.mxu0 %v5718
    %5838 = vmatpush.bf16.msra.mxu0 %v5717
    %5839 = vmatpush.bf16.msra.mxu0 %v5716
    %5840 = vmatmul.bf16.gmra.mxu0 %v5484
    %v5841 = vpop.f32.mrf.mxu0
    %v5842 = vadd.f32 %v5829, %v5841
    %v5843 = vpop.f32.mrf.mxu0
    %5844 = vdwg.mxu0
    %5845 = vmatpush.bf16.msra.mxu0 %v5731
    %5846 = vmatpush.bf16.msra.mxu0 %v5730
    %5847 = vmatpush.bf16.msra.mxu0 %v5729
    %5848 = vmatpush.bf16.msra.mxu0 %v5728
    %5849 = vmatpush.bf16.msra.mxu0 %v5727
    %5850 = vmatpush.bf16.msra.mxu0 %v5726
    %5851 = vmatpush.bf16.msra.mxu0 %v5725
    %5852 = vmatpush.bf16.msra.mxu0 %v5724
    %5853 = vmatmul.bf16.gmra.mxu0 %v5485
    %v5854 = vpop.f32.mrf.mxu0
    %v5855 = vadd.f32 %v5842, %v5854
    %v5856 = vpop.f32.mrf.mxu0
    %5857 = vdwg.mxu0
    %5858 = vst [vmem:[#allocation16] sm:$0xff] %v5368
    %5859 = vst [vmem:[#allocation16 + $0x8] sm:$0xff] %v5369
    %5860 = vst [vmem:[#allocation16 + $0x10] sm:$0xff] %v5370
    %5861 = vst [vmem:[#allocation17] sm:$0xff] %v5855
    %v5862 = vld [vmem:[%s2] sm:$0xff]
    %v5863 = vlaneseq
    %v5864 = vand.u32 %v5863, 127
    %vm5865 = vcmp.lt.s32.totalorder %v5864, 2
    %v5866 = vsel %vm5865, %v5855, -1e+30
    %5867 = vmax.xlane.f32.xlu0 %v5866
    %v5868 = vpop.xlane.xlu0 %5867
    %v5869 = vsub.f32 %v5866, %v5868
    %v5870 = vmul.f32 %v5869, 1.442695
    %v5871 = vpow.pop %v5870
    %5872 = vadd.xlane.f32.xlu0 %v5871
    %v5873 = vpop.xlane.xlu0 %5872
    %v5874 = vlog2.pop %v5873
    %v5875 = vmul.f32 %v5874, 0.6931472
    %v5876 = vadd.f32 %v5868, %v5875
    %5877 = vset.pattern.permute.xlu0 0
    %5878 = vperm.xlu0 %5877, %v5862
    %v5879 = vpop.permute.xlu0 %5878
    %vm5880 = vcmp.eq.s32.totalorder %v5864, %v5879
    %v5881 = vsel %vm5880, %v5855, 0.0
    %5882 = vadd.xlane.f32.xlu0 %v5881
    %v5883 = vpop.xlane.xlu0 %5882
    %v5884 = vsub.f32 %v5876, %v5883
    %vm5885 = vcmask 7168
    %5886 = vst.msk [vmem:[%s11] sm:$0xff] %vm5885, %v5884
    // Predicated region
    $region70: #{tpu_custom_call.1} parent=1 // pred_check
      _
    $region71: #{tpu_custom_call.1} parent=1 // pred_check_branch
      %5888 = sbr.rel (0) target = $region73
    $region72: #{tpu_custom_call.1} parent=1 // pred_region
      %5890 = vsyncadd [#allocation4], 0
      %s5892 = sshll.u32 [#allocation16], 4
      %s5893 = int_to_ptr.vmem [resolvable:$true] %s5892
      %s5894 = sshll.u32 %s9, 4
      %s5895 = int_to_ptr.hbm [resolvable:$true] %s5894
      %5897 = dma.vmem_to_hbm [thread:$0]  %s5893, 384, %s5895, [#allocation4]
    $region73: #{tpu_custom_call.1} parent=1 // pred_fallthru
      _
    // Predicated region
    $region74: #{tpu_custom_call.1} parent=1 // pred_check
      _
    $region75: #{tpu_custom_call.1} parent=1 // pred_check_branch
      %5899 = sbr.rel (0) target = $region77
    $region76: #{tpu_custom_call.1} parent=1 // pred_region
      %5901 = vsyncadd [#allocation18], 0
      %s5903 = sshll.u32 [#allocation17], 4
      %s5904 = int_to_ptr.vmem [resolvable:$true] %s5903
      %s5905 = sshll.u32 %s10, 4
      %s5906 = int_to_ptr.hbm [resolvable:$true] %s5905
      %5908 = dma.vmem_to_hbm [thread:$0]  %s5904, 128, %s5906, [#allocation18]
    $region77: #{tpu_custom_call.1} parent=1 // pred_fallthru
      _
    // Predicated region
    $region78: #{tpu_custom_call.1} parent=1 // pred_check
      _
    $region79: #{tpu_custom_call.1} parent=1 // pred_check_branch
      %5910 = sbr.rel (0) target = $region81
    $region80: #{tpu_custom_call.1} parent=1 // pred_region
      _
    $region81: #{tpu_custom_call.1} parent=1 // pred_fallthru
      _
    // Predicated region
    $region82: #{tpu_custom_call.1} parent=1 // pred_check
      _
    $region83: #{tpu_custom_call.1} parent=1 // pred_check_branch
      %5912 = sbr.rel (0) target = $region85
    $region84: #{tpu_custom_call.1} parent=1 // pred_region
      %5914 = dma.done [#allocation4], 384
    $region85: #{tpu_custom_call.1} parent=1 // pred_fallthru
      _
    // Predicated region
    $region86: #{tpu_custom_call.1} parent=1 // pred_check
      _
    $region87: #{tpu_custom_call.1} parent=1 // pred_check_branch
      %5916 = sbr.rel (0) target = $region89
    $region88: #{tpu_custom_call.1} parent=1 // pred_region
      %5918 = dma.done [#allocation18], 128
    $region89: #{tpu_custom_call.1} parent=1 // pred_fallthru
      _
    // Predicated region
    $region90: #{tpu_custom_call.1} parent=1 // pred_check
      _
    $region91: #{tpu_custom_call.1} parent=1 // pred_check_branch
      %5920 = sbr.rel (0) target = $region93
    $region92: #{tpu_custom_call.1} parent=1 // pred_region
      _
    $region93: #{tpu_custom_call.1} parent=1 // pred_fallthru
      _
    %5921 = vsyncpa [#allocation3], 1
    %5922 = vsyncpa [#allocation6], 1
    %5923 = vsyncpa [#allocation9], 1
    %5924 = vsyncpa [#allocation12], 1
    %5925 = vsyncpa [#allocation15], 1
    %5926 = vsyncpa [#allocation4], 1
    %5927 = vsyncpa [#allocation18], 1

</llo_original>
